<compile_context>
chip_gen: v6e
topology: v6e:2x2x1
jax: 0.10.0
libtpu: 0.0.40
codegen_flags: <defaults>
</compile_context>

<pallas_src>
import jax
import jax.numpy as jnp
from jax.experimental import pallas as pl
from jax.experimental.pallas import tpu as pltpu

N_OBS = 8                           # n_observations
N_ACT = 4                           # n_actions
HIDDEN = (256, 512, 1024, 512, 256)
OUT_PAD = 128                       # lane-dense padded width of the final layer
WIDTHS = HIDDEN + (OUT_PAD,)        # per-layer output widths inside the kernel
MAX_W = max(WIDTHS)                 # packed-bias buffer width (1024)
MIN_TB = 128                        # minimum batch tile (sublane-friendly)
TB_MAX = 512                        # max batch tile; sweep parameter (512/1024 fit VMEM)


def _dqn_kernel(x_ref, w1, w2, w3, w4, w5, w6, b_ref, o_ref):
    """Fused 6-layer MLP for one batch tile: relu(h @ W + b) x5, final linear.

    Activations carried in bf16 between layers; bf16 x bf16 MXU matmuls with
    f32 accumulation; bias add / ReLU in f32; lane-dense f32 output store.
    """
    h = x_ref[...].astype(jnp.bfloat16)                      # (tb, N_OBS)
    ws = (w1, w2, w3, w4, w5, w6)
    for i in range(5):
        b = b_ref[i:i + 1, 0:WIDTHS[i]]                      # (1, width) f32, static slice
        z = jnp.dot(h, ws[i][...], preferred_element_type=jnp.float32) + b
        h = jnp.maximum(z, 0.0).astype(jnp.bfloat16)         # bf16 intermediates
    b = b_ref[5:6, 0:OUT_PAD]
    # (tb, OUT_PAD) f32, unmasked full-lane store; wrapper slices [:, :N_ACT].
    o_ref[...] = jnp.dot(h, ws[5][...], preferred_element_type=jnp.float32) + b


def prepare_params(params):
    """Cast weights to bf16, pad the final layer to OUT_PAD lanes, and pack all
    6 biases into a single (6, MAX_W) f32 buffer (one DMA instead of six)."""
    n = len(params)
    ws = []
    b_all = jnp.zeros((n, MAX_W), jnp.float32)
    for i, (w, b) in enumerate(params):
        w = w.astype(jnp.bfloat16)
        if i == n - 1:
            w = jnp.zeros((w.shape[0], OUT_PAD), jnp.bfloat16).at[:, :N_ACT].set(w)
        ws.append(w)
        b_all = b_all.at[i, : b.shape[-1]].set(b.reshape(-1).astype(jnp.float32))
    return ws + [b_all]


def _choose_tiling(B, tb_max=TB_MAX):
    """Pick (padded_batch, batch_tile).

    Single MIN_TB tile for tiny batches; otherwise >= 2 grid steps (so the
    'parallel' batch axis shards across both v7x TensorCores) with tiles of up
    to tb_max rows.
    """
    tiles = max(1, -(-B // MIN_TB))                  # MIN_TB-row tiles needed
    if tiles == 1:
        return MIN_TB, MIN_TB                        # one grid step
    tiles_per_step = min(tb_max // MIN_TB, -(-tiles // 2))
    n_steps = -(-tiles // tiles_per_step)            # >= 2 by construction
    tb = tiles_per_step * MIN_TB
    return n_steps * tb, tb


def dqn_forward(x, flat_params, *, tb_max=TB_MAX):
    """x: [B, N_OBS] f32; flat_params from prepare_params. Returns [B, N_ACT] f32."""
    B = x.shape[0]
    b_pad, tb = _choose_tiling(B, tb_max)
    if b_pad != B:
        x = jnp.pad(x, ((0, b_pad - B), (0, 0)))
    grid = (b_pad // tb,)

    # Activation tiles march down the batch axis; params use a constant block
    # index so they are DMA'd once and stay VMEM-resident across grid steps.
    x_spec = pl.BlockSpec((tb, N_OBS), lambda i: (i, 0))
    param_specs = [pl.BlockSpec(p.shape, lambda i: (0, 0)) for p in flat_params]
    out_spec = pl.BlockSpec((tb, OUT_PAD), lambda i: (i, 0))

    out = pl.pallas_call(
        _dqn_kernel,
        out_shape=jax.ShapeDtypeStruct((b_pad, OUT_PAD), jnp.float32),
        grid_spec=pltpu.PrefetchScalarGridSpec(
            num_scalar_prefetch=0,
            grid=grid,
            in_specs=[x_spec] + param_specs,
            out_specs=out_spec,
        ),
        compiler_params=pltpu.CompilerParams(
            dimension_semantics=("parallel",),
            # Resident bf16 weights (~2.7 MB x2 buffers) + (tb, 1024) bf16/f32
            # temporaries stay far below this even on v7x (64 MiB physical).
            vmem_limit_bytes=32 << 20,
        ),
    )(x, *flat_params)

    return out[:B, :N_ACT]


def init_params(key, n_obs, n_act):
    """Deterministic synthetic init (shapes match the nn.Linear layers)."""
    dims = (n_obs,) + HIDDEN + (n_act,)
    params = []
    for i in range(len(dims) - 1):
        key, kw, kb = jax.random.split(key, 3)
        bound = 1.0 / jnp.sqrt(dims[i])
        # stored as [in, out]; equivalent to PyTorch weight.T
        w = jax.random.uniform(kw, (dims[i], dims[i + 1]),
                               minval=-bound, maxval=bound, dtype=jnp.float32)
        b = jax.random.uniform(kb, (1, dims[i + 1]),
                               minval=-bound, maxval=bound, dtype=jnp.float32)
        params.append((w, b))
    return params


def dqn_forward_ref(x, params):
    """Pure-JAX reference mirroring the kernel's bf16-weight/bf16-activation,
    f32-accumulation math exactly."""
    h = x.astype(jnp.bfloat16)
    for i, (w, b) in enumerate(params):
        z = jnp.dot(h, w.astype(jnp.bfloat16),
                    preferred_element_type=jnp.float32) + b
        if i < len(params) - 1:
            h = jnp.maximum(z, 0.0).astype(jnp.bfloat16)
        else:
            h = z
    return h


if __name__ == "__main__":
    key = jax.random.PRNGKey(0)
    kx, kp = jax.random.split(key)

    params = init_params(kp, N_OBS, N_ACT)
    flat_params = prepare_params(params)

    # Small-shape check (online-RL style batch=2; single 128-row tile).
    batch = 2
    x = jax.random.normal(kx, (batch, N_OBS), dtype=jnp.float32)
    out = jax.block_until_ready(dqn_forward(x, flat_params))
    ref = dqn_forward_ref(x, params)
    assert out.shape == (batch, N_ACT)
    assert jnp.allclose(out, ref, atol=1e-3, rtol=1e-3), "mismatch vs JAX reference (B=2)"

    # Multi-tile check: non-multiple batch exercises padding + >= 2 grid steps
    # (tb=256, grid=2 -> both v7x TensorCores engaged).
    batch2 = 300
    x2 = jax.random.normal(jax.random.PRNGKey(1), (batch2, N_OBS), dtype=jnp.float32)
    out2 = jax.block_until_ready(dqn_forward(x2, flat_params))
    ref2 = dqn_forward_ref(x2, params)
    assert out2.shape == (batch2, N_ACT)
    assert jnp.allclose(out2, ref2, atol=1e-3, rtol=1e-3), "mismatch vs JAX reference (B=300)"

    print("KERNEL_OK")
</pallas_src>

<mosaic_0001>
module attributes {stable_mosaic.version = 11 : i64} {
  func.func @_dqn_kernel(%arg0: i32, %arg1: memref<128x8xf32, #tpu.memory_space<vmem>>, %arg2: memref<8x256xbf16, #tpu.memory_space<vmem>>, %arg3: memref<256x512xbf16, #tpu.memory_space<vmem>>, %arg4: memref<512x1024xbf16, #tpu.memory_space<vmem>>, %arg5: memref<1024x512xbf16, #tpu.memory_space<vmem>>, %arg6: memref<512x256xbf16, #tpu.memory_space<vmem>>, %arg7: memref<256x128xbf16, #tpu.memory_space<vmem>>, %arg8: memref<6x1024xf32, #tpu.memory_space<vmem>>, %arg9: memref<128x128xf32, #tpu.memory_space<vmem>>) attributes {dimension_semantics = [#tpu.dimension_semantics<parallel>], iteration_bounds = array<i64: 1>, scalar_prefetch = 0 : i64, scratch_operands = 0 : i64, tpu.core_type = #tpu.core_type<tc>, window_params = [{transform_indices = @transform_0, window_bounds = array<i64: 128, 8>}, {pipeline_mode = #tpu.pipeline_mode<synchronous>, transform_indices = @transform_1, window_bounds = array<i64: 8, 256>}, {pipeline_mode = #tpu.pipeline_mode<synchronous>, transform_indices = @transform_2, window_bounds = array<i64: 256, 512>}, {pipeline_mode = #tpu.pipeline_mode<synchronous>, transform_indices = @transform_3, window_bounds = array<i64: 512, 1024>}, {pipeline_mode = #tpu.pipeline_mode<synchronous>, transform_indices = @transform_4, window_bounds = array<i64: 1024, 512>}, {pipeline_mode = #tpu.pipeline_mode<synchronous>, transform_indices = @transform_5, window_bounds = array<i64: 512, 256>}, {pipeline_mode = #tpu.pipeline_mode<synchronous>, transform_indices = @transform_6, window_bounds = array<i64: 256, 128>}, {pipeline_mode = #tpu.pipeline_mode<synchronous>, transform_indices = @transform_7, window_bounds = array<i64: 6, 1024>}, {transform_indices = @transform_8, window_bounds = array<i64: 128, 128>}]} {
    %c0 = arith.constant 0 : index
    %c0_0 = arith.constant 0 : index
    %0 = vector.load %arg1[%c0, %c0_0] : memref<128x8xf32, #tpu.memory_space<vmem>>, vector<128x8xf32>
    %1 = arith.truncf %0 : vector<128x8xf32> to vector<128x8xbf16>
    %c0_1 = arith.constant 0 : index
    %c0_2 = arith.constant 0 : index
    %2 = vector.load %arg8[%c0_1, %c0_2] : memref<6x1024xf32, #tpu.memory_space<vmem>>, vector<1x256xf32>
    %c0_3 = arith.constant 0 : index
    %c0_4 = arith.constant 0 : index
    %3 = vector.load %arg2[%c0_3, %c0_4] : memref<8x256xbf16, #tpu.memory_space<vmem>>, vector<8x256xbf16>
    %cst = arith.constant dense<0.000000e+00> : vector<128x256xf32>
    %4 = tpu.matmul %1, %3, %cst {dimension_numbers = #tpu.dot_dimension_numbers<[1], [0], [0], [1], [0, 0, 1, 1], [], []>} : vector<128x8xbf16>, vector<8x256xbf16>, vector<128x256xf32> -> vector<128x256xf32>
    %5 = vector.broadcast %2 : vector<1x256xf32> to vector<128x256xf32>
    %6 = arith.addf %4, %5 : vector<128x256xf32>
    %cst_5 = arith.constant 0.000000e+00 : f32
    %7 = vector.broadcast %cst_5 : f32 to vector<128x256xf32>
    %8 = arith.maximumf %6, %7 : vector<128x256xf32>
    %9 = arith.truncf %8 : vector<128x256xf32> to vector<128x256xbf16>
    %c1 = arith.constant 1 : index
    %c0_6 = arith.constant 0 : index
    %10 = vector.load %arg8[%c1, %c0_6] : memref<6x1024xf32, #tpu.memory_space<vmem>>, vector<1x512xf32>
    %c0_7 = arith.constant 0 : index
    %c0_8 = arith.constant 0 : index
    %11 = vector.load %arg3[%c0_7, %c0_8] : memref<256x512xbf16, #tpu.memory_space<vmem>>, vector<256x512xbf16>
    %cst_9 = arith.constant dense<0.000000e+00> : vector<128x512xf32>
    %12 = tpu.matmul %9, %11, %cst_9 {dimension_numbers = #tpu.dot_dimension_numbers<[1], [0], [0], [1], [0, 0, 1, 1], [], []>} : vector<128x256xbf16>, vector<256x512xbf16>, vector<128x512xf32> -> vector<128x512xf32>
    %13 = vector.broadcast %10 : vector<1x512xf32> to vector<128x512xf32>
    %14 = arith.addf %12, %13 : vector<128x512xf32>
    %cst_10 = arith.constant 0.000000e+00 : f32
    %15 = vector.broadcast %cst_10 : f32 to vector<128x512xf32>
    %16 = arith.maximumf %14, %15 : vector<128x512xf32>
    %17 = arith.truncf %16 : vector<128x512xf32> to vector<128x512xbf16>
    %c2 = arith.constant 2 : index
    %c0_11 = arith.constant 0 : index
    %18 = vector.load %arg8[%c2, %c0_11] : memref<6x1024xf32, #tpu.memory_space<vmem>>, vector<1x1024xf32>
    %c0_12 = arith.constant 0 : index
    %c0_13 = arith.constant 0 : index
    %19 = vector.load %arg4[%c0_12, %c0_13] : memref<512x1024xbf16, #tpu.memory_space<vmem>>, vector<512x1024xbf16>
    %cst_14 = arith.constant dense<0.000000e+00> : vector<128x1024xf32>
    %20 = tpu.matmul %17, %19, %cst_14 {dimension_numbers = #tpu.dot_dimension_numbers<[1], [0], [0], [1], [0, 0, 1, 1], [], []>} : vector<128x512xbf16>, vector<512x1024xbf16>, vector<128x1024xf32> -> vector<128x1024xf32>
    %21 = vector.broadcast %18 : vector<1x1024xf32> to vector<128x1024xf32>
    %22 = arith.addf %20, %21 : vector<128x1024xf32>
    %cst_15 = arith.constant 0.000000e+00 : f32
    %23 = vector.broadcast %cst_15 : f32 to vector<128x1024xf32>
    %24 = arith.maximumf %22, %23 : vector<128x1024xf32>
    %25 = arith.truncf %24 : vector<128x1024xf32> to vector<128x1024xbf16>
    %c3 = arith.constant 3 : index
    %c0_16 = arith.constant 0 : index
    %26 = vector.load %arg8[%c3, %c0_16] : memref<6x1024xf32, #tpu.memory_space<vmem>>, vector<1x512xf32>
    %c0_17 = arith.constant 0 : index
    %c0_18 = arith.constant 0 : index
    %27 = vector.load %arg5[%c0_17, %c0_18] : memref<1024x512xbf16, #tpu.memory_space<vmem>>, vector<1024x512xbf16>
    %cst_19 = arith.constant dense<0.000000e+00> : vector<128x512xf32>
    %28 = tpu.matmul %25, %27, %cst_19 {dimension_numbers = #tpu.dot_dimension_numbers<[1], [0], [0], [1], [0, 0, 1, 1], [], []>} : vector<128x1024xbf16>, vector<1024x512xbf16>, vector<128x512xf32> -> vector<128x512xf32>
    %29 = vector.broadcast %26 : vector<1x512xf32> to vector<128x512xf32>
    %30 = arith.addf %28, %29 : vector<128x512xf32>
    %cst_20 = arith.constant 0.000000e+00 : f32
    %31 = vector.broadcast %cst_20 : f32 to vector<128x512xf32>
    %32 = arith.maximumf %30, %31 : vector<128x512xf32>
    %33 = arith.truncf %32 : vector<128x512xf32> to vector<128x512xbf16>
    %c4 = arith.constant 4 : index
    %c0_21 = arith.constant 0 : index
    %34 = vector.load %arg8[%c4, %c0_21] : memref<6x1024xf32, #tpu.memory_space<vmem>>, vector<1x256xf32>
    %c0_22 = arith.constant 0 : index
    %c0_23 = arith.constant 0 : index
    %35 = vector.load %arg6[%c0_22, %c0_23] : memref<512x256xbf16, #tpu.memory_space<vmem>>, vector<512x256xbf16>
    %cst_24 = arith.constant dense<0.000000e+00> : vector<128x256xf32>
    %36 = tpu.matmul %33, %35, %cst_24 {dimension_numbers = #tpu.dot_dimension_numbers<[1], [0], [0], [1], [0, 0, 1, 1], [], []>} : vector<128x512xbf16>, vector<512x256xbf16>, vector<128x256xf32> -> vector<128x256xf32>
    %37 = vector.broadcast %34 : vector<1x256xf32> to vector<128x256xf32>
    %38 = arith.addf %36, %37 : vector<128x256xf32>
    %cst_25 = arith.constant 0.000000e+00 : f32
    %39 = vector.broadcast %cst_25 : f32 to vector<128x256xf32>
    %40 = arith.maximumf %38, %39 : vector<128x256xf32>
    %41 = arith.truncf %40 : vector<128x256xf32> to vector<128x256xbf16>
    %c5 = arith.constant 5 : index
    %c0_26 = arith.constant 0 : index
    %42 = vector.load %arg8[%c5, %c0_26] : memref<6x1024xf32, #tpu.memory_space<vmem>>, vector<1x128xf32>
    %c0_27 = arith.constant 0 : index
    %c0_28 = arith.constant 0 : index
    %43 = vector.load %arg7[%c0_27, %c0_28] : memref<256x128xbf16, #tpu.memory_space<vmem>>, vector<256x128xbf16>
    %cst_29 = arith.constant dense<0.000000e+00> : vector<128x128xf32>
    %44 = tpu.matmul %41, %43, %cst_29 {dimension_numbers = #tpu.dot_dimension_numbers<[1], [0], [0], [1], [0, 0, 1, 1], [], []>} : vector<128x256xbf16>, vector<256x128xbf16>, vector<128x128xf32> -> vector<128x128xf32>
    %45 = vector.broadcast %42 : vector<1x128xf32> to vector<128x128xf32>
    %46 = arith.addf %44, %45 : vector<128x128xf32>
    %c0_30 = arith.constant 0 : index
    %c0_31 = arith.constant 0 : index
    %47 = vector.load %arg9[%c0_30, %c0_31] : memref<128x128xf32, #tpu.memory_space<vmem>>, vector<128x128xf32>
    tpu.vector_store %arg9[%c0_30, %c0_31], %46 {strides = array<i32>} : memref<128x128xf32, #tpu.memory_space<vmem>>, vector<128x128xf32>,
    return
  }
  func.func @transform_0(%arg0: i32) -> (i32, i32) {
    %c0_i32 = arith.constant 0 : i32
    %c0_i32_0 = arith.constant 0 : i32
    return %arg0, %c0_i32 : i32, i32
  }
  func.func @transform_1(%arg0: i32) -> (i32, i32) {
    %c0_i32 = arith.constant 0 : i32
    %c0_i32_0 = arith.constant 0 : i32
    %c0_i32_1 = arith.constant 0 : i32
    return %c0_i32, %c0_i32_0 : i32, i32
  }
  func.func @transform_2(%arg0: i32) -> (i32, i32) {
    %c0_i32 = arith.constant 0 : i32
    %c0_i32_0 = arith.constant 0 : i32
    %c0_i32_1 = arith.constant 0 : i32
    return %c0_i32, %c0_i32_0 : i32, i32
  }
  func.func @transform_3(%arg0: i32) -> (i32, i32) {
    %c0_i32 = arith.constant 0 : i32
    %c0_i32_0 = arith.constant 0 : i32
    %c0_i32_1 = arith.constant 0 : i32
    return %c0_i32, %c0_i32_0 : i32, i32
  }
  func.func @transform_4(%arg0: i32) -> (i32, i32) {
    %c0_i32 = arith.constant 0 : i32
    %c0_i32_0 = arith.constant 0 : i32
    %c0_i32_1 = arith.constant 0 : i32
    return %c0_i32, %c0_i32_0 : i32, i32
  }
  func.func @transform_5(%arg0: i32) -> (i32, i32) {
    %c0_i32 = arith.constant 0 : i32
    %c0_i32_0 = arith.constant 0 : i32
    %c0_i32_1 = arith.constant 0 : i32
    return %c0_i32, %c0_i32_0 : i32, i32
  }
  func.func @transform_6(%arg0: i32) -> (i32, i32) {
    %c0_i32 = arith.constant 0 : i32
    %c0_i32_0 = arith.constant 0 : i32
    %c0_i32_1 = arith.constant 0 : i32
    return %c0_i32, %c0_i32_0 : i32, i32
  }
  func.func @transform_7(%arg0: i32) -> (i32, i32) {
    %c0_i32 = arith.constant 0 : i32
    %c0_i32_0 = arith.constant 0 : i32
    %c0_i32_1 = arith.constant 0 : i32
    return %c0_i32, %c0_i32_0 : i32, i32
  }
  func.func @transform_8(%arg0: i32) -> (i32, i32) {
    %c0_i32 = arith.constant 0 : i32
    %c0_i32_0 = arith.constant 0 : i32
    return %arg0, %c0_i32 : i32, i32
  }
}

</mosaic_0001>

<llo_original>
// kernel: tpu_custom_call.1
$region0: #{tpu_custom_call.1}
  #allocation0 [shape = 'u32[]', space=smem, size = 0x4, offset = 0x4, fixed_abs, tag = 'smem constant byte address 0x4 - core index']
  #allocation1 [shape = 'u32[144,128]{1,0:T(1,128)}', space=vmem, size = 0x12000, scoped, tag = 'internal scratch']
  %s0 = inlined_call_operand.vmem [shape: f32[128,8], index: 0, kind: input, shape index: {}]
  %s1 = inlined_call_operand.vmem [shape: bf16[8,256], index: 1, kind: input, shape index: {}]
  %s2 = inlined_call_operand.hbm [shape: bf16[256,512], index: 2, kind: input, shape index: {}]
  %s3 = inlined_call_operand.hbm [shape: bf16[512,1024], index: 3, kind: input, shape index: {}]
  %s4 = inlined_call_operand.hbm [shape: bf16[1024,512], index: 4, kind: input, shape index: {}]
  %s5 = inlined_call_operand.hbm [shape: bf16[512,256], index: 5, kind: input, shape index: {}]
  %s6 = inlined_call_operand.vmem [shape: bf16[256,128], index: 6, kind: input, shape index: {}]
  %s7 = inlined_call_operand.hbm [shape: f32[6,1024], index: 7, kind: input, shape index: {}]
  %s8 = inlined_call_operand.hbm [shape: f32[128,128], index: 8, kind: output, shape index: {}]
  %s9 = sld [smem:[#allocation0]]
  $region62: #{tpu_custom_call.1} parent=0
    _
  %s11 = ssub.s32 1, %s9
  %s12 = scalar_select 0, %s11, %s9
  $region1: #{tpu_custom_call.1} parent=0
    #allocation2 [shape = 'u8[262144]{0}', space=vmem, size = 0x40000, scoped, tag = 'input window, operand 2, single buffered']
    #allocation3 [shape = 's32[1]{0}', space=sflag, size = 0x4, scoped, tag = 'scoped memory for tpu_custom_call.1']
    #allocation4 [shape = 's32[1]{0}', space=sflag, size = 0x4, scoped, tag = 'scoped memory for tpu_custom_call.1']
    #allocation5 [shape = 'u8[1048576]{0}', space=vmem, size = 0x100000, scoped, tag = 'input window, operand 3, single buffered']
    #allocation6 [shape = 's32[1]{0}', space=sflag, size = 0x4, scoped, tag = 'scoped memory for tpu_custom_call.1']
    #allocation7 [shape = 'u8[1048576]{0}', space=vmem, size = 0x100000, scoped, tag = 'input window, operand 4, single buffered']
    #allocation8 [shape = 'u8[262144]{0}', space=vmem, size = 0x40000, scoped, tag = 'input window, operand 5, single buffered']
    #allocation9 [shape = 's32[1]{0}', space=sflag, size = 0x4, scoped, tag = 'scoped memory for tpu_custom_call.1']
    #allocation10 [shape = 'u8[32768]{0}', space=vmem, size = 0x8000, scoped, tag = 'input window, operand 7, single buffered']
    #allocation11 [shape = 'u8[65536]{0}', space=vmem, size = 0x10000, scoped, tag = 'output window, operand 0, single buffered']
    %13 = vsyncpa [#allocation3], 0
    %14 = vsyncpa [#allocation6], 0
    %15 = vsyncpa [#allocation9], 0
    %16 = vsyncpa [#allocation4], 0
    // Predicated region
    $region2: #{tpu_custom_call.1} parent=1 // pred_check
      _
    $region3: #{tpu_custom_call.1} parent=1 // pred_check_branch
      %18 = sbr.rel (0) target = $region5
    $region4: #{tpu_custom_call.1} parent=1 // pred_region
      _
    $region5: #{tpu_custom_call.1} parent=1 // pred_fallthru
      _
    // Predicated region
    $region6: #{tpu_custom_call.1} parent=1 // pred_check
      _
    $region7: #{tpu_custom_call.1} parent=1 // pred_check_branch
      %20 = sbr.rel (0) target = $region9
    $region8: #{tpu_custom_call.1} parent=1 // pred_region
      _
    $region9: #{tpu_custom_call.1} parent=1 // pred_fallthru
      _
    // Predicated region
    $region10: #{tpu_custom_call.1} parent=1 // pred_check
      _
    $region11: #{tpu_custom_call.1} parent=1 // pred_check_branch
      %22 = sbr.rel (0) target = $region13
    $region12: #{tpu_custom_call.1} parent=1 // pred_region
      %s24 = ssub.s32 8192, 8192
      %25 = vsyncadd [#allocation3], %s24
      %s26 = sshll.u32 [#allocation2], 4
      %s27 = int_to_ptr.vmem [resolvable:$true] %s26
      %32 = dma.hbm_to_vmem [thread:$0]  %s2, 8192, %s27, [#allocation3], 256, 256, 16
    $region13: #{tpu_custom_call.1} parent=1 // pred_fallthru
      _
    // Predicated region
    $region14: #{tpu_custom_call.1} parent=1 // pred_check
      _
    $region15: #{tpu_custom_call.1} parent=1 // pred_check_branch
      %34 = sbr.rel (0) target = $region17
    $region16: #{tpu_custom_call.1} parent=1 // pred_region
      %s36 = ssub.s32 32768, 32768
      %37 = vsyncadd [#allocation6], %s36
      %s38 = sshll.u32 [#allocation5], 4
      %s39 = int_to_ptr.vmem [resolvable:$true] %s38
      %44 = dma.hbm_to_vmem [thread:$0]  %s3, 32768, %s39, [#allocation6], 512, 512, 32
    $region17: #{tpu_custom_call.1} parent=1 // pred_fallthru
      _
    // Predicated region
    $region18: #{tpu_custom_call.1} parent=1 // pred_check
      _
    $region19: #{tpu_custom_call.1} parent=1 // pred_check_branch
      %46 = sbr.rel (0) target = $region21
    $region20: #{tpu_custom_call.1} parent=1 // pred_region
      %s48 = ssub.s32 32768, 32768
      %49 = vsyncadd [#allocation6], %s48
      %s50 = sshll.u32 [#allocation7], 4
      %s51 = int_to_ptr.vmem [resolvable:$true] %s50
      %56 = dma.hbm_to_vmem [thread:$0]  %s4, 32768, %s51, [#allocation6], 256, 256, 16
    $region21: #{tpu_custom_call.1} parent=1 // pred_fallthru
      _
    // Predicated region
    $region22: #{tpu_custom_call.1} parent=1 // pred_check
      _
    $region23: #{tpu_custom_call.1} parent=1 // pred_check_branch
      %58 = sbr.rel (0) target = $region25
    $region24: #{tpu_custom_call.1} parent=1 // pred_region
      %s60 = ssub.s32 8192, 8192
      %61 = vsyncadd [#allocation9], %s60
      %s62 = sshll.u32 [#allocation8], 4
      %s63 = int_to_ptr.vmem [resolvable:$true] %s62
      %68 = dma.hbm_to_vmem [thread:$0]  %s5, 8192, %s63, [#allocation9], 128, 128, 8
    $region25: #{tpu_custom_call.1} parent=1 // pred_fallthru
      _
    // Predicated region
    $region26: #{tpu_custom_call.1} parent=1 // pred_check
      _
    $region27: #{tpu_custom_call.1} parent=1 // pred_check_branch
      %70 = sbr.rel (0) target = $region29
    $region28: #{tpu_custom_call.1} parent=1 // pred_region
      _
    $region29: #{tpu_custom_call.1} parent=1 // pred_fallthru
      _
    // Predicated region
    $region30: #{tpu_custom_call.1} parent=1 // pred_check
      _
    $region31: #{tpu_custom_call.1} parent=1 // pred_check_branch
      %72 = sbr.rel (0) target = $region33
    $region32: #{tpu_custom_call.1} parent=1 // pred_region
      %s74 = ssub.s32 1024, 1024
      %75 = vsyncadd [#allocation9], %s74
      %s77 = sshll.u32 [#allocation10], 4
      %s78 = int_to_ptr.vmem [resolvable:$true] %s77
      %80 = dma.hbm_to_vmem [thread:$0]  %s7, 1024, %s78, [#allocation9]
    $region33: #{tpu_custom_call.1} parent=1 // pred_fallthru
      _
    // Predicated region
    $region34: #{tpu_custom_call.1} parent=1 // pred_check
      _
    $region35: #{tpu_custom_call.1} parent=1 // pred_check_branch
      %82 = sbr.rel (0) target = $region37
    $region36: #{tpu_custom_call.1} parent=1 // pred_region
      %83 = dma.done [#allocation3], 8192
    $region37: #{tpu_custom_call.1} parent=1 // pred_fallthru
      _
    // Predicated region
    $region38: #{tpu_custom_call.1} parent=1 // pred_check
      _
    $region39: #{tpu_custom_call.1} parent=1 // pred_check_branch
      %85 = sbr.rel (0) target = $region41
    $region40: #{tpu_custom_call.1} parent=1 // pred_region
      %86 = dma.done [#allocation6], 32768
    $region41: #{tpu_custom_call.1} parent=1 // pred_fallthru
      _
    // Predicated region
    $region42: #{tpu_custom_call.1} parent=1 // pred_check
      _
    $region43: #{tpu_custom_call.1} parent=1 // pred_check_branch
      %88 = sbr.rel (0) target = $region45
    $region44: #{tpu_custom_call.1} parent=1 // pred_region
      %89 = dma.done [#allocation6], 32768
    $region45: #{tpu_custom_call.1} parent=1 // pred_fallthru
      _
    // Predicated region
    $region46: #{tpu_custom_call.1} parent=1 // pred_check
      _
    $region47: #{tpu_custom_call.1} parent=1 // pred_check_branch
      %91 = sbr.rel (0) target = $region49
    $region48: #{tpu_custom_call.1} parent=1 // pred_region
      %92 = dma.done [#allocation9], 8192
    $region49: #{tpu_custom_call.1} parent=1 // pred_fallthru
      _
    // Predicated region
    $region50: #{tpu_custom_call.1} parent=1 // pred_check
      _
    $region51: #{tpu_custom_call.1} parent=1 // pred_check_branch
      %94 = sbr.rel (0) target = $region53
    $region52: #{tpu_custom_call.1} parent=1 // pred_region
      %95 = dma.done [#allocation9], 1024
    $region53: #{tpu_custom_call.1} parent=1 // pred_fallthru
      _
    %v97 = vld [vmem:[%s0] sm:$0xff]
    %v98 = vld [vmem:[%s0 + $0x8] sm:$0xff]
    %v99 = vld [vmem:[%s0 + $0x10] sm:$0xff]
    %v100 = vld [vmem:[%s0 + $0x18] sm:$0xff]
    %v101 = vld [vmem:[%s0 + $0x20] sm:$0xff]
    %v102 = vld [vmem:[%s0 + $0x28] sm:$0xff]
    %v103 = vld [vmem:[%s0 + $0x30] sm:$0xff]
    %v104 = vld [vmem:[%s0 + $0x38] sm:$0xff]
    %v105 = vld [vmem:[%s0 + $0x40] sm:$0xff]
    %v106 = vld [vmem:[%s0 + $0x48] sm:$0xff]
    %v107 = vld [vmem:[%s0 + $0x50] sm:$0xff]
    %v108 = vld [vmem:[%s0 + $0x58] sm:$0xff]
    %v109 = vld [vmem:[%s0 + $0x60] sm:$0xff]
    %v110 = vld [vmem:[%s0 + $0x68] sm:$0xff]
    %v111 = vld [vmem:[%s0 + $0x70] sm:$0xff]
    %v112 = vld [vmem:[%s0 + $0x78] sm:$0xff]
    %v113 = vpack.c.bf16 %v98, %v97
    %v114 = vpack.c.bf16 %v100, %v99
    %v115 = vpack.c.bf16 %v102, %v101
    %v116 = vpack.c.bf16 %v104, %v103
    %v117 = vpack.c.bf16 %v106, %v105
    %v118 = vpack.c.bf16 %v108, %v107
    %v119 = vpack.c.bf16 %v110, %v109
    %v120 = vpack.c.bf16 %v112, %v111
    %v121 = vld [vmem:[#allocation10] ss:$8 sm:$0x3]
    %v122 = vld [vmem:[%s1] sm:$0xff]
    %v124 = vlaneseq
    %v125 = vshrl.u32 %v124, 7
    %v126 = vsub.s32 0, %v125
    %v127 = vrot.slane %v121, %v126
    %v128 = vlaneseq
    %v129 = vshrl.u32 %v128, 7
    %v130 = vsub.s32 1, %v129
    %v131 = vrot.slane %v121, %v130
    %v135 = vunpack.c.l.b16 %v122
    %v136 = vunpack.c.h.b16 %v122
    %v137 = vpack.c.b16 %v135, %v135
    %v138 = vpack.c.b16 %v136, %v136
    %vm139 = vcmask 64512
    %v141 = vsel %vm139, %v113, 0
    %v144 = vsel %vm139, %v114, 0
    %v147 = vsel %vm139, %v115, 0
    %v150 = vsel %vm139, %v116, 0
    %v153 = vsel %vm139, %v117, 0
    %v156 = vsel %vm139, %v118, 0
    %v159 = vsel %vm139, %v119, 0
    %v162 = vsel %vm139, %v120, 0
    %vm164 = vcmask 1043456
    %v166 = vsel %vm164, %v137, 0
    %v169 = vsel %vm164, %v138, 0
    %171 = vmatprep.subr.bf16.mxu0 0
    %172 = vmatpush1.bf16.msra.mxu0 0
    %173 = vmatprep.subr.bf16.mxu0 0
    %174 = vmatpush1.bf16.msra.mxu0 0
    %175 = vmatprep.subr.bf16.mxu0 0
    %176 = vmatpush1.bf16.msra.mxu0 0
    %177 = vmatprep.subr.bf16.mxu0 0
    %178 = vmatpush1.bf16.msra.mxu0 0
    %179 = vmatprep.subr.bf16.mxu0 0
    %180 = vmatpush1.bf16.msra.mxu0 0
    %181 = vmatprep.subr.bf16.mxu0 0
    %182 = vmatpush1.bf16.msra.mxu0 0
    %183 = vmatprep.subr.bf16.mxu0 0
    %184 = vmatpush1.bf16.msra.mxu0 0
    %185 = vmatprep.subr.bf16.mxu0 %v169
    %186 = vmatpush1.bf16.msra.mxu0 %v166
    %187 = vmatprep.subr.bf16.mxu0 0
    %188 = vmatpush2.bf16.msra.mxu0 0
    %189 = vmatprep.subr.bf16.mxu0 0
    %190 = vmatpush2.bf16.msra.mxu0 0
    %191 = vmatprep.subr.bf16.mxu0 0
    %192 = vmatpush2.bf16.msra.mxu0 0
    %193 = vmatprep.subr.bf16.mxu0 0
    %194 = vmatpush2.bf16.msra.mxu0 0
    %195 = vmatprep.subr.bf16.mxu0 0
    %196 = vmatpush2.bf16.msra.mxu0 0
    %197 = vmatprep.subr.bf16.mxu0 0
    %198 = vmatpush2.bf16.msra.mxu0 0
    %199 = vmatprep.subr.bf16.mxu0 0
    %200 = vmatpush2.bf16.msra.mxu0 0
    %201 = vmatprep.subr.bf16.mxu0 0
    %202 = vmatpush2.bf16.msra.mxu0 0
    %203 = vmatprep.mubr.bf16.mxu0 0
    %204 = vmatmul.mubr.bf16.gmra.mxu0 %v141
    %v205 = vpop.f32.mrf.mxu0
    %v206 = vadd.f32 %v127, %v205
    %v207 = vpop.f32.mrf.mxu0
    %v208 = vadd.f32 %v131, %v207
    %v209 = vpop.f32.mrf.mxu0
    %v210 = vadd.f32 %v127, %v209
    %v211 = vpop.f32.mrf.mxu0
    %v212 = vadd.f32 %v131, %v211
    %213 = vmatprep.mubr.bf16.mxu0 0
    %214 = vmatmul.mubr.bf16.gmra.mxu0 %v144
    %v215 = vpop.f32.mrf.mxu0
    %v216 = vadd.f32 %v127, %v215
    %v217 = vpop.f32.mrf.mxu0
    %v218 = vadd.f32 %v131, %v217
    %v219 = vpop.f32.mrf.mxu0
    %v220 = vadd.f32 %v127, %v219
    %v221 = vpop.f32.mrf.mxu0
    %v222 = vadd.f32 %v131, %v221
    %223 = vmatprep.mubr.bf16.mxu0 0
    %224 = vmatmul.mubr.bf16.gmra.mxu0 %v147
    %v225 = vpop.f32.mrf.mxu0
    %v226 = vadd.f32 %v127, %v225
    %v227 = vpop.f32.mrf.mxu0
    %v228 = vadd.f32 %v131, %v227
    %v229 = vpop.f32.mrf.mxu0
    %v230 = vadd.f32 %v127, %v229
    %v231 = vpop.f32.mrf.mxu0
    %v232 = vadd.f32 %v131, %v231
    %233 = vmatprep.mubr.bf16.mxu0 0
    %234 = vmatmul.mubr.bf16.gmra.mxu0 %v150
    %v235 = vpop.f32.mrf.mxu0
    %v236 = vadd.f32 %v127, %v235
    %v237 = vpop.f32.mrf.mxu0
    %v238 = vadd.f32 %v131, %v237
    %v239 = vpop.f32.mrf.mxu0
    %v240 = vadd.f32 %v127, %v239
    %v241 = vpop.f32.mrf.mxu0
    %v242 = vadd.f32 %v131, %v241
    %243 = vmatprep.mubr.bf16.mxu0 0
    %244 = vmatmul.mubr.bf16.gmra.mxu0 %v153
    %v245 = vpop.f32.mrf.mxu0
    %v246 = vadd.f32 %v127, %v245
    %v247 = vpop.f32.mrf.mxu0
    %v248 = vadd.f32 %v131, %v247
    %v249 = vpop.f32.mrf.mxu0
    %v250 = vadd.f32 %v127, %v249
    %v251 = vpop.f32.mrf.mxu0
    %v252 = vadd.f32 %v131, %v251
    %253 = vmatprep.mubr.bf16.mxu0 0
    %254 = vmatmul.mubr.bf16.gmra.mxu0 %v156
    %v255 = vpop.f32.mrf.mxu0
    %v256 = vadd.f32 %v127, %v255
    %v257 = vpop.f32.mrf.mxu0
    %v258 = vadd.f32 %v131, %v257
    %v259 = vpop.f32.mrf.mxu0
    %v260 = vadd.f32 %v127, %v259
    %v261 = vpop.f32.mrf.mxu0
    %v262 = vadd.f32 %v131, %v261
    %263 = vmatprep.mubr.bf16.mxu0 0
    %264 = vmatmul.mubr.bf16.gmra.mxu0 %v159
    %v265 = vpop.f32.mrf.mxu0
    %v266 = vadd.f32 %v127, %v265
    %v267 = vpop.f32.mrf.mxu0
    %v268 = vadd.f32 %v131, %v267
    %v269 = vpop.f32.mrf.mxu0
    %v270 = vadd.f32 %v127, %v269
    %v271 = vpop.f32.mrf.mxu0
    %v272 = vadd.f32 %v131, %v271
    %273 = vmatprep.mubr.bf16.mxu0 0
    %274 = vmatmul.mubr.bf16.gmra.mxu0 %v162
    %v275 = vpop.f32.mrf.mxu0
    %v276 = vadd.f32 %v127, %v275
    %v277 = vpop.f32.mrf.mxu0
    %v278 = vadd.f32 %v131, %v277
    %v279 = vpop.f32.mrf.mxu0
    %v280 = vadd.f32 %v127, %v279
    %v281 = vpop.f32.mrf.mxu0
    %v282 = vadd.f32 %v131, %v281
    %283 = vdwg.mxu0
    %v284 = vmax.f32 %v206, 0.0
    %v285 = vmax.f32 %v208, 0.0
    %v286 = vmax.f32 %v210, 0.0
    %v287 = vmax.f32 %v212, 0.0
    %v288 = vmax.f32 %v216, 0.0
    %v289 = vmax.f32 %v218, 0.0
    %v290 = vmax.f32 %v220, 0.0
    %v291 = vmax.f32 %v222, 0.0
    %v292 = vmax.f32 %v226, 0.0
    %v293 = vmax.f32 %v228, 0.0
    %v294 = vmax.f32 %v230, 0.0
    %v295 = vmax.f32 %v232, 0.0
    %v296 = vmax.f32 %v236, 0.0
    %v297 = vmax.f32 %v238, 0.0
    %v298 = vmax.f32 %v240, 0.0
    %v299 = vmax.f32 %v242, 0.0
    %v300 = vmax.f32 %v246, 0.0
    %v301 = vmax.f32 %v248, 0.0
    %v302 = vmax.f32 %v250, 0.0
    %v303 = vmax.f32 %v252, 0.0
    %v304 = vmax.f32 %v256, 0.0
    %v305 = vmax.f32 %v258, 0.0
    %v306 = vmax.f32 %v260, 0.0
    %v307 = vmax.f32 %v262, 0.0
    %v308 = vmax.f32 %v266, 0.0
    %v309 = vmax.f32 %v268, 0.0
    %v310 = vmax.f32 %v270, 0.0
    %v311 = vmax.f32 %v272, 0.0
    %v312 = vmax.f32 %v276, 0.0
    %v313 = vmax.f32 %v278, 0.0
    %v314 = vmax.f32 %v280, 0.0
    %v315 = vmax.f32 %v282, 0.0
    %v316 = vpack.c.bf16 %v286, %v284
    %v317 = vpack.c.bf16 %v287, %v285
    %v318 = vpack.c.bf16 %v290, %v288
    %v319 = vpack.c.bf16 %v291, %v289
    %v320 = vpack.c.bf16 %v294, %v292
    %v321 = vpack.c.bf16 %v295, %v293
    %v322 = vpack.c.bf16 %v298, %v296
    %v323 = vpack.c.bf16 %v299, %v297
    %v324 = vpack.c.bf16 %v302, %v300
    %v325 = vpack.c.bf16 %v303, %v301
    %v326 = vpack.c.bf16 %v306, %v304
    %v327 = vpack.c.bf16 %v307, %v305
    %v328 = vpack.c.bf16 %v310, %v308
    %v329 = vpack.c.bf16 %v311, %v309
    %v330 = vpack.c.bf16 %v314, %v312
    %v331 = vpack.c.bf16 %v315, %v313
    %s332 = scalar_lea.vmem [#allocation10], 1
    %v333 = vld [vmem:[%s332] ss:$8 sm:$0xf]
    %v334 = vld [vmem:[#allocation2] sm:$0xff]
    %v335 = vld [vmem:[#allocation2 + $0x8] sm:$0xff]
    %v336 = vld [vmem:[#allocation2 + $0x10] sm:$0xff]
    %v337 = vld [vmem:[#allocation2 + $0x18] sm:$0xff]
    %v338 = vld [vmem:[#allocation2 + $0x20] sm:$0xff]
    %v339 = vld [vmem:[#allocation2 + $0x28] sm:$0xff]
    %v340 = vld [vmem:[#allocation2 + $0x30] sm:$0xff]
    %v341 = vld [vmem:[#allocation2 + $0x38] sm:$0xff]
    %v342 = vld [vmem:[#allocation2 + $0x40] sm:$0xff]
    %v343 = vld [vmem:[#allocation2 + $0x48] sm:$0xff]
    %v344 = vld [vmem:[#allocation2 + $0x50] sm:$0xff]
    %v345 = vld [vmem:[#allocation2 + $0x58] sm:$0xff]
    %v346 = vld [vmem:[#allocation2 + $0x60] sm:$0xff]
    %v347 = vld [vmem:[#allocation2 + $0x68] sm:$0xff]
    %v348 = vld [vmem:[#allocation2 + $0x70] sm:$0xff]
    %v349 = vld [vmem:[#allocation2 + $0x78] sm:$0xff]
    %v350 = vld [vmem:[#allocation2 + $0x80] sm:$0xff]
    %v351 = vld [vmem:[#allocation2 + $0x88] sm:$0xff]
    %v352 = vld [vmem:[#allocation2 + $0x90] sm:$0xff]
    %v353 = vld [vmem:[#allocation2 + $0x98] sm:$0xff]
    %v354 = vld [vmem:[#allocation2 + $0xa0] sm:$0xff]
    %v355 = vld [vmem:[#allocation2 + $0xa8] sm:$0xff]
    %v356 = vld [vmem:[#allocation2 + $0xb0] sm:$0xff]
    %v357 = vld [vmem:[#allocation2 + $0xb8] sm:$0xff]
    %v358 = vld [vmem:[#allocation2 + $0xc0] sm:$0xff]
    %v359 = vld [vmem:[#allocation2 + $0xc8] sm:$0xff]
    %v360 = vld [vmem:[#allocation2 + $0xd0] sm:$0xff]
    %v361 = vld [vmem:[#allocation2 + $0xd8] sm:$0xff]
    %v362 = vld [vmem:[#allocation2 + $0xe0] sm:$0xff]
    %v363 = vld [vmem:[#allocation2 + $0xe8] sm:$0xff]
    %v364 = vld [vmem:[#allocation2 + $0xf0] sm:$0xff]
    %v365 = vld [vmem:[#allocation2 + $0xf8] sm:$0xff]
    %v366 = vld [vmem:[#allocation2 + $0x100] sm:$0xff]
    %v367 = vld [vmem:[#allocation2 + $0x108] sm:$0xff]
    %v368 = vld [vmem:[#allocation2 + $0x110] sm:$0xff]
    %v369 = vld [vmem:[#allocation2 + $0x118] sm:$0xff]
    %v370 = vld [vmem:[#allocation2 + $0x120] sm:$0xff]
    %v371 = vld [vmem:[#allocation2 + $0x128] sm:$0xff]
    %v372 = vld [vmem:[#allocation2 + $0x130] sm:$0xff]
    %v373 = vld [vmem:[#allocation2 + $0x138] sm:$0xff]
    %v374 = vld [vmem:[#allocation2 + $0x140] sm:$0xff]
    %v375 = vld [vmem:[#allocation2 + $0x148] sm:$0xff]
    %v376 = vld [vmem:[#allocation2 + $0x150] sm:$0xff]
    %v377 = vld [vmem:[#allocation2 + $0x158] sm:$0xff]
    %v378 = vld [vmem:[#allocation2 + $0x160] sm:$0xff]
    %v379 = vld [vmem:[#allocation2 + $0x168] sm:$0xff]
    %v380 = vld [vmem:[#allocation2 + $0x170] sm:$0xff]
    %v381 = vld [vmem:[#allocation2 + $0x178] sm:$0xff]
    %v382 = vld [vmem:[#allocation2 + $0x180] sm:$0xff]
    %v383 = vld [vmem:[#allocation2 + $0x188] sm:$0xff]
    %v384 = vld [vmem:[#allocation2 + $0x190] sm:$0xff]
    %v385 = vld [vmem:[#allocation2 + $0x198] sm:$0xff]
    %v386 = vld [vmem:[#allocation2 + $0x1a0] sm:$0xff]
    %v387 = vld [vmem:[#allocation2 + $0x1a8] sm:$0xff]
    %v388 = vld [vmem:[#allocation2 + $0x1b0] sm:$0xff]
    %v389 = vld [vmem:[#allocation2 + $0x1b8] sm:$0xff]
    %v390 = vld [vmem:[#allocation2 + $0x1c0] sm:$0xff]
    %v391 = vld [vmem:[#allocation2 + $0x1c8] sm:$0xff]
    %v392 = vld [vmem:[#allocation2 + $0x1d0] sm:$0xff]
    %v393 = vld [vmem:[#allocation2 + $0x1d8] sm:$0xff]
    %v394 = vld [vmem:[#allocation2 + $0x1e0] sm:$0xff]
    %v395 = vld [vmem:[#allocation2 + $0x1e8] sm:$0xff]
    %v396 = vld [vmem:[#allocation2 + $0x1f0] sm:$0xff]
    %v397 = vld [vmem:[#allocation2 + $0x1f8] sm:$0xff]
    %v399 = vlaneseq
    %v400 = vshrl.u32 %v399, 7
    %v401 = vsub.s32 0, %v400
    %v402 = vrot.slane %v333, %v401
    %v403 = vlaneseq
    %v404 = vshrl.u32 %v403, 7
    %v405 = vsub.s32 1, %v404
    %v406 = vrot.slane %v333, %v405
    %v407 = vlaneseq
    %v408 = vshrl.u32 %v407, 7
    %v409 = vsub.s32 2, %v408
    %v410 = vrot.slane %v333, %v409
    %v411 = vlaneseq
    %v412 = vshrl.u32 %v411, 7
    %v413 = vsub.s32 3, %v412
    %v414 = vrot.slane %v333, %v413
    %v483 = vunpack.c.l.b16 %v334
    %v484 = vunpack.c.h.b16 %v334
    %v485 = vunpack.c.l.b16 %v335
    %v486 = vunpack.c.h.b16 %v335
    %v487 = vunpack.c.l.b16 %v336
    %v488 = vunpack.c.h.b16 %v336
    %v489 = vunpack.c.l.b16 %v337
    %v490 = vunpack.c.h.b16 %v337
    %v491 = vunpack.c.l.b16 %v338
    %v492 = vunpack.c.h.b16 %v338
    %v493 = vunpack.c.l.b16 %v339
    %v494 = vunpack.c.h.b16 %v339
    %v495 = vunpack.c.l.b16 %v340
    %v496 = vunpack.c.h.b16 %v340
    %v497 = vunpack.c.l.b16 %v341
    %v498 = vunpack.c.h.b16 %v341
    %v499 = vunpack.c.l.b16 %v342
    %v500 = vunpack.c.h.b16 %v342
    %v501 = vunpack.c.l.b16 %v343
    %v502 = vunpack.c.h.b16 %v343
    %v503 = vunpack.c.l.b16 %v344
    %v504 = vunpack.c.h.b16 %v344
    %v505 = vunpack.c.l.b16 %v345
    %v506 = vunpack.c.h.b16 %v345
    %v507 = vunpack.c.l.b16 %v346
    %v508 = vunpack.c.h.b16 %v346
    %v509 = vunpack.c.l.b16 %v347
    %v510 = vunpack.c.h.b16 %v347
    %v511 = vunpack.c.l.b16 %v348
    %v512 = vunpack.c.h.b16 %v348
    %v513 = vunpack.c.l.b16 %v349
    %v514 = vunpack.c.h.b16 %v349
    %v515 = vunpack.c.l.b16 %v350
    %v516 = vunpack.c.h.b16 %v350
    %v517 = vunpack.c.l.b16 %v351
    %v518 = vunpack.c.h.b16 %v351
    %v519 = vunpack.c.l.b16 %v352
    %v520 = vunpack.c.h.b16 %v352
    %v521 = vunpack.c.l.b16 %v353
    %v522 = vunpack.c.h.b16 %v353
    %v523 = vunpack.c.l.b16 %v354
    %v524 = vunpack.c.h.b16 %v354
    %v525 = vunpack.c.l.b16 %v355
    %v526 = vunpack.c.h.b16 %v355
    %v527 = vunpack.c.l.b16 %v356
    %v528 = vunpack.c.h.b16 %v356
    %v529 = vunpack.c.l.b16 %v357
    %v530 = vunpack.c.h.b16 %v357
    %v531 = vunpack.c.l.b16 %v358
    %v532 = vunpack.c.h.b16 %v358
    %v533 = vunpack.c.l.b16 %v359
    %v534 = vunpack.c.h.b16 %v359
    %v535 = vunpack.c.l.b16 %v360
    %v536 = vunpack.c.h.b16 %v360
    %v537 = vunpack.c.l.b16 %v361
    %v538 = vunpack.c.h.b16 %v361
    %v539 = vunpack.c.l.b16 %v362
    %v540 = vunpack.c.h.b16 %v362
    %v541 = vunpack.c.l.b16 %v363
    %v542 = vunpack.c.h.b16 %v363
    %v543 = vunpack.c.l.b16 %v364
    %v544 = vunpack.c.h.b16 %v364
    %v545 = vunpack.c.l.b16 %v365
    %v546 = vunpack.c.h.b16 %v365
    %v547 = vunpack.c.l.b16 %v366
    %v548 = vunpack.c.h.b16 %v366
    %v549 = vunpack.c.l.b16 %v367
    %v550 = vunpack.c.h.b16 %v367
    %v551 = vunpack.c.l.b16 %v368
    %v552 = vunpack.c.h.b16 %v368
    %v553 = vunpack.c.l.b16 %v369
    %v554 = vunpack.c.h.b16 %v369
    %v555 = vunpack.c.l.b16 %v370
    %v556 = vunpack.c.h.b16 %v370
    %v557 = vunpack.c.l.b16 %v371
    %v558 = vunpack.c.h.b16 %v371
    %v559 = vunpack.c.l.b16 %v372
    %v560 = vunpack.c.h.b16 %v372
    %v561 = vunpack.c.l.b16 %v373
    %v562 = vunpack.c.h.b16 %v373
    %v563 = vunpack.c.l.b16 %v374
    %v564 = vunpack.c.h.b16 %v374
    %v565 = vunpack.c.l.b16 %v375
    %v566 = vunpack.c.h.b16 %v375
    %v567 = vunpack.c.l.b16 %v376
    %v568 = vunpack.c.h.b16 %v376
    %v569 = vunpack.c.l.b16 %v377
    %v570 = vunpack.c.h.b16 %v377
    %v571 = vunpack.c.l.b16 %v378
    %v572 = vunpack.c.h.b16 %v378
    %v573 = vunpack.c.l.b16 %v379
    %v574 = vunpack.c.h.b16 %v379
    %v575 = vunpack.c.l.b16 %v380
    %v576 = vunpack.c.h.b16 %v380
    %v577 = vunpack.c.l.b16 %v381
    %v578 = vunpack.c.h.b16 %v381
    %v579 = vunpack.c.l.b16 %v382
    %v580 = vunpack.c.h.b16 %v382
    %v581 = vunpack.c.l.b16 %v383
    %v582 = vunpack.c.h.b16 %v383
    %v583 = vunpack.c.l.b16 %v384
    %v584 = vunpack.c.h.b16 %v384
    %v585 = vunpack.c.l.b16 %v385
    %v586 = vunpack.c.h.b16 %v385
    %v587 = vunpack.c.l.b16 %v386
    %v588 = vunpack.c.h.b16 %v386
    %v589 = vunpack.c.l.b16 %v387
    %v590 = vunpack.c.h.b16 %v387
    %v591 = vunpack.c.l.b16 %v388
    %v592 = vunpack.c.h.b16 %v388
    %v593 = vunpack.c.l.b16 %v389
    %v594 = vunpack.c.h.b16 %v389
    %v595 = vunpack.c.l.b16 %v390
    %v596 = vunpack.c.h.b16 %v390
    %v597 = vunpack.c.l.b16 %v391
    %v598 = vunpack.c.h.b16 %v391
    %v599 = vunpack.c.l.b16 %v392
    %v600 = vunpack.c.h.b16 %v392
    %v601 = vunpack.c.l.b16 %v393
    %v602 = vunpack.c.h.b16 %v393
    %v603 = vunpack.c.l.b16 %v394
    %v604 = vunpack.c.h.b16 %v394
    %v605 = vunpack.c.l.b16 %v395
    %v606 = vunpack.c.h.b16 %v395
    %v607 = vunpack.c.l.b16 %v396
    %v608 = vunpack.c.h.b16 %v396
    %v609 = vunpack.c.l.b16 %v397
    %v610 = vunpack.c.h.b16 %v397
    %v611 = vpack.c.b16 %v487, %v483
    %v612 = vpack.c.b16 %v488, %v484
    %v613 = vpack.c.b16 %v489, %v485
    %v614 = vpack.c.b16 %v490, %v486
    %v615 = vpack.c.b16 %v495, %v491
    %v616 = vpack.c.b16 %v496, %v492
    %v617 = vpack.c.b16 %v497, %v493
    %v618 = vpack.c.b16 %v498, %v494
    %v619 = vpack.c.b16 %v503, %v499
    %v620 = vpack.c.b16 %v504, %v500
    %v621 = vpack.c.b16 %v505, %v501
    %v622 = vpack.c.b16 %v506, %v502
    %v623 = vpack.c.b16 %v511, %v507
    %v624 = vpack.c.b16 %v512, %v508
    %v625 = vpack.c.b16 %v513, %v509
    %v626 = vpack.c.b16 %v514, %v510
    %v627 = vpack.c.b16 %v519, %v515
    %v628 = vpack.c.b16 %v520, %v516
    %v629 = vpack.c.b16 %v521, %v517
    %v630 = vpack.c.b16 %v522, %v518
    %v631 = vpack.c.b16 %v527, %v523
    %v632 = vpack.c.b16 %v528, %v524
    %v633 = vpack.c.b16 %v529, %v525
    %v634 = vpack.c.b16 %v530, %v526
    %v635 = vpack.c.b16 %v535, %v531
    %v636 = vpack.c.b16 %v536, %v532
    %v637 = vpack.c.b16 %v537, %v533
    %v638 = vpack.c.b16 %v538, %v534
    %v639 = vpack.c.b16 %v543, %v539
    %v640 = vpack.c.b16 %v544, %v540
    %v641 = vpack.c.b16 %v545, %v541
    %v642 = vpack.c.b16 %v546, %v542
    %v643 = vpack.c.b16 %v551, %v547
    %v644 = vpack.c.b16 %v552, %v548
    %v645 = vpack.c.b16 %v553, %v549
    %v646 = vpack.c.b16 %v554, %v550
    %v647 = vpack.c.b16 %v559, %v555
    %v648 = vpack.c.b16 %v560, %v556
    %v649 = vpack.c.b16 %v561, %v557
    %v650 = vpack.c.b16 %v562, %v558
    %v651 = vpack.c.b16 %v567, %v563
    %v652 = vpack.c.b16 %v568, %v564
    %v653 = vpack.c.b16 %v569, %v565
    %v654 = vpack.c.b16 %v570, %v566
    %v655 = vpack.c.b16 %v575, %v571
    %v656 = vpack.c.b16 %v576, %v572
    %v657 = vpack.c.b16 %v577, %v573
    %v658 = vpack.c.b16 %v578, %v574
    %v659 = vpack.c.b16 %v583, %v579
    %v660 = vpack.c.b16 %v584, %v580
    %v661 = vpack.c.b16 %v585, %v581
    %v662 = vpack.c.b16 %v586, %v582
    %v663 = vpack.c.b16 %v591, %v587
    %v664 = vpack.c.b16 %v592, %v588
    %v665 = vpack.c.b16 %v593, %v589
    %v666 = vpack.c.b16 %v594, %v590
    %v667 = vpack.c.b16 %v599, %v595
    %v668 = vpack.c.b16 %v600, %v596
    %v669 = vpack.c.b16 %v601, %v597
    %v670 = vpack.c.b16 %v602, %v598
    %v671 = vpack.c.b16 %v607, %v603
    %v672 = vpack.c.b16 %v608, %v604
    %v673 = vpack.c.b16 %v609, %v605
    %v674 = vpack.c.b16 %v610, %v606
    %739 = vmatprep.subr.bf16.mxu0 %v640
    %740 = vmatpush1.bf16.msra.mxu0 %v639
    %741 = vmatprep.subr.bf16.mxu0 %v636
    %742 = vmatpush1.bf16.msra.mxu0 %v635
    %743 = vmatprep.subr.bf16.mxu0 %v632
    %744 = vmatpush1.bf16.msra.mxu0 %v631
    %745 = vmatprep.subr.bf16.mxu0 %v628
    %746 = vmatpush1.bf16.msra.mxu0 %v627
    %747 = vmatprep.subr.bf16.mxu0 %v624
    %748 = vmatpush1.bf16.msra.mxu0 %v623
    %749 = vmatprep.subr.bf16.mxu0 %v620
    %750 = vmatpush1.bf16.msra.mxu0 %v619
    %751 = vmatprep.subr.bf16.mxu0 %v616
    %752 = vmatpush1.bf16.msra.mxu0 %v615
    %753 = vmatprep.subr.bf16.mxu0 %v612
    %754 = vmatpush1.bf16.msra.mxu0 %v611
    %755 = vmatprep.subr.bf16.mxu0 %v672
    %756 = vmatpush2.bf16.msra.mxu0 %v671
    %757 = vmatprep.subr.bf16.mxu0 %v668
    %758 = vmatpush2.bf16.msra.mxu0 %v667
    %759 = vmatprep.subr.bf16.mxu0 %v664
    %760 = vmatpush2.bf16.msra.mxu0 %v663
    %761 = vmatprep.subr.bf16.mxu0 %v660
    %762 = vmatpush2.bf16.msra.mxu0 %v659
    %763 = vmatprep.subr.bf16.mxu0 %v656
    %764 = vmatpush2.bf16.msra.mxu0 %v655
    %765 = vmatprep.subr.bf16.mxu0 %v652
    %766 = vmatpush2.bf16.msra.mxu0 %v651
    %767 = vmatprep.subr.bf16.mxu0 %v648
    %768 = vmatpush2.bf16.msra.mxu0 %v647
    %769 = vmatprep.subr.bf16.mxu0 %v644
    %770 = vmatpush2.bf16.msra.mxu0 %v643
    %771 = vmatprep.mubr.bf16.mxu0 %v317
    %772 = vmatmul.mubr.bf16.gmra.mxu0 %v316
    %v773 = vpop.f32.mrf.mxu0
    %v774 = vadd.f32 %v402, %v773
    %v775 = vpop.f32.mrf.mxu0
    %v776 = vadd.f32 %v406, %v775
    %v777 = vpop.f32.mrf.mxu0
    %v778 = vadd.f32 %v402, %v777
    %v779 = vpop.f32.mrf.mxu0
    %v780 = vadd.f32 %v406, %v779
    %781 = vmatprep.mubr.bf16.mxu0 %v319
    %782 = vmatmul.mubr.bf16.gmra.mxu0 %v318
    %v783 = vpop.f32.mrf.mxu0
    %v784 = vadd.f32 %v402, %v783
    %v785 = vpop.f32.mrf.mxu0
    %v786 = vadd.f32 %v406, %v785
    %v787 = vpop.f32.mrf.mxu0
    %v788 = vadd.f32 %v402, %v787
    %v789 = vpop.f32.mrf.mxu0
    %v790 = vadd.f32 %v406, %v789
    %791 = vmatprep.mubr.bf16.mxu0 %v321
    %792 = vmatmul.mubr.bf16.gmra.mxu0 %v320
    %v793 = vpop.f32.mrf.mxu0
    %v794 = vadd.f32 %v402, %v793
    %v795 = vpop.f32.mrf.mxu0
    %v796 = vadd.f32 %v406, %v795
    %v797 = vpop.f32.mrf.mxu0
    %v798 = vadd.f32 %v402, %v797
    %v799 = vpop.f32.mrf.mxu0
    %v800 = vadd.f32 %v406, %v799
    %801 = vmatprep.mubr.bf16.mxu0 %v323
    %802 = vmatmul.mubr.bf16.gmra.mxu0 %v322
    %v803 = vpop.f32.mrf.mxu0
    %v804 = vadd.f32 %v402, %v803
    %v805 = vpop.f32.mrf.mxu0
    %v806 = vadd.f32 %v406, %v805
    %v807 = vpop.f32.mrf.mxu0
    %v808 = vadd.f32 %v402, %v807
    %v809 = vpop.f32.mrf.mxu0
    %v810 = vadd.f32 %v406, %v809
    %811 = vmatprep.mubr.bf16.mxu0 %v325
    %812 = vmatmul.mubr.bf16.gmra.mxu0 %v324
    %v813 = vpop.f32.mrf.mxu0
    %v814 = vadd.f32 %v402, %v813
    %v815 = vpop.f32.mrf.mxu0
    %v816 = vadd.f32 %v406, %v815
    %v817 = vpop.f32.mrf.mxu0
    %v818 = vadd.f32 %v402, %v817
    %v819 = vpop.f32.mrf.mxu0
    %v820 = vadd.f32 %v406, %v819
    %821 = vmatprep.mubr.bf16.mxu0 %v327
    %822 = vmatmul.mubr.bf16.gmra.mxu0 %v326
    %v823 = vpop.f32.mrf.mxu0
    %v824 = vadd.f32 %v402, %v823
    %v825 = vpop.f32.mrf.mxu0
    %v826 = vadd.f32 %v406, %v825
    %v827 = vpop.f32.mrf.mxu0
    %v828 = vadd.f32 %v402, %v827
    %v829 = vpop.f32.mrf.mxu0
    %v830 = vadd.f32 %v406, %v829
    %831 = vmatprep.mubr.bf16.mxu0 %v329
    %832 = vmatmul.mubr.bf16.gmra.mxu0 %v328
    %v833 = vpop.f32.mrf.mxu0
    %v834 = vadd.f32 %v402, %v833
    %v835 = vpop.f32.mrf.mxu0
    %v836 = vadd.f32 %v406, %v835
    %v837 = vpop.f32.mrf.mxu0
    %v838 = vadd.f32 %v402, %v837
    %v839 = vpop.f32.mrf.mxu0
    %v840 = vadd.f32 %v406, %v839
    %841 = vmatprep.mubr.bf16.mxu0 %v331
    %842 = vmatmul.mubr.bf16.gmra.mxu0 %v330
    %v843 = vpop.f32.mrf.mxu0
    %v844 = vadd.f32 %v402, %v843
    %v845 = vpop.f32.mrf.mxu0
    %v846 = vadd.f32 %v406, %v845
    %v847 = vpop.f32.mrf.mxu0
    %v848 = vadd.f32 %v402, %v847
    %v849 = vpop.f32.mrf.mxu0
    %v850 = vadd.f32 %v406, %v849
    %851 = vdwg.mxu0
    %852 = vmatprep.subr.bf16.mxu0 %v642
    %853 = vmatpush1.bf16.msra.mxu0 %v641
    %854 = vmatprep.subr.bf16.mxu0 %v638
    %855 = vmatpush1.bf16.msra.mxu0 %v637
    %856 = vmatprep.subr.bf16.mxu0 %v634
    %857 = vmatpush1.bf16.msra.mxu0 %v633
    %858 = vmatprep.subr.bf16.mxu0 %v630
    %859 = vmatpush1.bf16.msra.mxu0 %v629
    %860 = vmatprep.subr.bf16.mxu0 %v626
    %861 = vmatpush1.bf16.msra.mxu0 %v625
    %862 = vmatprep.subr.bf16.mxu0 %v622
    %863 = vmatpush1.bf16.msra.mxu0 %v621
    %864 = vmatprep.subr.bf16.mxu0 %v618
    %865 = vmatpush1.bf16.msra.mxu0 %v617
    %866 = vmatprep.subr.bf16.mxu0 %v614
    %867 = vmatpush1.bf16.msra.mxu0 %v613
    %868 = vmatprep.subr.bf16.mxu0 %v674
    %869 = vmatpush2.bf16.msra.mxu0 %v673
    %870 = vmatprep.subr.bf16.mxu0 %v670
    %871 = vmatpush2.bf16.msra.mxu0 %v669
    %872 = vmatprep.subr.bf16.mxu0 %v666
    %873 = vmatpush2.bf16.msra.mxu0 %v665
    %874 = vmatprep.subr.bf16.mxu0 %v662
    %875 = vmatpush2.bf16.msra.mxu0 %v661
    %876 = vmatprep.subr.bf16.mxu0 %v658
    %877 = vmatpush2.bf16.msra.mxu0 %v657
    %878 = vmatprep.subr.bf16.mxu0 %v654
    %879 = vmatpush2.bf16.msra.mxu0 %v653
    %880 = vmatprep.subr.bf16.mxu0 %v650
    %881 = vmatpush2.bf16.msra.mxu0 %v649
    %882 = vmatprep.subr.bf16.mxu0 %v646
    %883 = vmatpush2.bf16.msra.mxu0 %v645
    %884 = vmatprep.mubr.bf16.mxu0 %v317
    %885 = vmatmul.mubr.bf16.gmra.mxu0 %v316
    %v886 = vpop.f32.mrf.mxu0
    %v887 = vadd.f32 %v410, %v886
    %v888 = vpop.f32.mrf.mxu0
    %v889 = vadd.f32 %v414, %v888
    %v890 = vpop.f32.mrf.mxu0
    %v891 = vadd.f32 %v410, %v890
    %v892 = vpop.f32.mrf.mxu0
    %v893 = vadd.f32 %v414, %v892
    %894 = vmatprep.mubr.bf16.mxu0 %v319
    %895 = vmatmul.mubr.bf16.gmra.mxu0 %v318
    %v896 = vpop.f32.mrf.mxu0
    %v897 = vadd.f32 %v410, %v896
    %v898 = vpop.f32.mrf.mxu0
    %v899 = vadd.f32 %v414, %v898
    %v900 = vpop.f32.mrf.mxu0
    %v901 = vadd.f32 %v410, %v900
    %v902 = vpop.f32.mrf.mxu0
    %v903 = vadd.f32 %v414, %v902
    %904 = vmatprep.mubr.bf16.mxu0 %v321
    %905 = vmatmul.mubr.bf16.gmra.mxu0 %v320
    %v906 = vpop.f32.mrf.mxu0
    %v907 = vadd.f32 %v410, %v906
    %v908 = vpop.f32.mrf.mxu0
    %v909 = vadd.f32 %v414, %v908
    %v910 = vpop.f32.mrf.mxu0
    %v911 = vadd.f32 %v410, %v910
    %v912 = vpop.f32.mrf.mxu0
    %v913 = vadd.f32 %v414, %v912
    %914 = vmatprep.mubr.bf16.mxu0 %v323
    %915 = vmatmul.mubr.bf16.gmra.mxu0 %v322
    %v916 = vpop.f32.mrf.mxu0
    %v917 = vadd.f32 %v410, %v916
    %v918 = vpop.f32.mrf.mxu0
    %v919 = vadd.f32 %v414, %v918
    %v920 = vpop.f32.mrf.mxu0
    %v921 = vadd.f32 %v410, %v920
    %v922 = vpop.f32.mrf.mxu0
    %v923 = vadd.f32 %v414, %v922
    %924 = vmatprep.mubr.bf16.mxu0 %v325
    %925 = vmatmul.mubr.bf16.gmra.mxu0 %v324
    %v926 = vpop.f32.mrf.mxu0
    %v927 = vadd.f32 %v410, %v926
    %v928 = vpop.f32.mrf.mxu0
    %v929 = vadd.f32 %v414, %v928
    %v930 = vpop.f32.mrf.mxu0
    %v931 = vadd.f32 %v410, %v930
    %v932 = vpop.f32.mrf.mxu0
    %v933 = vadd.f32 %v414, %v932
    %934 = vmatprep.mubr.bf16.mxu0 %v327
    %935 = vmatmul.mubr.bf16.gmra.mxu0 %v326
    %v936 = vpop.f32.mrf.mxu0
    %v937 = vadd.f32 %v410, %v936
    %v938 = vpop.f32.mrf.mxu0
    %v939 = vadd.f32 %v414, %v938
    %v940 = vpop.f32.mrf.mxu0
    %v941 = vadd.f32 %v410, %v940
    %v942 = vpop.f32.mrf.mxu0
    %v943 = vadd.f32 %v414, %v942
    %944 = vmatprep.mubr.bf16.mxu0 %v329
    %945 = vmatmul.mubr.bf16.gmra.mxu0 %v328
    %v946 = vpop.f32.mrf.mxu0
    %v947 = vadd.f32 %v410, %v946
    %v948 = vpop.f32.mrf.mxu0
    %v949 = vadd.f32 %v414, %v948
    %v950 = vpop.f32.mrf.mxu0
    %v951 = vadd.f32 %v410, %v950
    %v952 = vpop.f32.mrf.mxu0
    %v953 = vadd.f32 %v414, %v952
    %954 = vmatprep.mubr.bf16.mxu0 %v331
    %955 = vmatmul.mubr.bf16.gmra.mxu0 %v330
    %v956 = vpop.f32.mrf.mxu0
    %v957 = vadd.f32 %v410, %v956
    %v958 = vpop.f32.mrf.mxu0
    %v959 = vadd.f32 %v414, %v958
    %v960 = vpop.f32.mrf.mxu0
    %v961 = vadd.f32 %v410, %v960
    %v962 = vpop.f32.mrf.mxu0
    %v963 = vadd.f32 %v414, %v962
    %964 = vdwg.mxu0
    %v965 = vmax.f32 %v774, 0.0
    %v966 = vmax.f32 %v776, 0.0
    %v967 = vmax.f32 %v887, 0.0
    %v968 = vmax.f32 %v889, 0.0
    %v969 = vmax.f32 %v778, 0.0
    %v970 = vmax.f32 %v780, 0.0
    %v971 = vmax.f32 %v891, 0.0
    %v972 = vmax.f32 %v893, 0.0
    %v973 = vmax.f32 %v784, 0.0
    %v974 = vmax.f32 %v786, 0.0
    %v975 = vmax.f32 %v897, 0.0
    %v976 = vmax.f32 %v899, 0.0
    %v977 = vmax.f32 %v788, 0.0
    %v978 = vmax.f32 %v790, 0.0
    %v979 = vmax.f32 %v901, 0.0
    %v980 = vmax.f32 %v903, 0.0
    %v981 = vmax.f32 %v794, 0.0
    %v982 = vmax.f32 %v796, 0.0
    %v983 = vmax.f32 %v907, 0.0
    %v984 = vmax.f32 %v909, 0.0
    %v985 = vmax.f32 %v798, 0.0
    %v986 = vmax.f32 %v800, 0.0
    %v987 = vmax.f32 %v911, 0.0
    %v988 = vmax.f32 %v913, 0.0
    %v989 = vmax.f32 %v804, 0.0
    %v990 = vmax.f32 %v806, 0.0
    %v991 = vmax.f32 %v917, 0.0
    %v992 = vmax.f32 %v919, 0.0
    %v993 = vmax.f32 %v808, 0.0
    %v994 = vmax.f32 %v810, 0.0
    %v995 = vmax.f32 %v921, 0.0
    %v996 = vmax.f32 %v923, 0.0
    %v997 = vmax.f32 %v814, 0.0
    %v998 = vmax.f32 %v816, 0.0
    %v999 = vmax.f32 %v927, 0.0
    %v1000 = vmax.f32 %v929, 0.0
    %v1001 = vmax.f32 %v818, 0.0
    %v1002 = vmax.f32 %v820, 0.0
    %v1003 = vmax.f32 %v931, 0.0
    %v1004 = vmax.f32 %v933, 0.0
    %v1005 = vmax.f32 %v824, 0.0
    %v1006 = vmax.f32 %v826, 0.0
    %v1007 = vmax.f32 %v937, 0.0
    %v1008 = vmax.f32 %v939, 0.0
    %v1009 = vmax.f32 %v828, 0.0
    %v1010 = vmax.f32 %v830, 0.0
    %v1011 = vmax.f32 %v941, 0.0
    %v1012 = vmax.f32 %v943, 0.0
    %v1013 = vmax.f32 %v834, 0.0
    %v1014 = vmax.f32 %v836, 0.0
    %v1015 = vmax.f32 %v947, 0.0
    %v1016 = vmax.f32 %v949, 0.0
    %v1017 = vmax.f32 %v838, 0.0
    %v1018 = vmax.f32 %v840, 0.0
    %v1019 = vmax.f32 %v951, 0.0
    %v1020 = vmax.f32 %v953, 0.0
    %v1021 = vmax.f32 %v844, 0.0
    %v1022 = vmax.f32 %v846, 0.0
    %v1023 = vmax.f32 %v957, 0.0
    %v1024 = vmax.f32 %v959, 0.0
    %v1025 = vmax.f32 %v848, 0.0
    %v1026 = vmax.f32 %v850, 0.0
    %v1027 = vmax.f32 %v961, 0.0
    %v1028 = vmax.f32 %v963, 0.0
    %v1029 = vpack.c.bf16 %v969, %v965
    %v1030 = vpack.c.bf16 %v970, %v966
    %v1031 = vpack.c.bf16 %v971, %v967
    %v1032 = vpack.c.bf16 %v972, %v968
    %v1033 = vpack.c.bf16 %v977, %v973
    %v1034 = vpack.c.bf16 %v978, %v974
    %v1035 = vpack.c.bf16 %v979, %v975
    %v1036 = vpack.c.bf16 %v980, %v976
    %v1037 = vpack.c.bf16 %v985, %v981
    %v1038 = vpack.c.bf16 %v986, %v982
    %v1039 = vpack.c.bf16 %v987, %v983
    %v1040 = vpack.c.bf16 %v988, %v984
    %v1041 = vpack.c.bf16 %v993, %v989
    %v1042 = vpack.c.bf16 %v994, %v990
    %v1043 = vpack.c.bf16 %v995, %v991
    %v1044 = vpack.c.bf16 %v996, %v992
    %v1045 = vpack.c.bf16 %v1001, %v997
    %v1046 = vpack.c.bf16 %v1002, %v998
    %v1047 = vpack.c.bf16 %v1003, %v999
    %v1048 = vpack.c.bf16 %v1004, %v1000
    %v1049 = vpack.c.bf16 %v1009, %v1005
    %v1050 = vpack.c.bf16 %v1010, %v1006
    %v1051 = vpack.c.bf16 %v1011, %v1007
    %v1052 = vpack.c.bf16 %v1012, %v1008
    %v1053 = vpack.c.bf16 %v1017, %v1013
    %v1054 = vpack.c.bf16 %v1018, %v1014
    %v1055 = vpack.c.bf16 %v1019, %v1015
    %v1056 = vpack.c.bf16 %v1020, %v1016
    %v1057 = vpack.c.bf16 %v1025, %v1021
    %v1058 = vpack.c.bf16 %v1026, %v1022
    %v1059 = vpack.c.bf16 %v1027, %v1023
    %v1060 = vpack.c.bf16 %v1028, %v1024
    %s1061 = scalar_lea.vmem [#allocation10], 2
    %v1062 = vld [vmem:[%s1061] ss:$8 sm:$0xf]
    %v1063 = vld [vmem:[%s1061] ss:$8 sm:$0xf0]
    %v1064 = vor.u32 %v1062, %v1063
    %v1065 = vld [vmem:[#allocation5] sm:$0xff]
    %v1066 = vld [vmem:[#allocation5 + $0x8] sm:$0xff]
    %v1067 = vld [vmem:[#allocation5 + $0x10] sm:$0xff]
    %v1068 = vld [vmem:[#allocation5 + $0x18] sm:$0xff]
    %v1069 = vld [vmem:[#allocation5 + $0x20] sm:$0xff]
    %v1070 = vld [vmem:[#allocation5 + $0x28] sm:$0xff]
    %v1071 = vld [vmem:[#allocation5 + $0x30] sm:$0xff]
    %v1072 = vld [vmem:[#allocation5 + $0x38] sm:$0xff]
    %v1073 = vld [vmem:[#allocation5 + $0x40] sm:$0xff]
    %v1074 = vld [vmem:[#allocation5 + $0x48] sm:$0xff]
    %v1075 = vld [vmem:[#allocation5 + $0x50] sm:$0xff]
    %v1076 = vld [vmem:[#allocation5 + $0x58] sm:$0xff]
    %v1077 = vld [vmem:[#allocation5 + $0x60] sm:$0xff]
    %v1078 = vld [vmem:[#allocation5 + $0x68] sm:$0xff]
    %v1079 = vld [vmem:[#allocation5 + $0x70] sm:$0xff]
    %v1080 = vld [vmem:[#allocation5 + $0x78] sm:$0xff]
    %v1081 = vld [vmem:[#allocation5 + $0x80] sm:$0xff]
    %v1082 = vld [vmem:[#allocation5 + $0x88] sm:$0xff]
    %v1083 = vld [vmem:[#allocation5 + $0x90] sm:$0xff]
    %v1084 = vld [vmem:[#allocation5 + $0x98] sm:$0xff]
    %v1085 = vld [vmem:[#allocation5 + $0xa0] sm:$0xff]
    %v1086 = vld [vmem:[#allocation5 + $0xa8] sm:$0xff]
    %v1087 = vld [vmem:[#allocation5 + $0xb0] sm:$0xff]
    %v1088 = vld [vmem:[#allocation5 + $0xb8] sm:$0xff]
    %v1089 = vld [vmem:[#allocation5 + $0xc0] sm:$0xff]
    %v1090 = vld [vmem:[#allocation5 + $0xc8] sm:$0xff]
    %v1091 = vld [vmem:[#allocation5 + $0xd0] sm:$0xff]
    %v1092 = vld [vmem:[#allocation5 + $0xd8] sm:$0xff]
    %v1093 = vld [vmem:[#allocation5 + $0xe0] sm:$0xff]
    %v1094 = vld [vmem:[#allocation5 + $0xe8] sm:$0xff]
    %v1095 = vld [vmem:[#allocation5 + $0xf0] sm:$0xff]
    %v1096 = vld [vmem:[#allocation5 + $0xf8] sm:$0xff]
    %v1097 = vld [vmem:[#allocation5 + $0x100] sm:$0xff]
    %v1098 = vld [vmem:[#allocation5 + $0x108] sm:$0xff]
    %v1099 = vld [vmem:[#allocation5 + $0x110] sm:$0xff]
    %v1100 = vld [vmem:[#allocation5 + $0x118] sm:$0xff]
    %v1101 = vld [vmem:[#allocation5 + $0x120] sm:$0xff]
    %v1102 = vld [vmem:[#allocation5 + $0x128] sm:$0xff]
    %v1103 = vld [vmem:[#allocation5 + $0x130] sm:$0xff]
    %v1104 = vld [vmem:[#allocation5 + $0x138] sm:$0xff]
    %v1105 = vld [vmem:[#allocation5 + $0x140] sm:$0xff]
    %v1106 = vld [vmem:[#allocation5 + $0x148] sm:$0xff]
    %v1107 = vld [vmem:[#allocation5 + $0x150] sm:$0xff]
    %v1108 = vld [vmem:[#allocation5 + $0x158] sm:$0xff]
    %v1109 = vld [vmem:[#allocation5 + $0x160] sm:$0xff]
    %v1110 = vld [vmem:[#allocation5 + $0x168] sm:$0xff]
    %v1111 = vld [vmem:[#allocation5 + $0x170] sm:$0xff]
    %v1112 = vld [vmem:[#allocation5 + $0x178] sm:$0xff]
    %v1113 = vld [vmem:[#allocation5 + $0x180] sm:$0xff]
    %v1114 = vld [vmem:[#allocation5 + $0x188] sm:$0xff]
    %v1115 = vld [vmem:[#allocation5 + $0x190] sm:$0xff]
    %v1116 = vld [vmem:[#allocation5 + $0x198] sm:$0xff]
    %v1117 = vld [vmem:[#allocation5 + $0x1a0] sm:$0xff]
    %v1118 = vld [vmem:[#allocation5 + $0x1a8] sm:$0xff]
    %v1119 = vld [vmem:[#allocation5 + $0x1b0] sm:$0xff]
    %v1120 = vld [vmem:[#allocation5 + $0x1b8] sm:$0xff]
    %v1121 = vld [vmem:[#allocation5 + $0x1c0] sm:$0xff]
    %v1122 = vld [vmem:[#allocation5 + $0x1c8] sm:$0xff]
    %v1123 = vld [vmem:[#allocation5 + $0x1d0] sm:$0xff]
    %v1124 = vld [vmem:[#allocation5 + $0x1d8] sm:$0xff]
    %v1125 = vld [vmem:[#allocation5 + $0x1e0] sm:$0xff]
    %v1126 = vld [vmem:[#allocation5 + $0x1e8] sm:$0xff]
    %v1127 = vld [vmem:[#allocation5 + $0x1f0] sm:$0xff]
    %v1128 = vld [vmem:[#allocation5 + $0x1f8] sm:$0xff]
    %v1129 = vld [vmem:[#allocation5 + $0x200] sm:$0xff]
    %v1130 = vld [vmem:[#allocation5 + $0x208] sm:$0xff]
    %v1131 = vld [vmem:[#allocation5 + $0x210] sm:$0xff]
    %v1132 = vld [vmem:[#allocation5 + $0x218] sm:$0xff]
    %v1133 = vld [vmem:[#allocation5 + $0x220] sm:$0xff]
    %v1134 = vld [vmem:[#allocation5 + $0x228] sm:$0xff]
    %v1135 = vld [vmem:[#allocation5 + $0x230] sm:$0xff]
    %v1136 = vld [vmem:[#allocation5 + $0x238] sm:$0xff]
    %v1137 = vld [vmem:[#allocation5 + $0x240] sm:$0xff]
    %v1138 = vld [vmem:[#allocation5 + $0x248] sm:$0xff]
    %v1139 = vld [vmem:[#allocation5 + $0x250] sm:$0xff]
    %v1140 = vld [vmem:[#allocation5 + $0x258] sm:$0xff]
    %v1141 = vld [vmem:[#allocation5 + $0x260] sm:$0xff]
    %v1142 = vld [vmem:[#allocation5 + $0x268] sm:$0xff]
    %v1143 = vld [vmem:[#allocation5 + $0x270] sm:$0xff]
    %v1144 = vld [vmem:[#allocation5 + $0x278] sm:$0xff]
    %v1145 = vld [vmem:[#allocation5 + $0x280] sm:$0xff]
    %v1146 = vld [vmem:[#allocation5 + $0x288] sm:$0xff]
    %v1147 = vld [vmem:[#allocation5 + $0x290] sm:$0xff]
    %v1148 = vld [vmem:[#allocation5 + $0x298] sm:$0xff]
    %v1149 = vld [vmem:[#allocation5 + $0x2a0] sm:$0xff]
    %v1150 = vld [vmem:[#allocation5 + $0x2a8] sm:$0xff]
    %v1151 = vld [vmem:[#allocation5 + $0x2b0] sm:$0xff]
    %v1152 = vld [vmem:[#allocation5 + $0x2b8] sm:$0xff]
    %v1153 = vld [vmem:[#allocation5 + $0x2c0] sm:$0xff]
    %v1154 = vld [vmem:[#allocation5 + $0x2c8] sm:$0xff]
    %v1155 = vld [vmem:[#allocation5 + $0x2d0] sm:$0xff]
    %v1156 = vld [vmem:[#allocation5 + $0x2d8] sm:$0xff]
    %v1157 = vld [vmem:[#allocation5 + $0x2e0] sm:$0xff]
    %v1158 = vld [vmem:[#allocation5 + $0x2e8] sm:$0xff]
    %v1159 = vld [vmem:[#allocation5 + $0x2f0] sm:$0xff]
    %v1160 = vld [vmem:[#allocation5 + $0x2f8] sm:$0xff]
    %v1161 = vld [vmem:[#allocation5 + $0x300] sm:$0xff]
    %v1162 = vld [vmem:[#allocation5 + $0x308] sm:$0xff]
    %v1163 = vld [vmem:[#allocation5 + $0x310] sm:$0xff]
    %v1164 = vld [vmem:[#allocation5 + $0x318] sm:$0xff]
    %v1165 = vld [vmem:[#allocation5 + $0x320] sm:$0xff]
    %v1166 = vld [vmem:[#allocation5 + $0x328] sm:$0xff]
    %v1167 = vld [vmem:[#allocation5 + $0x330] sm:$0xff]
    %v1168 = vld [vmem:[#allocation5 + $0x338] sm:$0xff]
    %v1169 = vld [vmem:[#allocation5 + $0x340] sm:$0xff]
    %v1170 = vld [vmem:[#allocation5 + $0x348] sm:$0xff]
    %v1171 = vld [vmem:[#allocation5 + $0x350] sm:$0xff]
    %v1172 = vld [vmem:[#allocation5 + $0x358] sm:$0xff]
    %v1173 = vld [vmem:[#allocation5 + $0x360] sm:$0xff]
    %v1174 = vld [vmem:[#allocation5 + $0x368] sm:$0xff]
    %v1175 = vld [vmem:[#allocation5 + $0x370] sm:$0xff]
    %v1176 = vld [vmem:[#allocation5 + $0x378] sm:$0xff]
    %v1177 = vld [vmem:[#allocation5 + $0x380] sm:$0xff]
    %v1178 = vld [vmem:[#allocation5 + $0x388] sm:$0xff]
    %v1179 = vld [vmem:[#allocation5 + $0x390] sm:$0xff]
    %v1180 = vld [vmem:[#allocation5 + $0x398] sm:$0xff]
    %v1181 = vld [vmem:[#allocation5 + $0x3a0] sm:$0xff]
    %v1182 = vld [vmem:[#allocation5 + $0x3a8] sm:$0xff]
    %v1183 = vld [vmem:[#allocation5 + $0x3b0] sm:$0xff]
    %v1184 = vld [vmem:[#allocation5 + $0x3b8] sm:$0xff]
    %v1185 = vld [vmem:[#allocation5 + $0x3c0] sm:$0xff]
    %v1186 = vld [vmem:[#allocation5 + $0x3c8] sm:$0xff]
    %v1187 = vld [vmem:[#allocation5 + $0x3d0] sm:$0xff]
    %v1188 = vld [vmem:[#allocation5 + $0x3d8] sm:$0xff]
    %v1189 = vld [vmem:[#allocation5 + $0x3e0] sm:$0xff]
    %v1190 = vld [vmem:[#allocation5 + $0x3e8] sm:$0xff]
    %v1191 = vld [vmem:[#allocation5 + $0x3f0] sm:$0xff]
    %v1192 = vld [vmem:[#allocation5 + $0x3f8] sm:$0xff]
    %v1193 = vld [vmem:[#allocation5 + $0x400] sm:$0xff]
    %v1194 = vld [vmem:[#allocation5 + $0x408] sm:$0xff]
    %v1195 = vld [vmem:[#allocation5 + $0x410] sm:$0xff]
    %v1196 = vld [vmem:[#allocation5 + $0x418] sm:$0xff]
    %v1197 = vld [vmem:[#allocation5 + $0x420] sm:$0xff]
    %v1198 = vld [vmem:[#allocation5 + $0x428] sm:$0xff]
    %v1199 = vld [vmem:[#allocation5 + $0x430] sm:$0xff]
    %v1200 = vld [vmem:[#allocation5 + $0x438] sm:$0xff]
    %v1201 = vld [vmem:[#allocation5 + $0x440] sm:$0xff]
    %v1202 = vld [vmem:[#allocation5 + $0x448] sm:$0xff]
    %v1203 = vld [vmem:[#allocation5 + $0x450] sm:$0xff]
    %v1204 = vld [vmem:[#allocation5 + $0x458] sm:$0xff]
    %v1205 = vld [vmem:[#allocation5 + $0x460] sm:$0xff]
    %v1206 = vld [vmem:[#allocation5 + $0x468] sm:$0xff]
    %v1207 = vld [vmem:[#allocation5 + $0x470] sm:$0xff]
    %v1208 = vld [vmem:[#allocation5 + $0x478] sm:$0xff]
    %v1209 = vld [vmem:[#allocation5 + $0x480] sm:$0xff]
    %v1210 = vld [vmem:[#allocation5 + $0x488] sm:$0xff]
    %v1211 = vld [vmem:[#allocation5 + $0x490] sm:$0xff]
    %v1212 = vld [vmem:[#allocation5 + $0x498] sm:$0xff]
    %v1213 = vld [vmem:[#allocation5 + $0x4a0] sm:$0xff]
    %v1214 = vld [vmem:[#allocation5 + $0x4a8] sm:$0xff]
    %v1215 = vld [vmem:[#allocation5 + $0x4b0] sm:$0xff]
    %v1216 = vld [vmem:[#allocation5 + $0x4b8] sm:$0xff]
    %v1217 = vld [vmem:[#allocation5 + $0x4c0] sm:$0xff]
    %v1218 = vld [vmem:[#allocation5 + $0x4c8] sm:$0xff]
    %v1219 = vld [vmem:[#allocation5 + $0x4d0] sm:$0xff]
    %v1220 = vld [vmem:[#allocation5 + $0x4d8] sm:$0xff]
    %v1221 = vld [vmem:[#allocation5 + $0x4e0] sm:$0xff]
    %v1222 = vld [vmem:[#allocation5 + $0x4e8] sm:$0xff]
    %v1223 = vld [vmem:[#allocation5 + $0x4f0] sm:$0xff]
    %v1224 = vld [vmem:[#allocation5 + $0x4f8] sm:$0xff]
    %v1225 = vld [vmem:[#allocation5 + $0x500] sm:$0xff]
    %v1226 = vld [vmem:[#allocation5 + $0x508] sm:$0xff]
    %v1227 = vld [vmem:[#allocation5 + $0x510] sm:$0xff]
    %v1228 = vld [vmem:[#allocation5 + $0x518] sm:$0xff]
    %v1229 = vld [vmem:[#allocation5 + $0x520] sm:$0xff]
    %v1230 = vld [vmem:[#allocation5 + $0x528] sm:$0xff]
    %v1231 = vld [vmem:[#allocation5 + $0x530] sm:$0xff]
    %v1232 = vld [vmem:[#allocation5 + $0x538] sm:$0xff]
    %v1233 = vld [vmem:[#allocation5 + $0x540] sm:$0xff]
    %v1234 = vld [vmem:[#allocation5 + $0x548] sm:$0xff]
    %v1235 = vld [vmem:[#allocation5 + $0x550] sm:$0xff]
    %v1236 = vld [vmem:[#allocation5 + $0x558] sm:$0xff]
    %v1237 = vld [vmem:[#allocation5 + $0x560] sm:$0xff]
    %v1238 = vld [vmem:[#allocation5 + $0x568] sm:$0xff]
    %v1239 = vld [vmem:[#allocation5 + $0x570] sm:$0xff]
    %v1240 = vld [vmem:[#allocation5 + $0x578] sm:$0xff]
    %v1241 = vld [vmem:[#allocation5 + $0x580] sm:$0xff]
    %v1242 = vld [vmem:[#allocation5 + $0x588] sm:$0xff]
    %v1243 = vld [vmem:[#allocation5 + $0x590] sm:$0xff]
    %v1244 = vld [vmem:[#allocation5 + $0x598] sm:$0xff]
    %v1245 = vld [vmem:[#allocation5 + $0x5a0] sm:$0xff]
    %v1246 = vld [vmem:[#allocation5 + $0x5a8] sm:$0xff]
    %v1247 = vld [vmem:[#allocation5 + $0x5b0] sm:$0xff]
    %v1248 = vld [vmem:[#allocation5 + $0x5b8] sm:$0xff]
    %v1249 = vld [vmem:[#allocation5 + $0x5c0] sm:$0xff]
    %v1250 = vld [vmem:[#allocation5 + $0x5c8] sm:$0xff]
    %v1251 = vld [vmem:[#allocation5 + $0x5d0] sm:$0xff]
    %v1252 = vld [vmem:[#allocation5 + $0x5d8] sm:$0xff]
    %v1253 = vld [vmem:[#allocation5 + $0x5e0] sm:$0xff]
    %v1254 = vld [vmem:[#allocation5 + $0x5e8] sm:$0xff]
    %v1255 = vld [vmem:[#allocation5 + $0x5f0] sm:$0xff]
    %v1256 = vld [vmem:[#allocation5 + $0x5f8] sm:$0xff]
    %v1257 = vld [vmem:[#allocation5 + $0x600] sm:$0xff]
    %v1258 = vld [vmem:[#allocation5 + $0x608] sm:$0xff]
    %v1259 = vld [vmem:[#allocation5 + $0x610] sm:$0xff]
    %v1260 = vld [vmem:[#allocation5 + $0x618] sm:$0xff]
    %v1261 = vld [vmem:[#allocation5 + $0x620] sm:$0xff]
    %v1262 = vld [vmem:[#allocation5 + $0x628] sm:$0xff]
    %v1263 = vld [vmem:[#allocation5 + $0x630] sm:$0xff]
    %v1264 = vld [vmem:[#allocation5 + $0x638] sm:$0xff]
    %v1265 = vld [vmem:[#allocation5 + $0x640] sm:$0xff]
    %v1266 = vld [vmem:[#allocation5 + $0x648] sm:$0xff]
    %v1267 = vld [vmem:[#allocation5 + $0x650] sm:$0xff]
    %v1268 = vld [vmem:[#allocation5 + $0x658] sm:$0xff]
    %v1269 = vld [vmem:[#allocation5 + $0x660] sm:$0xff]
    %v1270 = vld [vmem:[#allocation5 + $0x668] sm:$0xff]
    %v1271 = vld [vmem:[#allocation5 + $0x670] sm:$0xff]
    %v1272 = vld [vmem:[#allocation5 + $0x678] sm:$0xff]
    %v1273 = vld [vmem:[#allocation5 + $0x680] sm:$0xff]
    %v1274 = vld [vmem:[#allocation5 + $0x688] sm:$0xff]
    %v1275 = vld [vmem:[#allocation5 + $0x690] sm:$0xff]
    %v1276 = vld [vmem:[#allocation5 + $0x698] sm:$0xff]
    %v1277 = vld [vmem:[#allocation5 + $0x6a0] sm:$0xff]
    %v1278 = vld [vmem:[#allocation5 + $0x6a8] sm:$0xff]
    %v1279 = vld [vmem:[#allocation5 + $0x6b0] sm:$0xff]
    %v1280 = vld [vmem:[#allocation5 + $0x6b8] sm:$0xff]
    %v1281 = vld [vmem:[#allocation5 + $0x6c0] sm:$0xff]
    %v1282 = vld [vmem:[#allocation5 + $0x6c8] sm:$0xff]
    %v1283 = vld [vmem:[#allocation5 + $0x6d0] sm:$0xff]
    %v1284 = vld [vmem:[#allocation5 + $0x6d8] sm:$0xff]
    %v1285 = vld [vmem:[#allocation5 + $0x6e0] sm:$0xff]
    %v1286 = vld [vmem:[#allocation5 + $0x6e8] sm:$0xff]
    %v1287 = vld [vmem:[#allocation5 + $0x6f0] sm:$0xff]
    %v1288 = vld [vmem:[#allocation5 + $0x6f8] sm:$0xff]
    %v1289 = vld [vmem:[#allocation5 + $0x700] sm:$0xff]
    %v1290 = vld [vmem:[#allocation5 + $0x708] sm:$0xff]
    %v1291 = vld [vmem:[#allocation5 + $0x710] sm:$0xff]
    %v1292 = vld [vmem:[#allocation5 + $0x718] sm:$0xff]
    %v1293 = vld [vmem:[#allocation5 + $0x720] sm:$0xff]
    %v1294 = vld [vmem:[#allocation5 + $0x728] sm:$0xff]
    %v1295 = vld [vmem:[#allocation5 + $0x730] sm:$0xff]
    %v1296 = vld [vmem:[#allocation5 + $0x738] sm:$0xff]
    %v1297 = vld [vmem:[#allocation5 + $0x740] sm:$0xff]
    %v1298 = vld [vmem:[#allocation5 + $0x748] sm:$0xff]
    %v1299 = vld [vmem:[#allocation5 + $0x750] sm:$0xff]
    %v1300 = vld [vmem:[#allocation5 + $0x758] sm:$0xff]
    %v1301 = vld [vmem:[#allocation5 + $0x760] sm:$0xff]
    %v1302 = vld [vmem:[#allocation5 + $0x768] sm:$0xff]
    %v1303 = vld [vmem:[#allocation5 + $0x770] sm:$0xff]
    %v1304 = vld [vmem:[#allocation5 + $0x778] sm:$0xff]
    %v1305 = vld [vmem:[#allocation5 + $0x780] sm:$0xff]
    %v1306 = vld [vmem:[#allocation5 + $0x788] sm:$0xff]
    %v1307 = vld [vmem:[#allocation5 + $0x790] sm:$0xff]
    %v1308 = vld [vmem:[#allocation5 + $0x798] sm:$0xff]
    %v1309 = vld [vmem:[#allocation5 + $0x7a0] sm:$0xff]
    %v1310 = vld [vmem:[#allocation5 + $0x7a8] sm:$0xff]
    %v1311 = vld [vmem:[#allocation5 + $0x7b0] sm:$0xff]
    %v1312 = vld [vmem:[#allocation5 + $0x7b8] sm:$0xff]
    %v1313 = vld [vmem:[#allocation5 + $0x7c0] sm:$0xff]
    %v1314 = vld [vmem:[#allocation5 + $0x7c8] sm:$0xff]
    %v1315 = vld [vmem:[#allocation5 + $0x7d0] sm:$0xff]
    %v1316 = vld [vmem:[#allocation5 + $0x7d8] sm:$0xff]
    %v1317 = vld [vmem:[#allocation5 + $0x7e0] sm:$0xff]
    %v1318 = vld [vmem:[#allocation5 + $0x7e8] sm:$0xff]
    %v1319 = vld [vmem:[#allocation5 + $0x7f0] sm:$0xff]
    %v1320 = vld [vmem:[#allocation5 + $0x7f8] sm:$0xff]
    %v1322 = vlaneseq
    %v1323 = vshrl.u32 %v1322, 7
    %v1324 = vsub.s32 0, %v1323
    %v1325 = vrot.slane %v1064, %v1324
    %v1326 = vlaneseq
    %v1327 = vshrl.u32 %v1326, 7
    %v1328 = vsub.s32 1, %v1327
    %v1329 = vrot.slane %v1064, %v1328
    %v1330 = vlaneseq
    %v1331 = vshrl.u32 %v1330, 7
    %v1332 = vsub.s32 2, %v1331
    %v1333 = vrot.slane %v1064, %v1332
    %v1334 = vlaneseq
    %v1335 = vshrl.u32 %v1334, 7
    %v1336 = vsub.s32 3, %v1335
    %v1337 = vrot.slane %v1064, %v1336
    %v1338 = vlaneseq
    %v1339 = vshrl.u32 %v1338, 7
    %v1340 = vsub.s32 4, %v1339
    %v1341 = vrot.slane %v1064, %v1340
    %v1342 = vlaneseq
    %v1343 = vshrl.u32 %v1342, 7
    %v1344 = vsub.s32 5, %v1343
    %v1345 = vrot.slane %v1064, %v1344
    %v1346 = vlaneseq
    %v1347 = vshrl.u32 %v1346, 7
    %v1348 = vsub.s32 6, %v1347
    %v1349 = vrot.slane %v1064, %v1348
    %v1350 = vlaneseq
    %v1351 = vshrl.u32 %v1350, 7
    %v1352 = vsub.s32 7, %v1351
    %v1353 = vrot.slane %v1064, %v1352
    %v1618 = vunpack.c.l.b16 %v1065
    %v1619 = vunpack.c.h.b16 %v1065
    %v1620 = vunpack.c.l.b16 %v1066
    %v1621 = vunpack.c.h.b16 %v1066
    %v1622 = vunpack.c.l.b16 %v1067
    %v1623 = vunpack.c.h.b16 %v1067
    %v1624 = vunpack.c.l.b16 %v1068
    %v1625 = vunpack.c.h.b16 %v1068
    %v1626 = vunpack.c.l.b16 %v1069
    %v1627 = vunpack.c.h.b16 %v1069
    %v1628 = vunpack.c.l.b16 %v1070
    %v1629 = vunpack.c.h.b16 %v1070
    %v1630 = vunpack.c.l.b16 %v1071
    %v1631 = vunpack.c.h.b16 %v1071
    %v1632 = vunpack.c.l.b16 %v1072
    %v1633 = vunpack.c.h.b16 %v1072
    %v1634 = vunpack.c.l.b16 %v1073
    %v1635 = vunpack.c.h.b16 %v1073
    %v1636 = vunpack.c.l.b16 %v1074
    %v1637 = vunpack.c.h.b16 %v1074
    %v1638 = vunpack.c.l.b16 %v1075
    %v1639 = vunpack.c.h.b16 %v1075
    %v1640 = vunpack.c.l.b16 %v1076
    %v1641 = vunpack.c.h.b16 %v1076
    %v1642 = vunpack.c.l.b16 %v1077
    %v1643 = vunpack.c.h.b16 %v1077
    %v1644 = vunpack.c.l.b16 %v1078
    %v1645 = vunpack.c.h.b16 %v1078
    %v1646 = vunpack.c.l.b16 %v1079
    %v1647 = vunpack.c.h.b16 %v1079
    %v1648 = vunpack.c.l.b16 %v1080
    %v1649 = vunpack.c.h.b16 %v1080
    %v1650 = vunpack.c.l.b16 %v1081
    %v1651 = vunpack.c.h.b16 %v1081
    %v1652 = vunpack.c.l.b16 %v1082
    %v1653 = vunpack.c.h.b16 %v1082
    %v1654 = vunpack.c.l.b16 %v1083
    %v1655 = vunpack.c.h.b16 %v1083
    %v1656 = vunpack.c.l.b16 %v1084
    %v1657 = vunpack.c.h.b16 %v1084
    %v1658 = vunpack.c.l.b16 %v1085
    %v1659 = vunpack.c.h.b16 %v1085
    %v1660 = vunpack.c.l.b16 %v1086
    %v1661 = vunpack.c.h.b16 %v1086
    %v1662 = vunpack.c.l.b16 %v1087
    %v1663 = vunpack.c.h.b16 %v1087
    %v1664 = vunpack.c.l.b16 %v1088
    %v1665 = vunpack.c.h.b16 %v1088
    %v1666 = vunpack.c.l.b16 %v1089
    %v1667 = vunpack.c.h.b16 %v1089
    %v1668 = vunpack.c.l.b16 %v1090
    %v1669 = vunpack.c.h.b16 %v1090
    %v1670 = vunpack.c.l.b16 %v1091
    %v1671 = vunpack.c.h.b16 %v1091
    %v1672 = vunpack.c.l.b16 %v1092
    %v1673 = vunpack.c.h.b16 %v1092
    %v1674 = vunpack.c.l.b16 %v1093
    %v1675 = vunpack.c.h.b16 %v1093
    %v1676 = vunpack.c.l.b16 %v1094
    %v1677 = vunpack.c.h.b16 %v1094
    %v1678 = vunpack.c.l.b16 %v1095
    %v1679 = vunpack.c.h.b16 %v1095
    %v1680 = vunpack.c.l.b16 %v1096
    %v1681 = vunpack.c.h.b16 %v1096
    %v1682 = vunpack.c.l.b16 %v1097
    %v1683 = vunpack.c.h.b16 %v1097
    %v1684 = vunpack.c.l.b16 %v1098
    %v1685 = vunpack.c.h.b16 %v1098
    %v1686 = vunpack.c.l.b16 %v1099
    %v1687 = vunpack.c.h.b16 %v1099
    %v1688 = vunpack.c.l.b16 %v1100
    %v1689 = vunpack.c.h.b16 %v1100
    %v1690 = vunpack.c.l.b16 %v1101
    %v1691 = vunpack.c.h.b16 %v1101
    %v1692 = vunpack.c.l.b16 %v1102
    %v1693 = vunpack.c.h.b16 %v1102
    %v1694 = vunpack.c.l.b16 %v1103
    %v1695 = vunpack.c.h.b16 %v1103
    %v1696 = vunpack.c.l.b16 %v1104
    %v1697 = vunpack.c.h.b16 %v1104
    %v1698 = vunpack.c.l.b16 %v1105
    %v1699 = vunpack.c.h.b16 %v1105
    %v1700 = vunpack.c.l.b16 %v1106
    %v1701 = vunpack.c.h.b16 %v1106
    %v1702 = vunpack.c.l.b16 %v1107
    %v1703 = vunpack.c.h.b16 %v1107
    %v1704 = vunpack.c.l.b16 %v1108
    %v1705 = vunpack.c.h.b16 %v1108
    %v1706 = vunpack.c.l.b16 %v1109
    %v1707 = vunpack.c.h.b16 %v1109
    %v1708 = vunpack.c.l.b16 %v1110
    %v1709 = vunpack.c.h.b16 %v1110
    %v1710 = vunpack.c.l.b16 %v1111
    %v1711 = vunpack.c.h.b16 %v1111
    %v1712 = vunpack.c.l.b16 %v1112
    %v1713 = vunpack.c.h.b16 %v1112
    %v1714 = vunpack.c.l.b16 %v1113
    %v1715 = vunpack.c.h.b16 %v1113
    %v1716 = vunpack.c.l.b16 %v1114
    %v1717 = vunpack.c.h.b16 %v1114
    %v1718 = vunpack.c.l.b16 %v1115
    %v1719 = vunpack.c.h.b16 %v1115
    %v1720 = vunpack.c.l.b16 %v1116
    %v1721 = vunpack.c.h.b16 %v1116
    %v1722 = vunpack.c.l.b16 %v1117
    %v1723 = vunpack.c.h.b16 %v1117
    %v1724 = vunpack.c.l.b16 %v1118
    %v1725 = vunpack.c.h.b16 %v1118
    %v1726 = vunpack.c.l.b16 %v1119
    %v1727 = vunpack.c.h.b16 %v1119
    %v1728 = vunpack.c.l.b16 %v1120
    %v1729 = vunpack.c.h.b16 %v1120
    %v1730 = vunpack.c.l.b16 %v1121
    %v1731 = vunpack.c.h.b16 %v1121
    %v1732 = vunpack.c.l.b16 %v1122
    %v1733 = vunpack.c.h.b16 %v1122
    %v1734 = vunpack.c.l.b16 %v1123
    %v1735 = vunpack.c.h.b16 %v1123
    %v1736 = vunpack.c.l.b16 %v1124
    %v1737 = vunpack.c.h.b16 %v1124
    %v1738 = vunpack.c.l.b16 %v1125
    %v1739 = vunpack.c.h.b16 %v1125
    %v1740 = vunpack.c.l.b16 %v1126
    %v1741 = vunpack.c.h.b16 %v1126
    %v1742 = vunpack.c.l.b16 %v1127
    %v1743 = vunpack.c.h.b16 %v1127
    %v1744 = vunpack.c.l.b16 %v1128
    %v1745 = vunpack.c.h.b16 %v1128
    %v1746 = vunpack.c.l.b16 %v1129
    %v1747 = vunpack.c.h.b16 %v1129
    %v1748 = vunpack.c.l.b16 %v1130
    %v1749 = vunpack.c.h.b16 %v1130
    %v1750 = vunpack.c.l.b16 %v1131
    %v1751 = vunpack.c.h.b16 %v1131
    %v1752 = vunpack.c.l.b16 %v1132
    %v1753 = vunpack.c.h.b16 %v1132
    %v1754 = vunpack.c.l.b16 %v1133
    %v1755 = vunpack.c.h.b16 %v1133
    %v1756 = vunpack.c.l.b16 %v1134
    %v1757 = vunpack.c.h.b16 %v1134
    %v1758 = vunpack.c.l.b16 %v1135
    %v1759 = vunpack.c.h.b16 %v1135
    %v1760 = vunpack.c.l.b16 %v1136
    %v1761 = vunpack.c.h.b16 %v1136
    %v1762 = vunpack.c.l.b16 %v1137
    %v1763 = vunpack.c.h.b16 %v1137
    %v1764 = vunpack.c.l.b16 %v1138
    %v1765 = vunpack.c.h.b16 %v1138
    %v1766 = vunpack.c.l.b16 %v1139
    %v1767 = vunpack.c.h.b16 %v1139
    %v1768 = vunpack.c.l.b16 %v1140
    %v1769 = vunpack.c.h.b16 %v1140
    %v1770 = vunpack.c.l.b16 %v1141
    %v1771 = vunpack.c.h.b16 %v1141
    %v1772 = vunpack.c.l.b16 %v1142
    %v1773 = vunpack.c.h.b16 %v1142
    %v1774 = vunpack.c.l.b16 %v1143
    %v1775 = vunpack.c.h.b16 %v1143
    %v1776 = vunpack.c.l.b16 %v1144
    %v1777 = vunpack.c.h.b16 %v1144
    %v1778 = vunpack.c.l.b16 %v1145
    %v1779 = vunpack.c.h.b16 %v1145
    %v1780 = vunpack.c.l.b16 %v1146
    %v1781 = vunpack.c.h.b16 %v1146
    %v1782 = vunpack.c.l.b16 %v1147
    %v1783 = vunpack.c.h.b16 %v1147
    %v1784 = vunpack.c.l.b16 %v1148
    %v1785 = vunpack.c.h.b16 %v1148
    %v1786 = vunpack.c.l.b16 %v1149
    %v1787 = vunpack.c.h.b16 %v1149
    %v1788 = vunpack.c.l.b16 %v1150
    %v1789 = vunpack.c.h.b16 %v1150
    %v1790 = vunpack.c.l.b16 %v1151
    %v1791 = vunpack.c.h.b16 %v1151
    %v1792 = vunpack.c.l.b16 %v1152
    %v1793 = vunpack.c.h.b16 %v1152
    %v1794 = vunpack.c.l.b16 %v1153
    %v1795 = vunpack.c.h.b16 %v1153
    %v1796 = vunpack.c.l.b16 %v1154
    %v1797 = vunpack.c.h.b16 %v1154
    %v1798 = vunpack.c.l.b16 %v1155
    %v1799 = vunpack.c.h.b16 %v1155
    %v1800 = vunpack.c.l.b16 %v1156
    %v1801 = vunpack.c.h.b16 %v1156
    %v1802 = vunpack.c.l.b16 %v1157
    %v1803 = vunpack.c.h.b16 %v1157
    %v1804 = vunpack.c.l.b16 %v1158
    %v1805 = vunpack.c.h.b16 %v1158
    %v1806 = vunpack.c.l.b16 %v1159
    %v1807 = vunpack.c.h.b16 %v1159
    %v1808 = vunpack.c.l.b16 %v1160
    %v1809 = vunpack.c.h.b16 %v1160
    %v1810 = vunpack.c.l.b16 %v1161
    %v1811 = vunpack.c.h.b16 %v1161
    %v1812 = vunpack.c.l.b16 %v1162
    %v1813 = vunpack.c.h.b16 %v1162
    %v1814 = vunpack.c.l.b16 %v1163
    %v1815 = vunpack.c.h.b16 %v1163
    %v1816 = vunpack.c.l.b16 %v1164
    %v1817 = vunpack.c.h.b16 %v1164
    %v1818 = vunpack.c.l.b16 %v1165
    %v1819 = vunpack.c.h.b16 %v1165
    %v1820 = vunpack.c.l.b16 %v1166
    %v1821 = vunpack.c.h.b16 %v1166
    %v1822 = vunpack.c.l.b16 %v1167
    %v1823 = vunpack.c.h.b16 %v1167
    %v1824 = vunpack.c.l.b16 %v1168
    %v1825 = vunpack.c.h.b16 %v1168
    %v1826 = vunpack.c.l.b16 %v1169
    %v1827 = vunpack.c.h.b16 %v1169
    %v1828 = vunpack.c.l.b16 %v1170
    %v1829 = vunpack.c.h.b16 %v1170
    %v1830 = vunpack.c.l.b16 %v1171
    %v1831 = vunpack.c.h.b16 %v1171
    %v1832 = vunpack.c.l.b16 %v1172
    %v1833 = vunpack.c.h.b16 %v1172
    %v1834 = vunpack.c.l.b16 %v1173
    %v1835 = vunpack.c.h.b16 %v1173
    %v1836 = vunpack.c.l.b16 %v1174
    %v1837 = vunpack.c.h.b16 %v1174
    %v1838 = vunpack.c.l.b16 %v1175
    %v1839 = vunpack.c.h.b16 %v1175
    %v1840 = vunpack.c.l.b16 %v1176
    %v1841 = vunpack.c.h.b16 %v1176
    %v1842 = vunpack.c.l.b16 %v1177
    %v1843 = vunpack.c.h.b16 %v1177
    %v1844 = vunpack.c.l.b16 %v1178
    %v1845 = vunpack.c.h.b16 %v1178
    %v1846 = vunpack.c.l.b16 %v1179
    %v1847 = vunpack.c.h.b16 %v1179
    %v1848 = vunpack.c.l.b16 %v1180
    %v1849 = vunpack.c.h.b16 %v1180
    %v1850 = vunpack.c.l.b16 %v1181
    %v1851 = vunpack.c.h.b16 %v1181
    %v1852 = vunpack.c.l.b16 %v1182
    %v1853 = vunpack.c.h.b16 %v1182
    %v1854 = vunpack.c.l.b16 %v1183
    %v1855 = vunpack.c.h.b16 %v1183
    %v1856 = vunpack.c.l.b16 %v1184
    %v1857 = vunpack.c.h.b16 %v1184
    %v1858 = vunpack.c.l.b16 %v1185
    %v1859 = vunpack.c.h.b16 %v1185
    %v1860 = vunpack.c.l.b16 %v1186
    %v1861 = vunpack.c.h.b16 %v1186
    %v1862 = vunpack.c.l.b16 %v1187
    %v1863 = vunpack.c.h.b16 %v1187
    %v1864 = vunpack.c.l.b16 %v1188
    %v1865 = vunpack.c.h.b16 %v1188
    %v1866 = vunpack.c.l.b16 %v1189
    %v1867 = vunpack.c.h.b16 %v1189
    %v1868 = vunpack.c.l.b16 %v1190
    %v1869 = vunpack.c.h.b16 %v1190
    %v1870 = vunpack.c.l.b16 %v1191
    %v1871 = vunpack.c.h.b16 %v1191
    %v1872 = vunpack.c.l.b16 %v1192
    %v1873 = vunpack.c.h.b16 %v1192
    %v1874 = vunpack.c.l.b16 %v1193
    %v1875 = vunpack.c.h.b16 %v1193
    %v1876 = vunpack.c.l.b16 %v1194
    %v1877 = vunpack.c.h.b16 %v1194
    %v1878 = vunpack.c.l.b16 %v1195
    %v1879 = vunpack.c.h.b16 %v1195
    %v1880 = vunpack.c.l.b16 %v1196
    %v1881 = vunpack.c.h.b16 %v1196
    %v1882 = vunpack.c.l.b16 %v1197
    %v1883 = vunpack.c.h.b16 %v1197
    %v1884 = vunpack.c.l.b16 %v1198
    %v1885 = vunpack.c.h.b16 %v1198
    %v1886 = vunpack.c.l.b16 %v1199
    %v1887 = vunpack.c.h.b16 %v1199
    %v1888 = vunpack.c.l.b16 %v1200
    %v1889 = vunpack.c.h.b16 %v1200
    %v1890 = vunpack.c.l.b16 %v1201
    %v1891 = vunpack.c.h.b16 %v1201
    %v1892 = vunpack.c.l.b16 %v1202
    %v1893 = vunpack.c.h.b16 %v1202
    %v1894 = vunpack.c.l.b16 %v1203
    %v1895 = vunpack.c.h.b16 %v1203
    %v1896 = vunpack.c.l.b16 %v1204
    %v1897 = vunpack.c.h.b16 %v1204
    %v1898 = vunpack.c.l.b16 %v1205
    %v1899 = vunpack.c.h.b16 %v1205
    %v1900 = vunpack.c.l.b16 %v1206
    %v1901 = vunpack.c.h.b16 %v1206
    %v1902 = vunpack.c.l.b16 %v1207
    %v1903 = vunpack.c.h.b16 %v1207
    %v1904 = vunpack.c.l.b16 %v1208
    %v1905 = vunpack.c.h.b16 %v1208
    %v1906 = vunpack.c.l.b16 %v1209
    %v1907 = vunpack.c.h.b16 %v1209
    %v1908 = vunpack.c.l.b16 %v1210
    %v1909 = vunpack.c.h.b16 %v1210
    %v1910 = vunpack.c.l.b16 %v1211
    %v1911 = vunpack.c.h.b16 %v1211
    %v1912 = vunpack.c.l.b16 %v1212
    %v1913 = vunpack.c.h.b16 %v1212
    %v1914 = vunpack.c.l.b16 %v1213
    %v1915 = vunpack.c.h.b16 %v1213
    %v1916 = vunpack.c.l.b16 %v1214
    %v1917 = vunpack.c.h.b16 %v1214
    %v1918 = vunpack.c.l.b16 %v1215
    %v1919 = vunpack.c.h.b16 %v1215
    %v1920 = vunpack.c.l.b16 %v1216
    %v1921 = vunpack.c.h.b16 %v1216
    %v1922 = vunpack.c.l.b16 %v1217
    %v1923 = vunpack.c.h.b16 %v1217
    %v1924 = vunpack.c.l.b16 %v1218
    %v1925 = vunpack.c.h.b16 %v1218
    %v1926 = vunpack.c.l.b16 %v1219
    %v1927 = vunpack.c.h.b16 %v1219
    %v1928 = vunpack.c.l.b16 %v1220
    %v1929 = vunpack.c.h.b16 %v1220
    %v1930 = vunpack.c.l.b16 %v1221
    %v1931 = vunpack.c.h.b16 %v1221
    %v1932 = vunpack.c.l.b16 %v1222
    %v1933 = vunpack.c.h.b16 %v1222
    %v1934 = vunpack.c.l.b16 %v1223
    %v1935 = vunpack.c.h.b16 %v1223
    %v1936 = vunpack.c.l.b16 %v1224
    %v1937 = vunpack.c.h.b16 %v1224
    %v1938 = vunpack.c.l.b16 %v1225
    %v1939 = vunpack.c.h.b16 %v1225
    %v1940 = vunpack.c.l.b16 %v1226
    %v1941 = vunpack.c.h.b16 %v1226
    %v1942 = vunpack.c.l.b16 %v1227
    %v1943 = vunpack.c.h.b16 %v1227
    %v1944 = vunpack.c.l.b16 %v1228
    %v1945 = vunpack.c.h.b16 %v1228
    %v1946 = vunpack.c.l.b16 %v1229
    %v1947 = vunpack.c.h.b16 %v1229
    %v1948 = vunpack.c.l.b16 %v1230
    %v1949 = vunpack.c.h.b16 %v1230
    %v1950 = vunpack.c.l.b16 %v1231
    %v1951 = vunpack.c.h.b16 %v1231
    %v1952 = vunpack.c.l.b16 %v1232
    %v1953 = vunpack.c.h.b16 %v1232
    %v1954 = vunpack.c.l.b16 %v1233
    %v1955 = vunpack.c.h.b16 %v1233
    %v1956 = vunpack.c.l.b16 %v1234
    %v1957 = vunpack.c.h.b16 %v1234
    %v1958 = vunpack.c.l.b16 %v1235
    %v1959 = vunpack.c.h.b16 %v1235
    %v1960 = vunpack.c.l.b16 %v1236
    %v1961 = vunpack.c.h.b16 %v1236
    %v1962 = vunpack.c.l.b16 %v1237
    %v1963 = vunpack.c.h.b16 %v1237
    %v1964 = vunpack.c.l.b16 %v1238
    %v1965 = vunpack.c.h.b16 %v1238
    %v1966 = vunpack.c.l.b16 %v1239
    %v1967 = vunpack.c.h.b16 %v1239
    %v1968 = vunpack.c.l.b16 %v1240
    %v1969 = vunpack.c.h.b16 %v1240
    %v1970 = vunpack.c.l.b16 %v1241
    %v1971 = vunpack.c.h.b16 %v1241
    %v1972 = vunpack.c.l.b16 %v1242
    %v1973 = vunpack.c.h.b16 %v1242
    %v1974 = vunpack.c.l.b16 %v1243
    %v1975 = vunpack.c.h.b16 %v1243
    %v1976 = vunpack.c.l.b16 %v1244
    %v1977 = vunpack.c.h.b16 %v1244
    %v1978 = vunpack.c.l.b16 %v1245
    %v1979 = vunpack.c.h.b16 %v1245
    %v1980 = vunpack.c.l.b16 %v1246
    %v1981 = vunpack.c.h.b16 %v1246
    %v1982 = vunpack.c.l.b16 %v1247
    %v1983 = vunpack.c.h.b16 %v1247
    %v1984 = vunpack.c.l.b16 %v1248
    %v1985 = vunpack.c.h.b16 %v1248
    %v1986 = vunpack.c.l.b16 %v1249
    %v1987 = vunpack.c.h.b16 %v1249
    %v1988 = vunpack.c.l.b16 %v1250
    %v1989 = vunpack.c.h.b16 %v1250
    %v1990 = vunpack.c.l.b16 %v1251
    %v1991 = vunpack.c.h.b16 %v1251
    %v1992 = vunpack.c.l.b16 %v1252
    %v1993 = vunpack.c.h.b16 %v1252
    %v1994 = vunpack.c.l.b16 %v1253
    %v1995 = vunpack.c.h.b16 %v1253
    %v1996 = vunpack.c.l.b16 %v1254
    %v1997 = vunpack.c.h.b16 %v1254
    %v1998 = vunpack.c.l.b16 %v1255
    %v1999 = vunpack.c.h.b16 %v1255
    %v2000 = vunpack.c.l.b16 %v1256
    %v2001 = vunpack.c.h.b16 %v1256
    %v2002 = vunpack.c.l.b16 %v1257
    %v2003 = vunpack.c.h.b16 %v1257
    %v2004 = vunpack.c.l.b16 %v1258
    %v2005 = vunpack.c.h.b16 %v1258
    %v2006 = vunpack.c.l.b16 %v1259
    %v2007 = vunpack.c.h.b16 %v1259
    %v2008 = vunpack.c.l.b16 %v1260
    %v2009 = vunpack.c.h.b16 %v1260
    %v2010 = vunpack.c.l.b16 %v1261
    %v2011 = vunpack.c.h.b16 %v1261
    %v2012 = vunpack.c.l.b16 %v1262
    %v2013 = vunpack.c.h.b16 %v1262
    %v2014 = vunpack.c.l.b16 %v1263
    %v2015 = vunpack.c.h.b16 %v1263
    %v2016 = vunpack.c.l.b16 %v1264
    %v2017 = vunpack.c.h.b16 %v1264
    %v2018 = vunpack.c.l.b16 %v1265
    %v2019 = vunpack.c.h.b16 %v1265
    %v2020 = vunpack.c.l.b16 %v1266
    %v2021 = vunpack.c.h.b16 %v1266
    %v2022 = vunpack.c.l.b16 %v1267
    %v2023 = vunpack.c.h.b16 %v1267
    %v2024 = vunpack.c.l.b16 %v1268
    %v2025 = vunpack.c.h.b16 %v1268
    %v2026 = vunpack.c.l.b16 %v1269
    %v2027 = vunpack.c.h.b16 %v1269
    %v2028 = vunpack.c.l.b16 %v1270
    %v2029 = vunpack.c.h.b16 %v1270
    %v2030 = vunpack.c.l.b16 %v1271
    %v2031 = vunpack.c.h.b16 %v1271
    %v2032 = vunpack.c.l.b16 %v1272
    %v2033 = vunpack.c.h.b16 %v1272
    %v2034 = vunpack.c.l.b16 %v1273
    %v2035 = vunpack.c.h.b16 %v1273
    %v2036 = vunpack.c.l.b16 %v1274
    %v2037 = vunpack.c.h.b16 %v1274
    %v2038 = vunpack.c.l.b16 %v1275
    %v2039 = vunpack.c.h.b16 %v1275
    %v2040 = vunpack.c.l.b16 %v1276
    %v2041 = vunpack.c.h.b16 %v1276
    %v2042 = vunpack.c.l.b16 %v1277
    %v2043 = vunpack.c.h.b16 %v1277
    %v2044 = vunpack.c.l.b16 %v1278
    %v2045 = vunpack.c.h.b16 %v1278
    %v2046 = vunpack.c.l.b16 %v1279
    %v2047 = vunpack.c.h.b16 %v1279
    %v2048 = vunpack.c.l.b16 %v1280
    %v2049 = vunpack.c.h.b16 %v1280
    %v2050 = vunpack.c.l.b16 %v1281
    %v2051 = vunpack.c.h.b16 %v1281
    %v2052 = vunpack.c.l.b16 %v1282
    %v2053 = vunpack.c.h.b16 %v1282
    %v2054 = vunpack.c.l.b16 %v1283
    %v2055 = vunpack.c.h.b16 %v1283
    %v2056 = vunpack.c.l.b16 %v1284
    %v2057 = vunpack.c.h.b16 %v1284
    %v2058 = vunpack.c.l.b16 %v1285
    %v2059 = vunpack.c.h.b16 %v1285
    %v2060 = vunpack.c.l.b16 %v1286
    %v2061 = vunpack.c.h.b16 %v1286
    %v2062 = vunpack.c.l.b16 %v1287
    %v2063 = vunpack.c.h.b16 %v1287
    %v2064 = vunpack.c.l.b16 %v1288
    %v2065 = vunpack.c.h.b16 %v1288
    %v2066 = vunpack.c.l.b16 %v1289
    %v2067 = vunpack.c.h.b16 %v1289
    %v2068 = vunpack.c.l.b16 %v1290
    %v2069 = vunpack.c.h.b16 %v1290
    %v2070 = vunpack.c.l.b16 %v1291
    %v2071 = vunpack.c.h.b16 %v1291
    %v2072 = vunpack.c.l.b16 %v1292
    %v2073 = vunpack.c.h.b16 %v1292
    %v2074 = vunpack.c.l.b16 %v1293
    %v2075 = vunpack.c.h.b16 %v1293
    %v2076 = vunpack.c.l.b16 %v1294
    %v2077 = vunpack.c.h.b16 %v1294
    %v2078 = vunpack.c.l.b16 %v1295
    %v2079 = vunpack.c.h.b16 %v1295
    %v2080 = vunpack.c.l.b16 %v1296
    %v2081 = vunpack.c.h.b16 %v1296
    %v2082 = vunpack.c.l.b16 %v1297
    %v2083 = vunpack.c.h.b16 %v1297
    %v2084 = vunpack.c.l.b16 %v1298
    %v2085 = vunpack.c.h.b16 %v1298
    %v2086 = vunpack.c.l.b16 %v1299
    %v2087 = vunpack.c.h.b16 %v1299
    %v2088 = vunpack.c.l.b16 %v1300
    %v2089 = vunpack.c.h.b16 %v1300
    %v2090 = vunpack.c.l.b16 %v1301
    %v2091 = vunpack.c.h.b16 %v1301
    %v2092 = vunpack.c.l.b16 %v1302
    %v2093 = vunpack.c.h.b16 %v1302
    %v2094 = vunpack.c.l.b16 %v1303
    %v2095 = vunpack.c.h.b16 %v1303
    %v2096 = vunpack.c.l.b16 %v1304
    %v2097 = vunpack.c.h.b16 %v1304
    %v2098 = vunpack.c.l.b16 %v1305
    %v2099 = vunpack.c.h.b16 %v1305
    %v2100 = vunpack.c.l.b16 %v1306
    %v2101 = vunpack.c.h.b16 %v1306
    %v2102 = vunpack.c.l.b16 %v1307
    %v2103 = vunpack.c.h.b16 %v1307
    %v2104 = vunpack.c.l.b16 %v1308
    %v2105 = vunpack.c.h.b16 %v1308
    %v2106 = vunpack.c.l.b16 %v1309
    %v2107 = vunpack.c.h.b16 %v1309
    %v2108 = vunpack.c.l.b16 %v1310
    %v2109 = vunpack.c.h.b16 %v1310
    %v2110 = vunpack.c.l.b16 %v1311
    %v2111 = vunpack.c.h.b16 %v1311
    %v2112 = vunpack.c.l.b16 %v1312
    %v2113 = vunpack.c.h.b16 %v1312
    %v2114 = vunpack.c.l.b16 %v1313
    %v2115 = vunpack.c.h.b16 %v1313
    %v2116 = vunpack.c.l.b16 %v1314
    %v2117 = vunpack.c.h.b16 %v1314
    %v2118 = vunpack.c.l.b16 %v1315
    %v2119 = vunpack.c.h.b16 %v1315
    %v2120 = vunpack.c.l.b16 %v1316
    %v2121 = vunpack.c.h.b16 %v1316
    %v2122 = vunpack.c.l.b16 %v1317
    %v2123 = vunpack.c.h.b16 %v1317
    %v2124 = vunpack.c.l.b16 %v1318
    %v2125 = vunpack.c.h.b16 %v1318
    %v2126 = vunpack.c.l.b16 %v1319
    %v2127 = vunpack.c.h.b16 %v1319
    %v2128 = vunpack.c.l.b16 %v1320
    %v2129 = vunpack.c.h.b16 %v1320
    %v2130 = vpack.c.b16 %v1626, %v1618
    %v2131 = vpack.c.b16 %v1627, %v1619
    %v2132 = vpack.c.b16 %v1628, %v1620
    %v2133 = vpack.c.b16 %v1629, %v1621
    %v2134 = vpack.c.b16 %v1630, %v1622
    %v2135 = vpack.c.b16 %v1631, %v1623
    %v2136 = vpack.c.b16 %v1632, %v1624
    %v2137 = vpack.c.b16 %v1633, %v1625
    %v2138 = vpack.c.b16 %v1642, %v1634
    %v2139 = vpack.c.b16 %v1643, %v1635
    %v2140 = vpack.c.b16 %v1644, %v1636
    %v2141 = vpack.c.b16 %v1645, %v1637
    %v2142 = vpack.c.b16 %v1646, %v1638
    %v2143 = vpack.c.b16 %v1647, %v1639
    %v2144 = vpack.c.b16 %v1648, %v1640
    %v2145 = vpack.c.b16 %v1649, %v1641
    %v2146 = vpack.c.b16 %v1658, %v1650
    %v2147 = vpack.c.b16 %v1659, %v1651
    %v2148 = vpack.c.b16 %v1660, %v1652
    %v2149 = vpack.c.b16 %v1661, %v1653
    %v2150 = vpack.c.b16 %v1662, %v1654
    %v2151 = vpack.c.b16 %v1663, %v1655
    %v2152 = vpack.c.b16 %v1664, %v1656
    %v2153 = vpack.c.b16 %v1665, %v1657
    %v2154 = vpack.c.b16 %v1674, %v1666
    %v2155 = vpack.c.b16 %v1675, %v1667
    %v2156 = vpack.c.b16 %v1676, %v1668
    %v2157 = vpack.c.b16 %v1677, %v1669
    %v2158 = vpack.c.b16 %v1678, %v1670
    %v2159 = vpack.c.b16 %v1679, %v1671
    %v2160 = vpack.c.b16 %v1680, %v1672
    %v2161 = vpack.c.b16 %v1681, %v1673
    %v2162 = vpack.c.b16 %v1690, %v1682
    %v2163 = vpack.c.b16 %v1691, %v1683
    %v2164 = vpack.c.b16 %v1692, %v1684
    %v2165 = vpack.c.b16 %v1693, %v1685
    %v2166 = vpack.c.b16 %v1694, %v1686
    %v2167 = vpack.c.b16 %v1695, %v1687
    %v2168 = vpack.c.b16 %v1696, %v1688
    %v2169 = vpack.c.b16 %v1697, %v1689
    %v2170 = vpack.c.b16 %v1706, %v1698
    %v2171 = vpack.c.b16 %v1707, %v1699
    %v2172 = vpack.c.b16 %v1708, %v1700
    %v2173 = vpack.c.b16 %v1709, %v1701
    %v2174 = vpack.c.b16 %v1710, %v1702
    %v2175 = vpack.c.b16 %v1711, %v1703
    %v2176 = vpack.c.b16 %v1712, %v1704
    %v2177 = vpack.c.b16 %v1713, %v1705
    %v2178 = vpack.c.b16 %v1722, %v1714
    %v2179 = vpack.c.b16 %v1723, %v1715
    %v2180 = vpack.c.b16 %v1724, %v1716
    %v2181 = vpack.c.b16 %v1725, %v1717
    %v2182 = vpack.c.b16 %v1726, %v1718
    %v2183 = vpack.c.b16 %v1727, %v1719
    %v2184 = vpack.c.b16 %v1728, %v1720
    %v2185 = vpack.c.b16 %v1729, %v1721
    %v2186 = vpack.c.b16 %v1738, %v1730
    %v2187 = vpack.c.b16 %v1739, %v1731
    %v2188 = vpack.c.b16 %v1740, %v1732
    %v2189 = vpack.c.b16 %v1741, %v1733
    %v2190 = vpack.c.b16 %v1742, %v1734
    %v2191 = vpack.c.b16 %v1743, %v1735
    %v2192 = vpack.c.b16 %v1744, %v1736
    %v2193 = vpack.c.b16 %v1745, %v1737
    %v2194 = vpack.c.b16 %v1754, %v1746
    %v2195 = vpack.c.b16 %v1755, %v1747
    %v2196 = vpack.c.b16 %v1756, %v1748
    %v2197 = vpack.c.b16 %v1757, %v1749
    %v2198 = vpack.c.b16 %v1758, %v1750
    %v2199 = vpack.c.b16 %v1759, %v1751
    %v2200 = vpack.c.b16 %v1760, %v1752
    %v2201 = vpack.c.b16 %v1761, %v1753
    %v2202 = vpack.c.b16 %v1770, %v1762
    %v2203 = vpack.c.b16 %v1771, %v1763
    %v2204 = vpack.c.b16 %v1772, %v1764
    %v2205 = vpack.c.b16 %v1773, %v1765
    %v2206 = vpack.c.b16 %v1774, %v1766
    %v2207 = vpack.c.b16 %v1775, %v1767
    %v2208 = vpack.c.b16 %v1776, %v1768
    %v2209 = vpack.c.b16 %v1777, %v1769
    %v2210 = vpack.c.b16 %v1786, %v1778
    %v2211 = vpack.c.b16 %v1787, %v1779
    %v2212 = vpack.c.b16 %v1788, %v1780
    %v2213 = vpack.c.b16 %v1789, %v1781
    %v2214 = vpack.c.b16 %v1790, %v1782
    %v2215 = vpack.c.b16 %v1791, %v1783
    %v2216 = vpack.c.b16 %v1792, %v1784
    %v2217 = vpack.c.b16 %v1793, %v1785
    %v2218 = vpack.c.b16 %v1802, %v1794
    %v2219 = vpack.c.b16 %v1803, %v1795
    %v2220 = vpack.c.b16 %v1804, %v1796
    %v2221 = vpack.c.b16 %v1805, %v1797
    %v2222 = vpack.c.b16 %v1806, %v1798
    %v2223 = vpack.c.b16 %v1807, %v1799
    %v2224 = vpack.c.b16 %v1808, %v1800
    %v2225 = vpack.c.b16 %v1809, %v1801
    %v2226 = vpack.c.b16 %v1818, %v1810
    %v2227 = vpack.c.b16 %v1819, %v1811
    %v2228 = vpack.c.b16 %v1820, %v1812
    %v2229 = vpack.c.b16 %v1821, %v1813
    %v2230 = vpack.c.b16 %v1822, %v1814
    %v2231 = vpack.c.b16 %v1823, %v1815
    %v2232 = vpack.c.b16 %v1824, %v1816
    %v2233 = vpack.c.b16 %v1825, %v1817
    %v2234 = vpack.c.b16 %v1834, %v1826
    %v2235 = vpack.c.b16 %v1835, %v1827
    %v2236 = vpack.c.b16 %v1836, %v1828
    %v2237 = vpack.c.b16 %v1837, %v1829
    %v2238 = vpack.c.b16 %v1838, %v1830
    %v2239 = vpack.c.b16 %v1839, %v1831
    %v2240 = vpack.c.b16 %v1840, %v1832
    %v2241 = vpack.c.b16 %v1841, %v1833
    %v2242 = vpack.c.b16 %v1850, %v1842
    %v2243 = vpack.c.b16 %v1851, %v1843
    %v2244 = vpack.c.b16 %v1852, %v1844
    %v2245 = vpack.c.b16 %v1853, %v1845
    %v2246 = vpack.c.b16 %v1854, %v1846
    %v2247 = vpack.c.b16 %v1855, %v1847
    %v2248 = vpack.c.b16 %v1856, %v1848
    %v2249 = vpack.c.b16 %v1857, %v1849
    %v2250 = vpack.c.b16 %v1866, %v1858
    %v2251 = vpack.c.b16 %v1867, %v1859
    %v2252 = vpack.c.b16 %v1868, %v1860
    %v2253 = vpack.c.b16 %v1869, %v1861
    %v2254 = vpack.c.b16 %v1870, %v1862
    %v2255 = vpack.c.b16 %v1871, %v1863
    %v2256 = vpack.c.b16 %v1872, %v1864
    %v2257 = vpack.c.b16 %v1873, %v1865
    %v2258 = vpack.c.b16 %v1882, %v1874
    %v2259 = vpack.c.b16 %v1883, %v1875
    %v2260 = vpack.c.b16 %v1884, %v1876
    %v2261 = vpack.c.b16 %v1885, %v1877
    %v2262 = vpack.c.b16 %v1886, %v1878
    %v2263 = vpack.c.b16 %v1887, %v1879
    %v2264 = vpack.c.b16 %v1888, %v1880
    %v2265 = vpack.c.b16 %v1889, %v1881
    %v2266 = vpack.c.b16 %v1898, %v1890
    %v2267 = vpack.c.b16 %v1899, %v1891
    %v2268 = vpack.c.b16 %v1900, %v1892
    %v2269 = vpack.c.b16 %v1901, %v1893
    %v2270 = vpack.c.b16 %v1902, %v1894
    %v2271 = vpack.c.b16 %v1903, %v1895
    %v2272 = vpack.c.b16 %v1904, %v1896
    %v2273 = vpack.c.b16 %v1905, %v1897
    %v2274 = vpack.c.b16 %v1914, %v1906
    %v2275 = vpack.c.b16 %v1915, %v1907
    %v2276 = vpack.c.b16 %v1916, %v1908
    %v2277 = vpack.c.b16 %v1917, %v1909
    %v2278 = vpack.c.b16 %v1918, %v1910
    %v2279 = vpack.c.b16 %v1919, %v1911
    %v2280 = vpack.c.b16 %v1920, %v1912
    %v2281 = vpack.c.b16 %v1921, %v1913
    %v2282 = vpack.c.b16 %v1930, %v1922
    %v2283 = vpack.c.b16 %v1931, %v1923
    %v2284 = vpack.c.b16 %v1932, %v1924
    %v2285 = vpack.c.b16 %v1933, %v1925
    %v2286 = vpack.c.b16 %v1934, %v1926
    %v2287 = vpack.c.b16 %v1935, %v1927
    %v2288 = vpack.c.b16 %v1936, %v1928
    %v2289 = vpack.c.b16 %v1937, %v1929
    %v2290 = vpack.c.b16 %v1946, %v1938
    %v2291 = vpack.c.b16 %v1947, %v1939
    %v2292 = vpack.c.b16 %v1948, %v1940
    %v2293 = vpack.c.b16 %v1949, %v1941
    %v2294 = vpack.c.b16 %v1950, %v1942
    %v2295 = vpack.c.b16 %v1951, %v1943
    %v2296 = vpack.c.b16 %v1952, %v1944
    %v2297 = vpack.c.b16 %v1953, %v1945
    %v2298 = vpack.c.b16 %v1962, %v1954
    %v2299 = vpack.c.b16 %v1963, %v1955
    %v2300 = vpack.c.b16 %v1964, %v1956
    %v2301 = vpack.c.b16 %v1965, %v1957
    %v2302 = vpack.c.b16 %v1966, %v1958
    %v2303 = vpack.c.b16 %v1967, %v1959
    %v2304 = vpack.c.b16 %v1968, %v1960
    %v2305 = vpack.c.b16 %v1969, %v1961
    %v2306 = vpack.c.b16 %v1978, %v1970
    %v2307 = vpack.c.b16 %v1979, %v1971
    %v2308 = vpack.c.b16 %v1980, %v1972
    %v2309 = vpack.c.b16 %v1981, %v1973
    %v2310 = vpack.c.b16 %v1982, %v1974
    %v2311 = vpack.c.b16 %v1983, %v1975
    %v2312 = vpack.c.b16 %v1984, %v1976
    %v2313 = vpack.c.b16 %v1985, %v1977
    %v2314 = vpack.c.b16 %v1994, %v1986
    %v2315 = vpack.c.b16 %v1995, %v1987
    %v2316 = vpack.c.b16 %v1996, %v1988
    %v2317 = vpack.c.b16 %v1997, %v1989
    %v2318 = vpack.c.b16 %v1998, %v1990
    %v2319 = vpack.c.b16 %v1999, %v1991
    %v2320 = vpack.c.b16 %v2000, %v1992
    %v2321 = vpack.c.b16 %v2001, %v1993
    %v2322 = vpack.c.b16 %v2010, %v2002
    %v2323 = vpack.c.b16 %v2011, %v2003
    %v2324 = vpack.c.b16 %v2012, %v2004
    %v2325 = vpack.c.b16 %v2013, %v2005
    %v2326 = vpack.c.b16 %v2014, %v2006
    %v2327 = vpack.c.b16 %v2015, %v2007
    %v2328 = vpack.c.b16 %v2016, %v2008
    %v2329 = vpack.c.b16 %v2017, %v2009
    %v2330 = vpack.c.b16 %v2026, %v2018
    %v2331 = vpack.c.b16 %v2027, %v2019
    %v2332 = vpack.c.b16 %v2028, %v2020
    %v2333 = vpack.c.b16 %v2029, %v2021
    %v2334 = vpack.c.b16 %v2030, %v2022
    %v2335 = vpack.c.b16 %v2031, %v2023
    %v2336 = vpack.c.b16 %v2032, %v2024
    %v2337 = vpack.c.b16 %v2033, %v2025
    %v2338 = vpack.c.b16 %v2042, %v2034
    %v2339 = vpack.c.b16 %v2043, %v2035
    %v2340 = vpack.c.b16 %v2044, %v2036
    %v2341 = vpack.c.b16 %v2045, %v2037
    %v2342 = vpack.c.b16 %v2046, %v2038
    %v2343 = vpack.c.b16 %v2047, %v2039
    %v2344 = vpack.c.b16 %v2048, %v2040
    %v2345 = vpack.c.b16 %v2049, %v2041
    %v2346 = vpack.c.b16 %v2058, %v2050
    %v2347 = vpack.c.b16 %v2059, %v2051
    %v2348 = vpack.c.b16 %v2060, %v2052
    %v2349 = vpack.c.b16 %v2061, %v2053
    %v2350 = vpack.c.b16 %v2062, %v2054
    %v2351 = vpack.c.b16 %v2063, %v2055
    %v2352 = vpack.c.b16 %v2064, %v2056
    %v2353 = vpack.c.b16 %v2065, %v2057
    %v2354 = vpack.c.b16 %v2074, %v2066
    %v2355 = vpack.c.b16 %v2075, %v2067
    %v2356 = vpack.c.b16 %v2076, %v2068
    %v2357 = vpack.c.b16 %v2077, %v2069
    %v2358 = vpack.c.b16 %v2078, %v2070
    %v2359 = vpack.c.b16 %v2079, %v2071
    %v2360 = vpack.c.b16 %v2080, %v2072
    %v2361 = vpack.c.b16 %v2081, %v2073
    %v2362 = vpack.c.b16 %v2090, %v2082
    %v2363 = vpack.c.b16 %v2091, %v2083
    %v2364 = vpack.c.b16 %v2092, %v2084
    %v2365 = vpack.c.b16 %v2093, %v2085
    %v2366 = vpack.c.b16 %v2094, %v2086
    %v2367 = vpack.c.b16 %v2095, %v2087
    %v2368 = vpack.c.b16 %v2096, %v2088
    %v2369 = vpack.c.b16 %v2097, %v2089
    %v2370 = vpack.c.b16 %v2106, %v2098
    %v2371 = vpack.c.b16 %v2107, %v2099
    %v2372 = vpack.c.b16 %v2108, %v2100
    %v2373 = vpack.c.b16 %v2109, %v2101
    %v2374 = vpack.c.b16 %v2110, %v2102
    %v2375 = vpack.c.b16 %v2111, %v2103
    %v2376 = vpack.c.b16 %v2112, %v2104
    %v2377 = vpack.c.b16 %v2113, %v2105
    %v2378 = vpack.c.b16 %v2122, %v2114
    %v2379 = vpack.c.b16 %v2123, %v2115
    %v2380 = vpack.c.b16 %v2124, %v2116
    %v2381 = vpack.c.b16 %v2125, %v2117
    %v2382 = vpack.c.b16 %v2126, %v2118
    %v2383 = vpack.c.b16 %v2127, %v2119
    %v2384 = vpack.c.b16 %v2128, %v2120
    %v2385 = vpack.c.b16 %v2129, %v2121
    %2642 = vmatprep.subr.bf16.mxu0 %v2187
    %2643 = vmatpush1.bf16.msra.mxu0 %v2186
    %2644 = vmatprep.subr.bf16.mxu0 %v2179
    %2645 = vmatpush1.bf16.msra.mxu0 %v2178
    %2646 = vmatprep.subr.bf16.mxu0 %v2171
    %2647 = vmatpush1.bf16.msra.mxu0 %v2170
    %2648 = vmatprep.subr.bf16.mxu0 %v2163
    %2649 = vmatpush1.bf16.msra.mxu0 %v2162
    %2650 = vmatprep.subr.bf16.mxu0 %v2155
    %2651 = vmatpush1.bf16.msra.mxu0 %v2154
    %2652 = vmatprep.subr.bf16.mxu0 %v2147
    %2653 = vmatpush1.bf16.msra.mxu0 %v2146
    %2654 = vmatprep.subr.bf16.mxu0 %v2139
    %2655 = vmatpush1.bf16.msra.mxu0 %v2138
    %2656 = vmatprep.subr.bf16.mxu0 %v2131
    %2657 = vmatpush1.bf16.msra.mxu0 %v2130
    %2658 = vmatprep.subr.bf16.mxu0 %v2251
    %2659 = vmatpush2.bf16.msra.mxu0 %v2250
    %2660 = vmatprep.subr.bf16.mxu0 %v2243
    %2661 = vmatpush2.bf16.msra.mxu0 %v2242
    %2662 = vmatprep.subr.bf16.mxu0 %v2235
    %2663 = vmatpush2.bf16.msra.mxu0 %v2234
    %2664 = vmatprep.subr.bf16.mxu0 %v2227
    %2665 = vmatpush2.bf16.msra.mxu0 %v2226
    %2666 = vmatprep.subr.bf16.mxu0 %v2219
    %2667 = vmatpush2.bf16.msra.mxu0 %v2218
    %2668 = vmatprep.subr.bf16.mxu0 %v2211
    %2669 = vmatpush2.bf16.msra.mxu0 %v2210
    %2670 = vmatprep.subr.bf16.mxu0 %v2203
    %2671 = vmatpush2.bf16.msra.mxu0 %v2202
    %2672 = vmatprep.subr.bf16.mxu0 %v2195
    %2673 = vmatpush2.bf16.msra.mxu0 %v2194
    %2674 = vmatprep.mubr.bf16.mxu0 %v1030
    %2675 = vmatmul.mubr.bf16.gmra.mxu0 %v1029
    %v2676 = vpop.f32.mrf.mxu0
    %v2677 = vadd.f32 %v1325, %v2676
    %v2678 = vpop.f32.mrf.mxu0
    %v2679 = vadd.f32 %v1329, %v2678
    %v2680 = vpop.f32.mrf.mxu0
    %v2681 = vadd.f32 %v1325, %v2680
    %v2682 = vpop.f32.mrf.mxu0
    %v2683 = vadd.f32 %v1329, %v2682
    %2684 = vmatprep.mubr.bf16.mxu0 %v1034
    %2685 = vmatmul.mubr.bf16.gmra.mxu0 %v1033
    %v2686 = vpop.f32.mrf.mxu0
    %v2687 = vadd.f32 %v1325, %v2686
    %v2688 = vpop.f32.mrf.mxu0
    %v2689 = vadd.f32 %v1329, %v2688
    %v2690 = vpop.f32.mrf.mxu0
    %v2691 = vadd.f32 %v1325, %v2690
    %v2692 = vpop.f32.mrf.mxu0
    %v2693 = vadd.f32 %v1329, %v2692
    %2694 = vmatprep.mubr.bf16.mxu0 %v1038
    %2695 = vmatmul.mubr.bf16.gmra.mxu0 %v1037
    %v2696 = vpop.f32.mrf.mxu0
    %v2697 = vadd.f32 %v1325, %v2696
    %v2698 = vpop.f32.mrf.mxu0
    %v2699 = vadd.f32 %v1329, %v2698
    %v2700 = vpop.f32.mrf.mxu0
    %v2701 = vadd.f32 %v1325, %v2700
    %v2702 = vpop.f32.mrf.mxu0
    %v2703 = vadd.f32 %v1329, %v2702
    %2704 = vmatprep.mubr.bf16.mxu0 %v1042
    %2705 = vmatmul.mubr.bf16.gmra.mxu0 %v1041
    %v2706 = vpop.f32.mrf.mxu0
    %v2707 = vadd.f32 %v1325, %v2706
    %v2708 = vpop.f32.mrf.mxu0
    %v2709 = vadd.f32 %v1329, %v2708
    %v2710 = vpop.f32.mrf.mxu0
    %v2711 = vadd.f32 %v1325, %v2710
    %v2712 = vpop.f32.mrf.mxu0
    %v2713 = vadd.f32 %v1329, %v2712
    %2714 = vmatprep.mubr.bf16.mxu0 %v1046
    %2715 = vmatmul.mubr.bf16.gmra.mxu0 %v1045
    %v2716 = vpop.f32.mrf.mxu0
    %v2717 = vadd.f32 %v1325, %v2716
    %v2718 = vpop.f32.mrf.mxu0
    %v2719 = vadd.f32 %v1329, %v2718
    %v2720 = vpop.f32.mrf.mxu0
    %v2721 = vadd.f32 %v1325, %v2720
    %v2722 = vpop.f32.mrf.mxu0
    %v2723 = vadd.f32 %v1329, %v2722
    %2724 = vmatprep.mubr.bf16.mxu0 %v1050
    %2725 = vmatmul.mubr.bf16.gmra.mxu0 %v1049
    %v2726 = vpop.f32.mrf.mxu0
    %v2727 = vadd.f32 %v1325, %v2726
    %v2728 = vpop.f32.mrf.mxu0
    %v2729 = vadd.f32 %v1329, %v2728
    %v2730 = vpop.f32.mrf.mxu0
    %v2731 = vadd.f32 %v1325, %v2730
    %v2732 = vpop.f32.mrf.mxu0
    %v2733 = vadd.f32 %v1329, %v2732
    %2734 = vmatprep.mubr.bf16.mxu0 %v1054
    %2735 = vmatmul.mubr.bf16.gmra.mxu0 %v1053
    %v2736 = vpop.f32.mrf.mxu0
    %v2737 = vadd.f32 %v1325, %v2736
    %v2738 = vpop.f32.mrf.mxu0
    %v2739 = vadd.f32 %v1329, %v2738
    %v2740 = vpop.f32.mrf.mxu0
    %v2741 = vadd.f32 %v1325, %v2740
    %v2742 = vpop.f32.mrf.mxu0
    %v2743 = vadd.f32 %v1329, %v2742
    %2744 = vmatprep.mubr.bf16.mxu0 %v1058
    %2745 = vmatmul.mubr.bf16.gmra.mxu0 %v1057
    %v2746 = vpop.f32.mrf.mxu0
    %v2747 = vadd.f32 %v1325, %v2746
    %v2748 = vpop.f32.mrf.mxu0
    %v2749 = vadd.f32 %v1329, %v2748
    %v2750 = vpop.f32.mrf.mxu0
    %v2751 = vadd.f32 %v1325, %v2750
    %v2752 = vpop.f32.mrf.mxu0
    %v2753 = vadd.f32 %v1329, %v2752
    %2754 = vdwg.mxu0
    %2755 = vmatprep.subr.bf16.mxu0 %v2315
    %2756 = vmatpush1.bf16.msra.mxu0 %v2314
    %2757 = vmatprep.subr.bf16.mxu0 %v2307
    %2758 = vmatpush1.bf16.msra.mxu0 %v2306
    %2759 = vmatprep.subr.bf16.mxu0 %v2299
    %2760 = vmatpush1.bf16.msra.mxu0 %v2298
    %2761 = vmatprep.subr.bf16.mxu0 %v2291
    %2762 = vmatpush1.bf16.msra.mxu0 %v2290
    %2763 = vmatprep.subr.bf16.mxu0 %v2283
    %2764 = vmatpush1.bf16.msra.mxu0 %v2282
    %2765 = vmatprep.subr.bf16.mxu0 %v2275
    %2766 = vmatpush1.bf16.msra.mxu0 %v2274
    %2767 = vmatprep.subr.bf16.mxu0 %v2267
    %2768 = vmatpush1.bf16.msra.mxu0 %v2266
    %2769 = vmatprep.subr.bf16.mxu0 %v2259
    %2770 = vmatpush1.bf16.msra.mxu0 %v2258
    %2771 = vmatprep.subr.bf16.mxu0 %v2379
    %2772 = vmatpush2.bf16.msra.mxu0 %v2378
    %2773 = vmatprep.subr.bf16.mxu0 %v2371
    %2774 = vmatpush2.bf16.msra.mxu0 %v2370
    %2775 = vmatprep.subr.bf16.mxu0 %v2363
    %2776 = vmatpush2.bf16.msra.mxu0 %v2362
    %2777 = vmatprep.subr.bf16.mxu0 %v2355
    %2778 = vmatpush2.bf16.msra.mxu0 %v2354
    %2779 = vmatprep.subr.bf16.mxu0 %v2347
    %2780 = vmatpush2.bf16.msra.mxu0 %v2346
    %2781 = vmatprep.subr.bf16.mxu0 %v2339
    %2782 = vmatpush2.bf16.msra.mxu0 %v2338
    %2783 = vmatprep.subr.bf16.mxu0 %v2331
    %2784 = vmatpush2.bf16.msra.mxu0 %v2330
    %2785 = vmatprep.subr.bf16.mxu0 %v2323
    %2786 = vmatpush2.bf16.msra.mxu0 %v2322
    %2787 = vmatprep.mubr.bf16.mxu0 %v1032
    %2788 = vmatmul.mubr.bf16.gmra.mxu0 %v1031
    %v2789 = vpop.f32.mrf.mxu0
    %v2790 = vadd.f32 %v2677, %v2789
    %v2791 = vpop.f32.mrf.mxu0
    %v2792 = vadd.f32 %v2679, %v2791
    %v2793 = vpop.f32.mrf.mxu0
    %v2794 = vadd.f32 %v2681, %v2793
    %v2795 = vpop.f32.mrf.mxu0
    %v2796 = vadd.f32 %v2683, %v2795
    %2797 = vmatprep.mubr.bf16.mxu0 %v1036
    %2798 = vmatmul.mubr.bf16.gmra.mxu0 %v1035
    %v2799 = vpop.f32.mrf.mxu0
    %v2800 = vadd.f32 %v2687, %v2799
    %v2801 = vpop.f32.mrf.mxu0
    %v2802 = vadd.f32 %v2689, %v2801
    %v2803 = vpop.f32.mrf.mxu0
    %v2804 = vadd.f32 %v2691, %v2803
    %v2805 = vpop.f32.mrf.mxu0
    %v2806 = vadd.f32 %v2693, %v2805
    %2807 = vmatprep.mubr.bf16.mxu0 %v1040
    %2808 = vmatmul.mubr.bf16.gmra.mxu0 %v1039
    %v2809 = vpop.f32.mrf.mxu0
    %v2810 = vadd.f32 %v2697, %v2809
    %v2811 = vpop.f32.mrf.mxu0
    %v2812 = vadd.f32 %v2699, %v2811
    %v2813 = vpop.f32.mrf.mxu0
    %v2814 = vadd.f32 %v2701, %v2813
    %v2815 = vpop.f32.mrf.mxu0
    %v2816 = vadd.f32 %v2703, %v2815
    %2817 = vmatprep.mubr.bf16.mxu0 %v1044
    %2818 = vmatmul.mubr.bf16.gmra.mxu0 %v1043
    %v2819 = vpop.f32.mrf.mxu0
    %v2820 = vadd.f32 %v2707, %v2819
    %v2821 = vpop.f32.mrf.mxu0
    %v2822 = vadd.f32 %v2709, %v2821
    %v2823 = vpop.f32.mrf.mxu0
    %v2824 = vadd.f32 %v2711, %v2823
    %v2825 = vpop.f32.mrf.mxu0
    %v2826 = vadd.f32 %v2713, %v2825
    %2827 = vmatprep.mubr.bf16.mxu0 %v1048
    %2828 = vmatmul.mubr.bf16.gmra.mxu0 %v1047
    %v2829 = vpop.f32.mrf.mxu0
    %v2830 = vadd.f32 %v2717, %v2829
    %v2831 = vpop.f32.mrf.mxu0
    %v2832 = vadd.f32 %v2719, %v2831
    %v2833 = vpop.f32.mrf.mxu0
    %v2834 = vadd.f32 %v2721, %v2833
    %v2835 = vpop.f32.mrf.mxu0
    %v2836 = vadd.f32 %v2723, %v2835
    %2837 = vmatprep.mubr.bf16.mxu0 %v1052
    %2838 = vmatmul.mubr.bf16.gmra.mxu0 %v1051
    %v2839 = vpop.f32.mrf.mxu0
    %v2840 = vadd.f32 %v2727, %v2839
    %v2841 = vpop.f32.mrf.mxu0
    %v2842 = vadd.f32 %v2729, %v2841
    %v2843 = vpop.f32.mrf.mxu0
    %v2844 = vadd.f32 %v2731, %v2843
    %v2845 = vpop.f32.mrf.mxu0
    %v2846 = vadd.f32 %v2733, %v2845
    %2847 = vmatprep.mubr.bf16.mxu0 %v1056
    %2848 = vmatmul.mubr.bf16.gmra.mxu0 %v1055
    %v2849 = vpop.f32.mrf.mxu0
    %v2850 = vadd.f32 %v2737, %v2849
    %v2851 = vpop.f32.mrf.mxu0
    %v2852 = vadd.f32 %v2739, %v2851
    %v2853 = vpop.f32.mrf.mxu0
    %v2854 = vadd.f32 %v2741, %v2853
    %v2855 = vpop.f32.mrf.mxu0
    %v2856 = vadd.f32 %v2743, %v2855
    %2857 = vmatprep.mubr.bf16.mxu0 %v1060
    %2858 = vmatmul.mubr.bf16.gmra.mxu0 %v1059
    %v2859 = vpop.f32.mrf.mxu0
    %v2860 = vadd.f32 %v2747, %v2859
    %v2861 = vpop.f32.mrf.mxu0
    %v2862 = vadd.f32 %v2749, %v2861
    %v2863 = vpop.f32.mrf.mxu0
    %v2864 = vadd.f32 %v2751, %v2863
    %v2865 = vpop.f32.mrf.mxu0
    %v2866 = vadd.f32 %v2753, %v2865
    %2867 = vdwg.mxu0
    %2868 = vmatprep.subr.bf16.mxu0 %v2189
    %2869 = vmatpush1.bf16.msra.mxu0 %v2188
    %2870 = vmatprep.subr.bf16.mxu0 %v2181
    %2871 = vmatpush1.bf16.msra.mxu0 %v2180
    %2872 = vmatprep.subr.bf16.mxu0 %v2173
    %2873 = vmatpush1.bf16.msra.mxu0 %v2172
    %2874 = vmatprep.subr.bf16.mxu0 %v2165
    %2875 = vmatpush1.bf16.msra.mxu0 %v2164
    %2876 = vmatprep.subr.bf16.mxu0 %v2157
    %2877 = vmatpush1.bf16.msra.mxu0 %v2156
    %2878 = vmatprep.subr.bf16.mxu0 %v2149
    %2879 = vmatpush1.bf16.msra.mxu0 %v2148
    %2880 = vmatprep.subr.bf16.mxu0 %v2141
    %2881 = vmatpush1.bf16.msra.mxu0 %v2140
    %2882 = vmatprep.subr.bf16.mxu0 %v2133
    %2883 = vmatpush1.bf16.msra.mxu0 %v2132
    %2884 = vmatprep.subr.bf16.mxu0 %v2253
    %2885 = vmatpush2.bf16.msra.mxu0 %v2252
    %2886 = vmatprep.subr.bf16.mxu0 %v2245
    %2887 = vmatpush2.bf16.msra.mxu0 %v2244
    %2888 = vmatprep.subr.bf16.mxu0 %v2237
    %2889 = vmatpush2.bf16.msra.mxu0 %v2236
    %2890 = vmatprep.subr.bf16.mxu0 %v2229
    %2891 = vmatpush2.bf16.msra.mxu0 %v2228
    %2892 = vmatprep.subr.bf16.mxu0 %v2221
    %2893 = vmatpush2.bf16.msra.mxu0 %v2220
    %2894 = vmatprep.subr.bf16.mxu0 %v2213
    %2895 = vmatpush2.bf16.msra.mxu0 %v2212
    %2896 = vmatprep.subr.bf16.mxu0 %v2205
    %2897 = vmatpush2.bf16.msra.mxu0 %v2204
    %2898 = vmatprep.subr.bf16.mxu0 %v2197
    %2899 = vmatpush2.bf16.msra.mxu0 %v2196
    %2900 = vmatprep.mubr.bf16.mxu0 %v1030
    %2901 = vmatmul.mubr.bf16.gmra.mxu0 %v1029
    %v2902 = vpop.f32.mrf.mxu0
    %v2903 = vadd.f32 %v1333, %v2902
    %v2904 = vpop.f32.mrf.mxu0
    %v2905 = vadd.f32 %v1337, %v2904
    %v2906 = vpop.f32.mrf.mxu0
    %v2907 = vadd.f32 %v1333, %v2906
    %v2908 = vpop.f32.mrf.mxu0
    %v2909 = vadd.f32 %v1337, %v2908
    %2910 = vmatprep.mubr.bf16.mxu0 %v1034
    %2911 = vmatmul.mubr.bf16.gmra.mxu0 %v1033
    %v2912 = vpop.f32.mrf.mxu0
    %v2913 = vadd.f32 %v1333, %v2912
    %v2914 = vpop.f32.mrf.mxu0
    %v2915 = vadd.f32 %v1337, %v2914
    %v2916 = vpop.f32.mrf.mxu0
    %v2917 = vadd.f32 %v1333, %v2916
    %v2918 = vpop.f32.mrf.mxu0
    %v2919 = vadd.f32 %v1337, %v2918
    %2920 = vmatprep.mubr.bf16.mxu0 %v1038
    %2921 = vmatmul.mubr.bf16.gmra.mxu0 %v1037
    %v2922 = vpop.f32.mrf.mxu0
    %v2923 = vadd.f32 %v1333, %v2922
    %v2924 = vpop.f32.mrf.mxu0
    %v2925 = vadd.f32 %v1337, %v2924
    %v2926 = vpop.f32.mrf.mxu0
    %v2927 = vadd.f32 %v1333, %v2926
    %v2928 = vpop.f32.mrf.mxu0
    %v2929 = vadd.f32 %v1337, %v2928
    %2930 = vmatprep.mubr.bf16.mxu0 %v1042
    %2931 = vmatmul.mubr.bf16.gmra.mxu0 %v1041
    %v2932 = vpop.f32.mrf.mxu0
    %v2933 = vadd.f32 %v1333, %v2932
    %v2934 = vpop.f32.mrf.mxu0
    %v2935 = vadd.f32 %v1337, %v2934
    %v2936 = vpop.f32.mrf.mxu0
    %v2937 = vadd.f32 %v1333, %v2936
    %v2938 = vpop.f32.mrf.mxu0
    %v2939 = vadd.f32 %v1337, %v2938
    %2940 = vmatprep.mubr.bf16.mxu0 %v1046
    %2941 = vmatmul.mubr.bf16.gmra.mxu0 %v1045
    %v2942 = vpop.f32.mrf.mxu0
    %v2943 = vadd.f32 %v1333, %v2942
    %v2944 = vpop.f32.mrf.mxu0
    %v2945 = vadd.f32 %v1337, %v2944
    %v2946 = vpop.f32.mrf.mxu0
    %v2947 = vadd.f32 %v1333, %v2946
    %v2948 = vpop.f32.mrf.mxu0
    %v2949 = vadd.f32 %v1337, %v2948
    %2950 = vmatprep.mubr.bf16.mxu0 %v1050
    %2951 = vmatmul.mubr.bf16.gmra.mxu0 %v1049
    %v2952 = vpop.f32.mrf.mxu0
    %v2953 = vadd.f32 %v1333, %v2952
    %v2954 = vpop.f32.mrf.mxu0
    %v2955 = vadd.f32 %v1337, %v2954
    %v2956 = vpop.f32.mrf.mxu0
    %v2957 = vadd.f32 %v1333, %v2956
    %v2958 = vpop.f32.mrf.mxu0
    %v2959 = vadd.f32 %v1337, %v2958
    %2960 = vmatprep.mubr.bf16.mxu0 %v1054
    %2961 = vmatmul.mubr.bf16.gmra.mxu0 %v1053
    %v2962 = vpop.f32.mrf.mxu0
    %v2963 = vadd.f32 %v1333, %v2962
    %v2964 = vpop.f32.mrf.mxu0
    %v2965 = vadd.f32 %v1337, %v2964
    %v2966 = vpop.f32.mrf.mxu0
    %v2967 = vadd.f32 %v1333, %v2966
    %v2968 = vpop.f32.mrf.mxu0
    %v2969 = vadd.f32 %v1337, %v2968
    %2970 = vmatprep.mubr.bf16.mxu0 %v1058
    %2971 = vmatmul.mubr.bf16.gmra.mxu0 %v1057
    %v2972 = vpop.f32.mrf.mxu0
    %v2973 = vadd.f32 %v1333, %v2972
    %v2974 = vpop.f32.mrf.mxu0
    %v2975 = vadd.f32 %v1337, %v2974
    %v2976 = vpop.f32.mrf.mxu0
    %v2977 = vadd.f32 %v1333, %v2976
    %v2978 = vpop.f32.mrf.mxu0
    %v2979 = vadd.f32 %v1337, %v2978
    %2980 = vdwg.mxu0
    %2981 = vmatprep.subr.bf16.mxu0 %v2317
    %2982 = vmatpush1.bf16.msra.mxu0 %v2316
    %2983 = vmatprep.subr.bf16.mxu0 %v2309
    %2984 = vmatpush1.bf16.msra.mxu0 %v2308
    %2985 = vmatprep.subr.bf16.mxu0 %v2301
    %2986 = vmatpush1.bf16.msra.mxu0 %v2300
    %2987 = vmatprep.subr.bf16.mxu0 %v2293
    %2988 = vmatpush1.bf16.msra.mxu0 %v2292
    %2989 = vmatprep.subr.bf16.mxu0 %v2285
    %2990 = vmatpush1.bf16.msra.mxu0 %v2284
    %2991 = vmatprep.subr.bf16.mxu0 %v2277
    %2992 = vmatpush1.bf16.msra.mxu0 %v2276
    %2993 = vmatprep.subr.bf16.mxu0 %v2269
    %2994 = vmatpush1.bf16.msra.mxu0 %v2268
    %2995 = vmatprep.subr.bf16.mxu0 %v2261
    %2996 = vmatpush1.bf16.msra.mxu0 %v2260
    %2997 = vmatprep.subr.bf16.mxu0 %v2381
    %2998 = vmatpush2.bf16.msra.mxu0 %v2380
    %2999 = vmatprep.subr.bf16.mxu0 %v2373
    %3000 = vmatpush2.bf16.msra.mxu0 %v2372
    %3001 = vmatprep.subr.bf16.mxu0 %v2365
    %3002 = vmatpush2.bf16.msra.mxu0 %v2364
    %3003 = vmatprep.subr.bf16.mxu0 %v2357
    %3004 = vmatpush2.bf16.msra.mxu0 %v2356
    %3005 = vmatprep.subr.bf16.mxu0 %v2349
    %3006 = vmatpush2.bf16.msra.mxu0 %v2348
    %3007 = vmatprep.subr.bf16.mxu0 %v2341
    %3008 = vmatpush2.bf16.msra.mxu0 %v2340
    %3009 = vmatprep.subr.bf16.mxu0 %v2333
    %3010 = vmatpush2.bf16.msra.mxu0 %v2332
    %3011 = vmatprep.subr.bf16.mxu0 %v2325
    %3012 = vmatpush2.bf16.msra.mxu0 %v2324
    %3013 = vmatprep.mubr.bf16.mxu0 %v1032
    %3014 = vmatmul.mubr.bf16.gmra.mxu0 %v1031
    %v3015 = vpop.f32.mrf.mxu0
    %v3016 = vadd.f32 %v2903, %v3015
    %v3017 = vpop.f32.mrf.mxu0
    %v3018 = vadd.f32 %v2905, %v3017
    %v3019 = vpop.f32.mrf.mxu0
    %v3020 = vadd.f32 %v2907, %v3019
    %v3021 = vpop.f32.mrf.mxu0
    %v3022 = vadd.f32 %v2909, %v3021
    %3023 = vmatprep.mubr.bf16.mxu0 %v1036
    %3024 = vmatmul.mubr.bf16.gmra.mxu0 %v1035
    %v3025 = vpop.f32.mrf.mxu0
    %v3026 = vadd.f32 %v2913, %v3025
    %v3027 = vpop.f32.mrf.mxu0
    %v3028 = vadd.f32 %v2915, %v3027
    %v3029 = vpop.f32.mrf.mxu0
    %v3030 = vadd.f32 %v2917, %v3029
    %v3031 = vpop.f32.mrf.mxu0
    %v3032 = vadd.f32 %v2919, %v3031
    %3033 = vmatprep.mubr.bf16.mxu0 %v1040
    %3034 = vmatmul.mubr.bf16.gmra.mxu0 %v1039
    %v3035 = vpop.f32.mrf.mxu0
    %v3036 = vadd.f32 %v2923, %v3035
    %v3037 = vpop.f32.mrf.mxu0
    %v3038 = vadd.f32 %v2925, %v3037
    %v3039 = vpop.f32.mrf.mxu0
    %v3040 = vadd.f32 %v2927, %v3039
    %v3041 = vpop.f32.mrf.mxu0
    %v3042 = vadd.f32 %v2929, %v3041
    %3043 = vmatprep.mubr.bf16.mxu0 %v1044
    %3044 = vmatmul.mubr.bf16.gmra.mxu0 %v1043
    %v3045 = vpop.f32.mrf.mxu0
    %v3046 = vadd.f32 %v2933, %v3045
    %v3047 = vpop.f32.mrf.mxu0
    %v3048 = vadd.f32 %v2935, %v3047
    %v3049 = vpop.f32.mrf.mxu0
    %v3050 = vadd.f32 %v2937, %v3049
    %v3051 = vpop.f32.mrf.mxu0
    %v3052 = vadd.f32 %v2939, %v3051
    %3053 = vmatprep.mubr.bf16.mxu0 %v1048
    %3054 = vmatmul.mubr.bf16.gmra.mxu0 %v1047
    %v3055 = vpop.f32.mrf.mxu0
    %v3056 = vadd.f32 %v2943, %v3055
    %v3057 = vpop.f32.mrf.mxu0
    %v3058 = vadd.f32 %v2945, %v3057
    %v3059 = vpop.f32.mrf.mxu0
    %v3060 = vadd.f32 %v2947, %v3059
    %v3061 = vpop.f32.mrf.mxu0
    %v3062 = vadd.f32 %v2949, %v3061
    %3063 = vmatprep.mubr.bf16.mxu0 %v1052
    %3064 = vmatmul.mubr.bf16.gmra.mxu0 %v1051
    %v3065 = vpop.f32.mrf.mxu0
    %v3066 = vadd.f32 %v2953, %v3065
    %v3067 = vpop.f32.mrf.mxu0
    %v3068 = vadd.f32 %v2955, %v3067
    %v3069 = vpop.f32.mrf.mxu0
    %v3070 = vadd.f32 %v2957, %v3069
    %v3071 = vpop.f32.mrf.mxu0
    %v3072 = vadd.f32 %v2959, %v3071
    %3073 = vmatprep.mubr.bf16.mxu0 %v1056
    %3074 = vmatmul.mubr.bf16.gmra.mxu0 %v1055
    %v3075 = vpop.f32.mrf.mxu0
    %v3076 = vadd.f32 %v2963, %v3075
    %v3077 = vpop.f32.mrf.mxu0
    %v3078 = vadd.f32 %v2965, %v3077
    %v3079 = vpop.f32.mrf.mxu0
    %v3080 = vadd.f32 %v2967, %v3079
    %v3081 = vpop.f32.mrf.mxu0
    %v3082 = vadd.f32 %v2969, %v3081
    %3083 = vmatprep.mubr.bf16.mxu0 %v1060
    %3084 = vmatmul.mubr.bf16.gmra.mxu0 %v1059
    %v3085 = vpop.f32.mrf.mxu0
    %v3086 = vadd.f32 %v2973, %v3085
    %v3087 = vpop.f32.mrf.mxu0
    %v3088 = vadd.f32 %v2975, %v3087
    %v3089 = vpop.f32.mrf.mxu0
    %v3090 = vadd.f32 %v2977, %v3089
    %v3091 = vpop.f32.mrf.mxu0
    %v3092 = vadd.f32 %v2979, %v3091
    %3093 = vdwg.mxu0
    %3094 = vmatprep.subr.bf16.mxu0 %v2191
    %3095 = vmatpush1.bf16.msra.mxu0 %v2190
    %3096 = vmatprep.subr.bf16.mxu0 %v2183
    %3097 = vmatpush1.bf16.msra.mxu0 %v2182
    %3098 = vmatprep.subr.bf16.mxu0 %v2175
    %3099 = vmatpush1.bf16.msra.mxu0 %v2174
    %3100 = vmatprep.subr.bf16.mxu0 %v2167
    %3101 = vmatpush1.bf16.msra.mxu0 %v2166
    %3102 = vmatprep.subr.bf16.mxu0 %v2159
    %3103 = vmatpush1.bf16.msra.mxu0 %v2158
    %3104 = vmatprep.subr.bf16.mxu0 %v2151
    %3105 = vmatpush1.bf16.msra.mxu0 %v2150
    %3106 = vmatprep.subr.bf16.mxu0 %v2143
    %3107 = vmatpush1.bf16.msra.mxu0 %v2142
    %3108 = vmatprep.subr.bf16.mxu0 %v2135
    %3109 = vmatpush1.bf16.msra.mxu0 %v2134
    %3110 = vmatprep.subr.bf16.mxu0 %v2255
    %3111 = vmatpush2.bf16.msra.mxu0 %v2254
    %3112 = vmatprep.subr.bf16.mxu0 %v2247
    %3113 = vmatpush2.bf16.msra.mxu0 %v2246
    %3114 = vmatprep.subr.bf16.mxu0 %v2239
    %3115 = vmatpush2.bf16.msra.mxu0 %v2238
    %3116 = vmatprep.subr.bf16.mxu0 %v2231
    %3117 = vmatpush2.bf16.msra.mxu0 %v2230
    %3118 = vmatprep.subr.bf16.mxu0 %v2223
    %3119 = vmatpush2.bf16.msra.mxu0 %v2222
    %3120 = vmatprep.subr.bf16.mxu0 %v2215
    %3121 = vmatpush2.bf16.msra.mxu0 %v2214
    %3122 = vmatprep.subr.bf16.mxu0 %v2207
    %3123 = vmatpush2.bf16.msra.mxu0 %v2206
    %3124 = vmatprep.subr.bf16.mxu0 %v2199
    %3125 = vmatpush2.bf16.msra.mxu0 %v2198
    %3126 = vmatprep.mubr.bf16.mxu0 %v1030
    %3127 = vmatmul.mubr.bf16.gmra.mxu0 %v1029
    %v3128 = vpop.f32.mrf.mxu0
    %v3129 = vadd.f32 %v1341, %v3128
    %v3130 = vpop.f32.mrf.mxu0
    %v3131 = vadd.f32 %v1345, %v3130
    %v3132 = vpop.f32.mrf.mxu0
    %v3133 = vadd.f32 %v1341, %v3132
    %v3134 = vpop.f32.mrf.mxu0
    %v3135 = vadd.f32 %v1345, %v3134
    %3136 = vmatprep.mubr.bf16.mxu0 %v1034
    %3137 = vmatmul.mubr.bf16.gmra.mxu0 %v1033
    %v3138 = vpop.f32.mrf.mxu0
    %v3139 = vadd.f32 %v1341, %v3138
    %v3140 = vpop.f32.mrf.mxu0
    %v3141 = vadd.f32 %v1345, %v3140
    %v3142 = vpop.f32.mrf.mxu0
    %v3143 = vadd.f32 %v1341, %v3142
    %v3144 = vpop.f32.mrf.mxu0
    %v3145 = vadd.f32 %v1345, %v3144
    %3146 = vmatprep.mubr.bf16.mxu0 %v1038
    %3147 = vmatmul.mubr.bf16.gmra.mxu0 %v1037
    %v3148 = vpop.f32.mrf.mxu0
    %v3149 = vadd.f32 %v1341, %v3148
    %v3150 = vpop.f32.mrf.mxu0
    %v3151 = vadd.f32 %v1345, %v3150
    %v3152 = vpop.f32.mrf.mxu0
    %v3153 = vadd.f32 %v1341, %v3152
    %v3154 = vpop.f32.mrf.mxu0
    %v3155 = vadd.f32 %v1345, %v3154
    %3156 = vmatprep.mubr.bf16.mxu0 %v1042
    %3157 = vmatmul.mubr.bf16.gmra.mxu0 %v1041
    %v3158 = vpop.f32.mrf.mxu0
    %v3159 = vadd.f32 %v1341, %v3158
    %v3160 = vpop.f32.mrf.mxu0
    %v3161 = vadd.f32 %v1345, %v3160
    %v3162 = vpop.f32.mrf.mxu0
    %v3163 = vadd.f32 %v1341, %v3162
    %v3164 = vpop.f32.mrf.mxu0
    %v3165 = vadd.f32 %v1345, %v3164
    %3166 = vmatprep.mubr.bf16.mxu0 %v1046
    %3167 = vmatmul.mubr.bf16.gmra.mxu0 %v1045
    %v3168 = vpop.f32.mrf.mxu0
    %v3169 = vadd.f32 %v1341, %v3168
    %v3170 = vpop.f32.mrf.mxu0
    %v3171 = vadd.f32 %v1345, %v3170
    %v3172 = vpop.f32.mrf.mxu0
    %v3173 = vadd.f32 %v1341, %v3172
    %v3174 = vpop.f32.mrf.mxu0
    %v3175 = vadd.f32 %v1345, %v3174
    %3176 = vmatprep.mubr.bf16.mxu0 %v1050
    %3177 = vmatmul.mubr.bf16.gmra.mxu0 %v1049
    %v3178 = vpop.f32.mrf.mxu0
    %v3179 = vadd.f32 %v1341, %v3178
    %v3180 = vpop.f32.mrf.mxu0
    %v3181 = vadd.f32 %v1345, %v3180
    %v3182 = vpop.f32.mrf.mxu0
    %v3183 = vadd.f32 %v1341, %v3182
    %v3184 = vpop.f32.mrf.mxu0
    %v3185 = vadd.f32 %v1345, %v3184
    %3186 = vmatprep.mubr.bf16.mxu0 %v1054
    %3187 = vmatmul.mubr.bf16.gmra.mxu0 %v1053
    %v3188 = vpop.f32.mrf.mxu0
    %v3189 = vadd.f32 %v1341, %v3188
    %v3190 = vpop.f32.mrf.mxu0
    %v3191 = vadd.f32 %v1345, %v3190
    %v3192 = vpop.f32.mrf.mxu0
    %v3193 = vadd.f32 %v1341, %v3192
    %v3194 = vpop.f32.mrf.mxu0
    %v3195 = vadd.f32 %v1345, %v3194
    %3196 = vmatprep.mubr.bf16.mxu0 %v1058
    %3197 = vmatmul.mubr.bf16.gmra.mxu0 %v1057
    %v3198 = vpop.f32.mrf.mxu0
    %v3199 = vadd.f32 %v1341, %v3198
    %v3200 = vpop.f32.mrf.mxu0
    %v3201 = vadd.f32 %v1345, %v3200
    %v3202 = vpop.f32.mrf.mxu0
    %v3203 = vadd.f32 %v1341, %v3202
    %v3204 = vpop.f32.mrf.mxu0
    %v3205 = vadd.f32 %v1345, %v3204
    %3206 = vdwg.mxu0
    %3207 = vmatprep.subr.bf16.mxu0 %v2319
    %3208 = vmatpush1.bf16.msra.mxu0 %v2318
    %3209 = vmatprep.subr.bf16.mxu0 %v2311
    %3210 = vmatpush1.bf16.msra.mxu0 %v2310
    %3211 = vmatprep.subr.bf16.mxu0 %v2303
    %3212 = vmatpush1.bf16.msra.mxu0 %v2302
    %3213 = vmatprep.subr.bf16.mxu0 %v2295
    %3214 = vmatpush1.bf16.msra.mxu0 %v2294
    %3215 = vmatprep.subr.bf16.mxu0 %v2287
    %3216 = vmatpush1.bf16.msra.mxu0 %v2286
    %3217 = vmatprep.subr.bf16.mxu0 %v2279
    %3218 = vmatpush1.bf16.msra.mxu0 %v2278
    %3219 = vmatprep.subr.bf16.mxu0 %v2271
    %3220 = vmatpush1.bf16.msra.mxu0 %v2270
    %3221 = vmatprep.subr.bf16.mxu0 %v2263
    %3222 = vmatpush1.bf16.msra.mxu0 %v2262
    %3223 = vmatprep.subr.bf16.mxu0 %v2383
    %3224 = vmatpush2.bf16.msra.mxu0 %v2382
    %3225 = vmatprep.subr.bf16.mxu0 %v2375
    %3226 = vmatpush2.bf16.msra.mxu0 %v2374
    %3227 = vmatprep.subr.bf16.mxu0 %v2367
    %3228 = vmatpush2.bf16.msra.mxu0 %v2366
    %3229 = vmatprep.subr.bf16.mxu0 %v2359
    %3230 = vmatpush2.bf16.msra.mxu0 %v2358
    %3231 = vmatprep.subr.bf16.mxu0 %v2351
    %3232 = vmatpush2.bf16.msra.mxu0 %v2350
    %3233 = vmatprep.subr.bf16.mxu0 %v2343
    %3234 = vmatpush2.bf16.msra.mxu0 %v2342
    %3235 = vmatprep.subr.bf16.mxu0 %v2335
    %3236 = vmatpush2.bf16.msra.mxu0 %v2334
    %3237 = vmatprep.subr.bf16.mxu0 %v2327
    %3238 = vmatpush2.bf16.msra.mxu0 %v2326
    %3239 = vmatprep.mubr.bf16.mxu0 %v1032
    %3240 = vmatmul.mubr.bf16.gmra.mxu0 %v1031
    %v3241 = vpop.f32.mrf.mxu0
    %v3242 = vadd.f32 %v3129, %v3241
    %v3243 = vpop.f32.mrf.mxu0
    %v3244 = vadd.f32 %v3131, %v3243
    %v3245 = vpop.f32.mrf.mxu0
    %v3246 = vadd.f32 %v3133, %v3245
    %v3247 = vpop.f32.mrf.mxu0
    %v3248 = vadd.f32 %v3135, %v3247
    %3249 = vmatprep.mubr.bf16.mxu0 %v1036
    %3250 = vmatmul.mubr.bf16.gmra.mxu0 %v1035
    %v3251 = vpop.f32.mrf.mxu0
    %v3252 = vadd.f32 %v3139, %v3251
    %v3253 = vpop.f32.mrf.mxu0
    %v3254 = vadd.f32 %v3141, %v3253
    %v3255 = vpop.f32.mrf.mxu0
    %v3256 = vadd.f32 %v3143, %v3255
    %v3257 = vpop.f32.mrf.mxu0
    %v3258 = vadd.f32 %v3145, %v3257
    %3259 = vmatprep.mubr.bf16.mxu0 %v1040
    %3260 = vmatmul.mubr.bf16.gmra.mxu0 %v1039
    %v3261 = vpop.f32.mrf.mxu0
    %v3262 = vadd.f32 %v3149, %v3261
    %v3263 = vpop.f32.mrf.mxu0
    %v3264 = vadd.f32 %v3151, %v3263
    %v3265 = vpop.f32.mrf.mxu0
    %v3266 = vadd.f32 %v3153, %v3265
    %v3267 = vpop.f32.mrf.mxu0
    %v3268 = vadd.f32 %v3155, %v3267
    %3269 = vmatprep.mubr.bf16.mxu0 %v1044
    %3270 = vmatmul.mubr.bf16.gmra.mxu0 %v1043
    %v3271 = vpop.f32.mrf.mxu0
    %v3272 = vadd.f32 %v3159, %v3271
    %v3273 = vpop.f32.mrf.mxu0
    %v3274 = vadd.f32 %v3161, %v3273
    %v3275 = vpop.f32.mrf.mxu0
    %v3276 = vadd.f32 %v3163, %v3275
    %v3277 = vpop.f32.mrf.mxu0
    %v3278 = vadd.f32 %v3165, %v3277
    %3279 = vmatprep.mubr.bf16.mxu0 %v1048
    %3280 = vmatmul.mubr.bf16.gmra.mxu0 %v1047
    %v3281 = vpop.f32.mrf.mxu0
    %v3282 = vadd.f32 %v3169, %v3281
    %v3283 = vpop.f32.mrf.mxu0
    %v3284 = vadd.f32 %v3171, %v3283
    %v3285 = vpop.f32.mrf.mxu0
    %v3286 = vadd.f32 %v3173, %v3285
    %v3287 = vpop.f32.mrf.mxu0
    %v3288 = vadd.f32 %v3175, %v3287
    %3289 = vmatprep.mubr.bf16.mxu0 %v1052
    %3290 = vmatmul.mubr.bf16.gmra.mxu0 %v1051
    %v3291 = vpop.f32.mrf.mxu0
    %v3292 = vadd.f32 %v3179, %v3291
    %v3293 = vpop.f32.mrf.mxu0
    %v3294 = vadd.f32 %v3181, %v3293
    %v3295 = vpop.f32.mrf.mxu0
    %v3296 = vadd.f32 %v3183, %v3295
    %v3297 = vpop.f32.mrf.mxu0
    %v3298 = vadd.f32 %v3185, %v3297
    %3299 = vmatprep.mubr.bf16.mxu0 %v1056
    %3300 = vmatmul.mubr.bf16.gmra.mxu0 %v1055
    %v3301 = vpop.f32.mrf.mxu0
    %v3302 = vadd.f32 %v3189, %v3301
    %v3303 = vpop.f32.mrf.mxu0
    %v3304 = vadd.f32 %v3191, %v3303
    %v3305 = vpop.f32.mrf.mxu0
    %v3306 = vadd.f32 %v3193, %v3305
    %v3307 = vpop.f32.mrf.mxu0
    %v3308 = vadd.f32 %v3195, %v3307
    %3309 = vmatprep.mubr.bf16.mxu0 %v1060
    %3310 = vmatmul.mubr.bf16.gmra.mxu0 %v1059
    %v3311 = vpop.f32.mrf.mxu0
    %v3312 = vadd.f32 %v3199, %v3311
    %v3313 = vpop.f32.mrf.mxu0
    %v3314 = vadd.f32 %v3201, %v3313
    %v3315 = vpop.f32.mrf.mxu0
    %v3316 = vadd.f32 %v3203, %v3315
    %v3317 = vpop.f32.mrf.mxu0
    %v3318 = vadd.f32 %v3205, %v3317
    %3319 = vdwg.mxu0
    %3320 = vmatprep.subr.bf16.mxu0 %v2193
    %3321 = vmatpush1.bf16.msra.mxu0 %v2192
    %3322 = vmatprep.subr.bf16.mxu0 %v2185
    %3323 = vmatpush1.bf16.msra.mxu0 %v2184
    %3324 = vmatprep.subr.bf16.mxu0 %v2177
    %3325 = vmatpush1.bf16.msra.mxu0 %v2176
    %3326 = vmatprep.subr.bf16.mxu0 %v2169
    %3327 = vmatpush1.bf16.msra.mxu0 %v2168
    %3328 = vmatprep.subr.bf16.mxu0 %v2161
    %3329 = vmatpush1.bf16.msra.mxu0 %v2160
    %3330 = vmatprep.subr.bf16.mxu0 %v2153
    %3331 = vmatpush1.bf16.msra.mxu0 %v2152
    %3332 = vmatprep.subr.bf16.mxu0 %v2145
    %3333 = vmatpush1.bf16.msra.mxu0 %v2144
    %3334 = vmatprep.subr.bf16.mxu0 %v2137
    %3335 = vmatpush1.bf16.msra.mxu0 %v2136
    %3336 = vmatprep.subr.bf16.mxu0 %v2257
    %3337 = vmatpush2.bf16.msra.mxu0 %v2256
    %3338 = vmatprep.subr.bf16.mxu0 %v2249
    %3339 = vmatpush2.bf16.msra.mxu0 %v2248
    %3340 = vmatprep.subr.bf16.mxu0 %v2241
    %3341 = vmatpush2.bf16.msra.mxu0 %v2240
    %3342 = vmatprep.subr.bf16.mxu0 %v2233
    %3343 = vmatpush2.bf16.msra.mxu0 %v2232
    %3344 = vmatprep.subr.bf16.mxu0 %v2225
    %3345 = vmatpush2.bf16.msra.mxu0 %v2224
    %3346 = vmatprep.subr.bf16.mxu0 %v2217
    %3347 = vmatpush2.bf16.msra.mxu0 %v2216
    %3348 = vmatprep.subr.bf16.mxu0 %v2209
    %3349 = vmatpush2.bf16.msra.mxu0 %v2208
    %3350 = vmatprep.subr.bf16.mxu0 %v2201
    %3351 = vmatpush2.bf16.msra.mxu0 %v2200
    %3352 = vmatprep.mubr.bf16.mxu0 %v1030
    %3353 = vmatmul.mubr.bf16.gmra.mxu0 %v1029
    %v3354 = vpop.f32.mrf.mxu0
    %v3355 = vadd.f32 %v1349, %v3354
    %v3356 = vpop.f32.mrf.mxu0
    %v3357 = vadd.f32 %v1353, %v3356
    %v3358 = vpop.f32.mrf.mxu0
    %v3359 = vadd.f32 %v1349, %v3358
    %v3360 = vpop.f32.mrf.mxu0
    %v3361 = vadd.f32 %v1353, %v3360
    %3362 = vmatprep.mubr.bf16.mxu0 %v1034
    %3363 = vmatmul.mubr.bf16.gmra.mxu0 %v1033
    %v3364 = vpop.f32.mrf.mxu0
    %v3365 = vadd.f32 %v1349, %v3364
    %v3366 = vpop.f32.mrf.mxu0
    %v3367 = vadd.f32 %v1353, %v3366
    %v3368 = vpop.f32.mrf.mxu0
    %v3369 = vadd.f32 %v1349, %v3368
    %v3370 = vpop.f32.mrf.mxu0
    %v3371 = vadd.f32 %v1353, %v3370
    %3372 = vmatprep.mubr.bf16.mxu0 %v1038
    %3373 = vmatmul.mubr.bf16.gmra.mxu0 %v1037
    %v3374 = vpop.f32.mrf.mxu0
    %v3375 = vadd.f32 %v1349, %v3374
    %v3376 = vpop.f32.mrf.mxu0
    %v3377 = vadd.f32 %v1353, %v3376
    %v3378 = vpop.f32.mrf.mxu0
    %v3379 = vadd.f32 %v1349, %v3378
    %v3380 = vpop.f32.mrf.mxu0
    %v3381 = vadd.f32 %v1353, %v3380
    %3382 = vmatprep.mubr.bf16.mxu0 %v1042
    %3383 = vmatmul.mubr.bf16.gmra.mxu0 %v1041
    %v3384 = vpop.f32.mrf.mxu0
    %v3385 = vadd.f32 %v1349, %v3384
    %v3386 = vpop.f32.mrf.mxu0
    %v3387 = vadd.f32 %v1353, %v3386
    %v3388 = vpop.f32.mrf.mxu0
    %v3389 = vadd.f32 %v1349, %v3388
    %v3390 = vpop.f32.mrf.mxu0
    %v3391 = vadd.f32 %v1353, %v3390
    %3392 = vmatprep.mubr.bf16.mxu0 %v1046
    %3393 = vmatmul.mubr.bf16.gmra.mxu0 %v1045
    %v3394 = vpop.f32.mrf.mxu0
    %v3395 = vadd.f32 %v1349, %v3394
    %v3396 = vpop.f32.mrf.mxu0
    %v3397 = vadd.f32 %v1353, %v3396
    %v3398 = vpop.f32.mrf.mxu0
    %v3399 = vadd.f32 %v1349, %v3398
    %v3400 = vpop.f32.mrf.mxu0
    %v3401 = vadd.f32 %v1353, %v3400
    %3402 = vmatprep.mubr.bf16.mxu0 %v1050
    %3403 = vmatmul.mubr.bf16.gmra.mxu0 %v1049
    %v3404 = vpop.f32.mrf.mxu0
    %v3405 = vadd.f32 %v1349, %v3404
    %v3406 = vpop.f32.mrf.mxu0
    %v3407 = vadd.f32 %v1353, %v3406
    %v3408 = vpop.f32.mrf.mxu0
    %v3409 = vadd.f32 %v1349, %v3408
    %v3410 = vpop.f32.mrf.mxu0
    %v3411 = vadd.f32 %v1353, %v3410
    %3412 = vmatprep.mubr.bf16.mxu0 %v1054
    %3413 = vmatmul.mubr.bf16.gmra.mxu0 %v1053
    %v3414 = vpop.f32.mrf.mxu0
    %v3415 = vadd.f32 %v1349, %v3414
    %v3416 = vpop.f32.mrf.mxu0
    %v3417 = vadd.f32 %v1353, %v3416
    %v3418 = vpop.f32.mrf.mxu0
    %v3419 = vadd.f32 %v1349, %v3418
    %v3420 = vpop.f32.mrf.mxu0
    %v3421 = vadd.f32 %v1353, %v3420
    %3422 = vmatprep.mubr.bf16.mxu0 %v1058
    %3423 = vmatmul.mubr.bf16.gmra.mxu0 %v1057
    %v3424 = vpop.f32.mrf.mxu0
    %v3425 = vadd.f32 %v1349, %v3424
    %v3426 = vpop.f32.mrf.mxu0
    %v3427 = vadd.f32 %v1353, %v3426
    %v3428 = vpop.f32.mrf.mxu0
    %v3429 = vadd.f32 %v1349, %v3428
    %v3430 = vpop.f32.mrf.mxu0
    %v3431 = vadd.f32 %v1353, %v3430
    %3432 = vdwg.mxu0
    %3433 = vmatprep.subr.bf16.mxu0 %v2321
    %3434 = vmatpush1.bf16.msra.mxu0 %v2320
    %3435 = vmatprep.subr.bf16.mxu0 %v2313
    %3436 = vmatpush1.bf16.msra.mxu0 %v2312
    %3437 = vmatprep.subr.bf16.mxu0 %v2305
    %3438 = vmatpush1.bf16.msra.mxu0 %v2304
    %3439 = vmatprep.subr.bf16.mxu0 %v2297
    %3440 = vmatpush1.bf16.msra.mxu0 %v2296
    %3441 = vmatprep.subr.bf16.mxu0 %v2289
    %3442 = vmatpush1.bf16.msra.mxu0 %v2288
    %3443 = vmatprep.subr.bf16.mxu0 %v2281
    %3444 = vmatpush1.bf16.msra.mxu0 %v2280
    %3445 = vmatprep.subr.bf16.mxu0 %v2273
    %3446 = vmatpush1.bf16.msra.mxu0 %v2272
    %3447 = vmatprep.subr.bf16.mxu0 %v2265
    %3448 = vmatpush1.bf16.msra.mxu0 %v2264
    %3449 = vmatprep.subr.bf16.mxu0 %v2385
    %3450 = vmatpush2.bf16.msra.mxu0 %v2384
    %3451 = vmatprep.subr.bf16.mxu0 %v2377
    %3452 = vmatpush2.bf16.msra.mxu0 %v2376
    %3453 = vmatprep.subr.bf16.mxu0 %v2369
    %3454 = vmatpush2.bf16.msra.mxu0 %v2368
    %3455 = vmatprep.subr.bf16.mxu0 %v2361
    %3456 = vmatpush2.bf16.msra.mxu0 %v2360
    %3457 = vmatprep.subr.bf16.mxu0 %v2353
    %3458 = vmatpush2.bf16.msra.mxu0 %v2352
    %3459 = vmatprep.subr.bf16.mxu0 %v2345
    %3460 = vmatpush2.bf16.msra.mxu0 %v2344
    %3461 = vmatprep.subr.bf16.mxu0 %v2337
    %3462 = vmatpush2.bf16.msra.mxu0 %v2336
    %3463 = vmatprep.subr.bf16.mxu0 %v2329
    %3464 = vmatpush2.bf16.msra.mxu0 %v2328
    %3465 = vmatprep.mubr.bf16.mxu0 %v1032
    %3466 = vmatmul.mubr.bf16.gmra.mxu0 %v1031
    %v3467 = vpop.f32.mrf.mxu0
    %v3468 = vadd.f32 %v3355, %v3467
    %v3469 = vpop.f32.mrf.mxu0
    %v3470 = vadd.f32 %v3357, %v3469
    %v3471 = vpop.f32.mrf.mxu0
    %v3472 = vadd.f32 %v3359, %v3471
    %v3473 = vpop.f32.mrf.mxu0
    %v3474 = vadd.f32 %v3361, %v3473
    %3475 = vmatprep.mubr.bf16.mxu0 %v1036
    %3476 = vmatmul.mubr.bf16.gmra.mxu0 %v1035
    %v3477 = vpop.f32.mrf.mxu0
    %v3478 = vadd.f32 %v3365, %v3477
    %v3479 = vpop.f32.mrf.mxu0
    %v3480 = vadd.f32 %v3367, %v3479
    %v3481 = vpop.f32.mrf.mxu0
    %v3482 = vadd.f32 %v3369, %v3481
    %v3483 = vpop.f32.mrf.mxu0
    %v3484 = vadd.f32 %v3371, %v3483
    %3485 = vmatprep.mubr.bf16.mxu0 %v1040
    %3486 = vmatmul.mubr.bf16.gmra.mxu0 %v1039
    %v3487 = vpop.f32.mrf.mxu0
    %v3488 = vadd.f32 %v3375, %v3487
    %v3489 = vpop.f32.mrf.mxu0
    %v3490 = vadd.f32 %v3377, %v3489
    %v3491 = vpop.f32.mrf.mxu0
    %v3492 = vadd.f32 %v3379, %v3491
    %v3493 = vpop.f32.mrf.mxu0
    %v3494 = vadd.f32 %v3381, %v3493
    %3495 = vmatprep.mubr.bf16.mxu0 %v1044
    %3496 = vmatmul.mubr.bf16.gmra.mxu0 %v1043
    %v3497 = vpop.f32.mrf.mxu0
    %v3498 = vadd.f32 %v3385, %v3497
    %v3499 = vpop.f32.mrf.mxu0
    %v3500 = vadd.f32 %v3387, %v3499
    %v3501 = vpop.f32.mrf.mxu0
    %v3502 = vadd.f32 %v3389, %v3501
    %v3503 = vpop.f32.mrf.mxu0
    %v3504 = vadd.f32 %v3391, %v3503
    %3505 = vmatprep.mubr.bf16.mxu0 %v1048
    %3506 = vmatmul.mubr.bf16.gmra.mxu0 %v1047
    %v3507 = vpop.f32.mrf.mxu0
    %v3508 = vadd.f32 %v3395, %v3507
    %v3509 = vpop.f32.mrf.mxu0
    %v3510 = vadd.f32 %v3397, %v3509
    %v3511 = vpop.f32.mrf.mxu0
    %v3512 = vadd.f32 %v3399, %v3511
    %v3513 = vpop.f32.mrf.mxu0
    %v3514 = vadd.f32 %v3401, %v3513
    %3515 = vmatprep.mubr.bf16.mxu0 %v1052
    %3516 = vmatmul.mubr.bf16.gmra.mxu0 %v1051
    %v3517 = vpop.f32.mrf.mxu0
    %v3518 = vadd.f32 %v3405, %v3517
    %v3519 = vpop.f32.mrf.mxu0
    %v3520 = vadd.f32 %v3407, %v3519
    %v3521 = vpop.f32.mrf.mxu0
    %v3522 = vadd.f32 %v3409, %v3521
    %v3523 = vpop.f32.mrf.mxu0
    %v3524 = vadd.f32 %v3411, %v3523
    %3525 = vmatprep.mubr.bf16.mxu0 %v1056
    %3526 = vmatmul.mubr.bf16.gmra.mxu0 %v1055
    %v3527 = vpop.f32.mrf.mxu0
    %v3528 = vadd.f32 %v3415, %v3527
    %v3529 = vpop.f32.mrf.mxu0
    %v3530 = vadd.f32 %v3417, %v3529
    %v3531 = vpop.f32.mrf.mxu0
    %v3532 = vadd.f32 %v3419, %v3531
    %v3533 = vpop.f32.mrf.mxu0
    %v3534 = vadd.f32 %v3421, %v3533
    %3535 = vmatprep.mubr.bf16.mxu0 %v1060
    %3536 = vmatmul.mubr.bf16.gmra.mxu0 %v1059
    %v3537 = vpop.f32.mrf.mxu0
    %v3538 = vadd.f32 %v3425, %v3537
    %v3539 = vpop.f32.mrf.mxu0
    %v3540 = vadd.f32 %v3427, %v3539
    %v3541 = vpop.f32.mrf.mxu0
    %v3542 = vadd.f32 %v3429, %v3541
    %v3543 = vpop.f32.mrf.mxu0
    %v3544 = vadd.f32 %v3431, %v3543
    %3545 = vdwg.mxu0
    %v3546 = vmax.f32 %v2790, 0.0
    %v3547 = vmax.f32 %v2792, 0.0
    %v3548 = vmax.f32 %v3016, 0.0
    %v3549 = vmax.f32 %v3018, 0.0
    %v3550 = vmax.f32 %v3242, 0.0
    %v3551 = vmax.f32 %v3244, 0.0
    %v3552 = vmax.f32 %v3468, 0.0
    %v3553 = vmax.f32 %v3470, 0.0
    %v3554 = vmax.f32 %v2794, 0.0
    %v3555 = vmax.f32 %v2796, 0.0
    %v3556 = vmax.f32 %v3020, 0.0
    %v3557 = vmax.f32 %v3022, 0.0
    %v3558 = vmax.f32 %v3246, 0.0
    %v3559 = vmax.f32 %v3248, 0.0
    %v3560 = vmax.f32 %v3472, 0.0
    %v3561 = vmax.f32 %v3474, 0.0
    %v3562 = vmax.f32 %v2800, 0.0
    %v3563 = vmax.f32 %v2802, 0.0
    %v3564 = vmax.f32 %v3026, 0.0
    %v3565 = vmax.f32 %v3028, 0.0
    %v3566 = vmax.f32 %v3252, 0.0
    %v3567 = vmax.f32 %v3254, 0.0
    %v3568 = vmax.f32 %v3478, 0.0
    %v3569 = vmax.f32 %v3480, 0.0
    %v3570 = vmax.f32 %v2804, 0.0
    %v3571 = vmax.f32 %v2806, 0.0
    %v3572 = vmax.f32 %v3030, 0.0
    %v3573 = vmax.f32 %v3032, 0.0
    %v3574 = vmax.f32 %v3256, 0.0
    %v3575 = vmax.f32 %v3258, 0.0
    %v3576 = vmax.f32 %v3482, 0.0
    %v3577 = vmax.f32 %v3484, 0.0
    %v3578 = vmax.f32 %v2810, 0.0
    %v3579 = vmax.f32 %v2812, 0.0
    %v3580 = vmax.f32 %v3036, 0.0
    %v3581 = vmax.f32 %v3038, 0.0
    %v3582 = vmax.f32 %v3262, 0.0
    %v3583 = vmax.f32 %v3264, 0.0
    %v3584 = vmax.f32 %v3488, 0.0
    %v3585 = vmax.f32 %v3490, 0.0
    %v3586 = vmax.f32 %v2814, 0.0
    %v3587 = vmax.f32 %v2816, 0.0
    %v3588 = vmax.f32 %v3040, 0.0
    %v3589 = vmax.f32 %v3042, 0.0
    %v3590 = vmax.f32 %v3266, 0.0
    %v3591 = vmax.f32 %v3268, 0.0
    %v3592 = vmax.f32 %v3492, 0.0
    %v3593 = vmax.f32 %v3494, 0.0
    %v3594 = vmax.f32 %v2820, 0.0
    %v3595 = vmax.f32 %v2822, 0.0
    %v3596 = vmax.f32 %v3046, 0.0
    %v3597 = vmax.f32 %v3048, 0.0
    %v3598 = vmax.f32 %v3272, 0.0
    %v3599 = vmax.f32 %v3274, 0.0
    %v3600 = vmax.f32 %v3498, 0.0
    %v3601 = vmax.f32 %v3500, 0.0
    %v3602 = vmax.f32 %v2824, 0.0
    %v3603 = vmax.f32 %v2826, 0.0
    %v3604 = vmax.f32 %v3050, 0.0
    %v3605 = vmax.f32 %v3052, 0.0
    %v3606 = vmax.f32 %v3276, 0.0
    %v3607 = vmax.f32 %v3278, 0.0
    %v3608 = vmax.f32 %v3502, 0.0
    %v3609 = vmax.f32 %v3504, 0.0
    %v3610 = vmax.f32 %v2830, 0.0
    %v3611 = vmax.f32 %v2832, 0.0
    %v3612 = vmax.f32 %v3056, 0.0
    %v3613 = vmax.f32 %v3058, 0.0
    %v3614 = vmax.f32 %v3282, 0.0
    %v3615 = vmax.f32 %v3284, 0.0
    %v3616 = vmax.f32 %v3508, 0.0
    %v3617 = vmax.f32 %v3510, 0.0
    %v3618 = vmax.f32 %v2834, 0.0
    %v3619 = vmax.f32 %v2836, 0.0
    %v3620 = vmax.f32 %v3060, 0.0
    %v3621 = vmax.f32 %v3062, 0.0
    %v3622 = vmax.f32 %v3286, 0.0
    %v3623 = vmax.f32 %v3288, 0.0
    %v3624 = vmax.f32 %v3512, 0.0
    %v3625 = vmax.f32 %v3514, 0.0
    %v3626 = vmax.f32 %v2840, 0.0
    %v3627 = vmax.f32 %v2842, 0.0
    %v3628 = vmax.f32 %v3066, 0.0
    %v3629 = vmax.f32 %v3068, 0.0
    %v3630 = vmax.f32 %v3292, 0.0
    %v3631 = vmax.f32 %v3294, 0.0
    %v3632 = vmax.f32 %v3518, 0.0
    %v3633 = vmax.f32 %v3520, 0.0
    %v3634 = vmax.f32 %v2844, 0.0
    %v3635 = vmax.f32 %v2846, 0.0
    %v3636 = vmax.f32 %v3070, 0.0
    %v3637 = vmax.f32 %v3072, 0.0
    %v3638 = vmax.f32 %v3296, 0.0
    %v3639 = vmax.f32 %v3298, 0.0
    %v3640 = vmax.f32 %v3522, 0.0
    %v3641 = vmax.f32 %v3524, 0.0
    %v3642 = vmax.f32 %v2850, 0.0
    %v3643 = vmax.f32 %v2852, 0.0
    %v3644 = vmax.f32 %v3076, 0.0
    %v3645 = vmax.f32 %v3078, 0.0
    %v3646 = vmax.f32 %v3302, 0.0
    %v3647 = vmax.f32 %v3304, 0.0
    %v3648 = vmax.f32 %v3528, 0.0
    %v3649 = vmax.f32 %v3530, 0.0
    %v3650 = vmax.f32 %v2854, 0.0
    %v3651 = vmax.f32 %v2856, 0.0
    %v3652 = vmax.f32 %v3080, 0.0
    %v3653 = vmax.f32 %v3082, 0.0
    %v3654 = vmax.f32 %v3306, 0.0
    %v3655 = vmax.f32 %v3308, 0.0
    %v3656 = vmax.f32 %v3532, 0.0
    %v3657 = vmax.f32 %v3534, 0.0
    %v3658 = vmax.f32 %v2860, 0.0
    %v3659 = vmax.f32 %v2862, 0.0
    %v3660 = vmax.f32 %v3086, 0.0
    %v3661 = vmax.f32 %v3088, 0.0
    %v3662 = vmax.f32 %v3312, 0.0
    %v3663 = vmax.f32 %v3314, 0.0
    %v3664 = vmax.f32 %v3538, 0.0
    %v3665 = vmax.f32 %v3540, 0.0
    %v3666 = vmax.f32 %v2864, 0.0
    %v3667 = vmax.f32 %v2866, 0.0
    %v3668 = vmax.f32 %v3090, 0.0
    %v3669 = vmax.f32 %v3092, 0.0
    %v3670 = vmax.f32 %v3316, 0.0
    %v3671 = vmax.f32 %v3318, 0.0
    %v3672 = vmax.f32 %v3542, 0.0
    %v3673 = vmax.f32 %v3544, 0.0
    %v3674 = vpack.c.bf16 %v3554, %v3546
    %v3675 = vpack.c.bf16 %v3555, %v3547
    %v3676 = vpack.c.bf16 %v3556, %v3548
    %v3677 = vpack.c.bf16 %v3557, %v3549
    %v3678 = vpack.c.bf16 %v3558, %v3550
    %v3679 = vpack.c.bf16 %v3559, %v3551
    %v3680 = vpack.c.bf16 %v3560, %v3552
    %v3681 = vpack.c.bf16 %v3561, %v3553
    %v3682 = vpack.c.bf16 %v3570, %v3562
    %v3683 = vpack.c.bf16 %v3571, %v3563
    %v3684 = vpack.c.bf16 %v3572, %v3564
    %v3685 = vpack.c.bf16 %v3573, %v3565
    %v3686 = vpack.c.bf16 %v3574, %v3566
    %v3687 = vpack.c.bf16 %v3575, %v3567
    %v3688 = vpack.c.bf16 %v3576, %v3568
    %v3689 = vpack.c.bf16 %v3577, %v3569
    %v3690 = vpack.c.bf16 %v3586, %v3578
    %v3691 = vpack.c.bf16 %v3587, %v3579
    %v3692 = vpack.c.bf16 %v3588, %v3580
    %v3693 = vpack.c.bf16 %v3589, %v3581
    %v3694 = vpack.c.bf16 %v3590, %v3582
    %v3695 = vpack.c.bf16 %v3591, %v3583
    %v3696 = vpack.c.bf16 %v3592, %v3584
    %v3697 = vpack.c.bf16 %v3593, %v3585
    %v3698 = vpack.c.bf16 %v3602, %v3594
    %v3699 = vpack.c.bf16 %v3603, %v3595
    %v3700 = vpack.c.bf16 %v3604, %v3596
    %v3701 = vpack.c.bf16 %v3605, %v3597
    %v3702 = vpack.c.bf16 %v3606, %v3598
    %v3703 = vpack.c.bf16 %v3607, %v3599
    %v3704 = vpack.c.bf16 %v3608, %v3600
    %v3705 = vpack.c.bf16 %v3609, %v3601
    %v3706 = vpack.c.bf16 %v3618, %v3610
    %v3707 = vpack.c.bf16 %v3619, %v3611
    %v3708 = vpack.c.bf16 %v3620, %v3612
    %v3709 = vpack.c.bf16 %v3621, %v3613
    %v3710 = vpack.c.bf16 %v3622, %v3614
    %v3711 = vpack.c.bf16 %v3623, %v3615
    %v3712 = vpack.c.bf16 %v3624, %v3616
    %v3713 = vpack.c.bf16 %v3625, %v3617
    %v3714 = vpack.c.bf16 %v3634, %v3626
    %v3715 = vpack.c.bf16 %v3635, %v3627
    %v3716 = vpack.c.bf16 %v3636, %v3628
    %v3717 = vpack.c.bf16 %v3637, %v3629
    %v3718 = vpack.c.bf16 %v3638, %v3630
    %v3719 = vpack.c.bf16 %v3639, %v3631
    %v3720 = vpack.c.bf16 %v3640, %v3632
    %v3721 = vpack.c.bf16 %v3641, %v3633
    %v3722 = vpack.c.bf16 %v3650, %v3642
    %v3723 = vpack.c.bf16 %v3651, %v3643
    %v3724 = vpack.c.bf16 %v3652, %v3644
    %v3725 = vpack.c.bf16 %v3653, %v3645
    %v3726 = vpack.c.bf16 %v3654, %v3646
    %v3727 = vpack.c.bf16 %v3655, %v3647
    %v3728 = vpack.c.bf16 %v3656, %v3648
    %v3729 = vpack.c.bf16 %v3657, %v3649
    %v3730 = vpack.c.bf16 %v3666, %v3658
    %v3731 = vpack.c.bf16 %v3667, %v3659
    %v3732 = vpack.c.bf16 %v3668, %v3660
    %v3733 = vpack.c.bf16 %v3669, %v3661
    %v3734 = vpack.c.bf16 %v3670, %v3662
    %v3735 = vpack.c.bf16 %v3671, %v3663
    %v3736 = vpack.c.bf16 %v3672, %v3664
    %v3737 = vpack.c.bf16 %v3673, %v3665
    %s3738 = scalar_lea.vmem [#allocation10], 3
    %v3739 = vld [vmem:[%s3738] ss:$8 sm:$0xf]
    %v3740 = vld [vmem:[#allocation7] sm:$0xff]
    %v3741 = vld [vmem:[#allocation7 + $0x8] sm:$0xff]
    %v3742 = vld [vmem:[#allocation7 + $0x10] sm:$0xff]
    %v3743 = vld [vmem:[#allocation7 + $0x18] sm:$0xff]
    %v3744 = vld [vmem:[#allocation7 + $0x20] sm:$0xff]
    %v3745 = vld [vmem:[#allocation7 + $0x28] sm:$0xff]
    %v3746 = vld [vmem:[#allocation7 + $0x30] sm:$0xff]
    %v3747 = vld [vmem:[#allocation7 + $0x38] sm:$0xff]
    %v3748 = vld [vmem:[#allocation7 + $0x40] sm:$0xff]
    %v3749 = vld [vmem:[#allocation7 + $0x48] sm:$0xff]
    %v3750 = vld [vmem:[#allocation7 + $0x50] sm:$0xff]
    %v3751 = vld [vmem:[#allocation7 + $0x58] sm:$0xff]
    %v3752 = vld [vmem:[#allocation7 + $0x60] sm:$0xff]
    %v3753 = vld [vmem:[#allocation7 + $0x68] sm:$0xff]
    %v3754 = vld [vmem:[#allocation7 + $0x70] sm:$0xff]
    %v3755 = vld [vmem:[#allocation7 + $0x78] sm:$0xff]
    %v3756 = vld [vmem:[#allocation7 + $0x80] sm:$0xff]
    %v3757 = vld [vmem:[#allocation7 + $0x88] sm:$0xff]
    %v3758 = vld [vmem:[#allocation7 + $0x90] sm:$0xff]
    %v3759 = vld [vmem:[#allocation7 + $0x98] sm:$0xff]
    %v3760 = vld [vmem:[#allocation7 + $0xa0] sm:$0xff]
    %v3761 = vld [vmem:[#allocation7 + $0xa8] sm:$0xff]
    %v3762 = vld [vmem:[#allocation7 + $0xb0] sm:$0xff]
    %v3763 = vld [vmem:[#allocation7 + $0xb8] sm:$0xff]
    %v3764 = vld [vmem:[#allocation7 + $0xc0] sm:$0xff]
    %v3765 = vld [vmem:[#allocation7 + $0xc8] sm:$0xff]
    %v3766 = vld [vmem:[#allocation7 + $0xd0] sm:$0xff]
    %v3767 = vld [vmem:[#allocation7 + $0xd8] sm:$0xff]
    %v3768 = vld [vmem:[#allocation7 + $0xe0] sm:$0xff]
    %v3769 = vld [vmem:[#allocation7 + $0xe8] sm:$0xff]
    %v3770 = vld [vmem:[#allocation7 + $0xf0] sm:$0xff]
    %v3771 = vld [vmem:[#allocation7 + $0xf8] sm:$0xff]
    %v3772 = vld [vmem:[#allocation7 + $0x100] sm:$0xff]
    %v3773 = vld [vmem:[#allocation7 + $0x108] sm:$0xff]
    %v3774 = vld [vmem:[#allocation7 + $0x110] sm:$0xff]
    %v3775 = vld [vmem:[#allocation7 + $0x118] sm:$0xff]
    %v3776 = vld [vmem:[#allocation7 + $0x120] sm:$0xff]
    %v3777 = vld [vmem:[#allocation7 + $0x128] sm:$0xff]
    %v3778 = vld [vmem:[#allocation7 + $0x130] sm:$0xff]
    %v3779 = vld [vmem:[#allocation7 + $0x138] sm:$0xff]
    %v3780 = vld [vmem:[#allocation7 + $0x140] sm:$0xff]
    %v3781 = vld [vmem:[#allocation7 + $0x148] sm:$0xff]
    %v3782 = vld [vmem:[#allocation7 + $0x150] sm:$0xff]
    %v3783 = vld [vmem:[#allocation7 + $0x158] sm:$0xff]
    %v3784 = vld [vmem:[#allocation7 + $0x160] sm:$0xff]
    %v3785 = vld [vmem:[#allocation7 + $0x168] sm:$0xff]
    %v3786 = vld [vmem:[#allocation7 + $0x170] sm:$0xff]
    %v3787 = vld [vmem:[#allocation7 + $0x178] sm:$0xff]
    %v3788 = vld [vmem:[#allocation7 + $0x180] sm:$0xff]
    %v3789 = vld [vmem:[#allocation7 + $0x188] sm:$0xff]
    %v3790 = vld [vmem:[#allocation7 + $0x190] sm:$0xff]
    %v3791 = vld [vmem:[#allocation7 + $0x198] sm:$0xff]
    %v3792 = vld [vmem:[#allocation7 + $0x1a0] sm:$0xff]
    %v3793 = vld [vmem:[#allocation7 + $0x1a8] sm:$0xff]
    %v3794 = vld [vmem:[#allocation7 + $0x1b0] sm:$0xff]
    %v3795 = vld [vmem:[#allocation7 + $0x1b8] sm:$0xff]
    %v3796 = vld [vmem:[#allocation7 + $0x1c0] sm:$0xff]
    %v3797 = vld [vmem:[#allocation7 + $0x1c8] sm:$0xff]
    %v3798 = vld [vmem:[#allocation7 + $0x1d0] sm:$0xff]
    %v3799 = vld [vmem:[#allocation7 + $0x1d8] sm:$0xff]
    %v3800 = vld [vmem:[#allocation7 + $0x1e0] sm:$0xff]
    %v3801 = vld [vmem:[#allocation7 + $0x1e8] sm:$0xff]
    %v3802 = vld [vmem:[#allocation7 + $0x1f0] sm:$0xff]
    %v3803 = vld [vmem:[#allocation7 + $0x1f8] sm:$0xff]
    %v3804 = vld [vmem:[#allocation7 + $0x200] sm:$0xff]
    %v3805 = vld [vmem:[#allocation7 + $0x208] sm:$0xff]
    %v3806 = vld [vmem:[#allocation7 + $0x210] sm:$0xff]
    %v3807 = vld [vmem:[#allocation7 + $0x218] sm:$0xff]
    %v3808 = vld [vmem:[#allocation7 + $0x220] sm:$0xff]
    %v3809 = vld [vmem:[#allocation7 + $0x228] sm:$0xff]
    %v3810 = vld [vmem:[#allocation7 + $0x230] sm:$0xff]
    %v3811 = vld [vmem:[#allocation7 + $0x238] sm:$0xff]
    %v3812 = vld [vmem:[#allocation7 + $0x240] sm:$0xff]
    %v3813 = vld [vmem:[#allocation7 + $0x248] sm:$0xff]
    %v3814 = vld [vmem:[#allocation7 + $0x250] sm:$0xff]
    %v3815 = vld [vmem:[#allocation7 + $0x258] sm:$0xff]
    %v3816 = vld [vmem:[#allocation7 + $0x260] sm:$0xff]
    %v3817 = vld [vmem:[#allocation7 + $0x268] sm:$0xff]
    %v3818 = vld [vmem:[#allocation7 + $0x270] sm:$0xff]
    %v3819 = vld [vmem:[#allocation7 + $0x278] sm:$0xff]
    %v3820 = vld [vmem:[#allocation7 + $0x280] sm:$0xff]
    %v3821 = vld [vmem:[#allocation7 + $0x288] sm:$0xff]
    %v3822 = vld [vmem:[#allocation7 + $0x290] sm:$0xff]
    %v3823 = vld [vmem:[#allocation7 + $0x298] sm:$0xff]
    %v3824 = vld [vmem:[#allocation7 + $0x2a0] sm:$0xff]
    %v3825 = vld [vmem:[#allocation7 + $0x2a8] sm:$0xff]
    %v3826 = vld [vmem:[#allocation7 + $0x2b0] sm:$0xff]
    %v3827 = vld [vmem:[#allocation7 + $0x2b8] sm:$0xff]
    %v3828 = vld [vmem:[#allocation7 + $0x2c0] sm:$0xff]
    %v3829 = vld [vmem:[#allocation7 + $0x2c8] sm:$0xff]
    %v3830 = vld [vmem:[#allocation7 + $0x2d0] sm:$0xff]
    %v3831 = vld [vmem:[#allocation7 + $0x2d8] sm:$0xff]
    %v3832 = vld [vmem:[#allocation7 + $0x2e0] sm:$0xff]
    %v3833 = vld [vmem:[#allocation7 + $0x2e8] sm:$0xff]
    %v3834 = vld [vmem:[#allocation7 + $0x2f0] sm:$0xff]
    %v3835 = vld [vmem:[#allocation7 + $0x2f8] sm:$0xff]
    %v3836 = vld [vmem:[#allocation7 + $0x300] sm:$0xff]
    %v3837 = vld [vmem:[#allocation7 + $0x308] sm:$0xff]
    %v3838 = vld [vmem:[#allocation7 + $0x310] sm:$0xff]
    %v3839 = vld [vmem:[#allocation7 + $0x318] sm:$0xff]
    %v3840 = vld [vmem:[#allocation7 + $0x320] sm:$0xff]
    %v3841 = vld [vmem:[#allocation7 + $0x328] sm:$0xff]
    %v3842 = vld [vmem:[#allocation7 + $0x330] sm:$0xff]
    %v3843 = vld [vmem:[#allocation7 + $0x338] sm:$0xff]
    %v3844 = vld [vmem:[#allocation7 + $0x340] sm:$0xff]
    %v3845 = vld [vmem:[#allocation7 + $0x348] sm:$0xff]
    %v3846 = vld [vmem:[#allocation7 + $0x350] sm:$0xff]
    %v3847 = vld [vmem:[#allocation7 + $0x358] sm:$0xff]
    %v3848 = vld [vmem:[#allocation7 + $0x360] sm:$0xff]
    %v3849 = vld [vmem:[#allocation7 + $0x368] sm:$0xff]
    %v3850 = vld [vmem:[#allocation7 + $0x370] sm:$0xff]
    %v3851 = vld [vmem:[#allocation7 + $0x378] sm:$0xff]
    %v3852 = vld [vmem:[#allocation7 + $0x380] sm:$0xff]
    %v3853 = vld [vmem:[#allocation7 + $0x388] sm:$0xff]
    %v3854 = vld [vmem:[#allocation7 + $0x390] sm:$0xff]
    %v3855 = vld [vmem:[#allocation7 + $0x398] sm:$0xff]
    %v3856 = vld [vmem:[#allocation7 + $0x3a0] sm:$0xff]
    %v3857 = vld [vmem:[#allocation7 + $0x3a8] sm:$0xff]
    %v3858 = vld [vmem:[#allocation7 + $0x3b0] sm:$0xff]
    %v3859 = vld [vmem:[#allocation7 + $0x3b8] sm:$0xff]
    %v3860 = vld [vmem:[#allocation7 + $0x3c0] sm:$0xff]
    %v3861 = vld [vmem:[#allocation7 + $0x3c8] sm:$0xff]
    %v3862 = vld [vmem:[#allocation7 + $0x3d0] sm:$0xff]
    %v3863 = vld [vmem:[#allocation7 + $0x3d8] sm:$0xff]
    %v3864 = vld [vmem:[#allocation7 + $0x3e0] sm:$0xff]
    %v3865 = vld [vmem:[#allocation7 + $0x3e8] sm:$0xff]
    %v3866 = vld [vmem:[#allocation7 + $0x3f0] sm:$0xff]
    %v3867 = vld [vmem:[#allocation7 + $0x3f8] sm:$0xff]
    %v3868 = vld [vmem:[#allocation7 + $0x400] sm:$0xff]
    %v3869 = vld [vmem:[#allocation7 + $0x408] sm:$0xff]
    %v3870 = vld [vmem:[#allocation7 + $0x410] sm:$0xff]
    %v3871 = vld [vmem:[#allocation7 + $0x418] sm:$0xff]
    %v3872 = vld [vmem:[#allocation7 + $0x420] sm:$0xff]
    %v3873 = vld [vmem:[#allocation7 + $0x428] sm:$0xff]
    %v3874 = vld [vmem:[#allocation7 + $0x430] sm:$0xff]
    %v3875 = vld [vmem:[#allocation7 + $0x438] sm:$0xff]
    %v3876 = vld [vmem:[#allocation7 + $0x440] sm:$0xff]
    %v3877 = vld [vmem:[#allocation7 + $0x448] sm:$0xff]
    %v3878 = vld [vmem:[#allocation7 + $0x450] sm:$0xff]
    %v3879 = vld [vmem:[#allocation7 + $0x458] sm:$0xff]
    %v3880 = vld [vmem:[#allocation7 + $0x460] sm:$0xff]
    %v3881 = vld [vmem:[#allocation7 + $0x468] sm:$0xff]
    %v3882 = vld [vmem:[#allocation7 + $0x470] sm:$0xff]
    %v3883 = vld [vmem:[#allocation7 + $0x478] sm:$0xff]
    %v3884 = vld [vmem:[#allocation7 + $0x480] sm:$0xff]
    %v3885 = vld [vmem:[#allocation7 + $0x488] sm:$0xff]
    %v3886 = vld [vmem:[#allocation7 + $0x490] sm:$0xff]
    %v3887 = vld [vmem:[#allocation7 + $0x498] sm:$0xff]
    %v3888 = vld [vmem:[#allocation7 + $0x4a0] sm:$0xff]
    %v3889 = vld [vmem:[#allocation7 + $0x4a8] sm:$0xff]
    %v3890 = vld [vmem:[#allocation7 + $0x4b0] sm:$0xff]
    %v3891 = vld [vmem:[#allocation7 + $0x4b8] sm:$0xff]
    %v3892 = vld [vmem:[#allocation7 + $0x4c0] sm:$0xff]
    %v3893 = vld [vmem:[#allocation7 + $0x4c8] sm:$0xff]
    %v3894 = vld [vmem:[#allocation7 + $0x4d0] sm:$0xff]
    %v3895 = vld [vmem:[#allocation7 + $0x4d8] sm:$0xff]
    %v3896 = vld [vmem:[#allocation7 + $0x4e0] sm:$0xff]
    %v3897 = vld [vmem:[#allocation7 + $0x4e8] sm:$0xff]
    %v3898 = vld [vmem:[#allocation7 + $0x4f0] sm:$0xff]
    %v3899 = vld [vmem:[#allocation7 + $0x4f8] sm:$0xff]
    %v3900 = vld [vmem:[#allocation7 + $0x500] sm:$0xff]
    %v3901 = vld [vmem:[#allocation7 + $0x508] sm:$0xff]
    %v3902 = vld [vmem:[#allocation7 + $0x510] sm:$0xff]
    %v3903 = vld [vmem:[#allocation7 + $0x518] sm:$0xff]
    %v3904 = vld [vmem:[#allocation7 + $0x520] sm:$0xff]
    %v3905 = vld [vmem:[#allocation7 + $0x528] sm:$0xff]
    %v3906 = vld [vmem:[#allocation7 + $0x530] sm:$0xff]
    %v3907 = vld [vmem:[#allocation7 + $0x538] sm:$0xff]
    %v3908 = vld [vmem:[#allocation7 + $0x540] sm:$0xff]
    %v3909 = vld [vmem:[#allocation7 + $0x548] sm:$0xff]
    %v3910 = vld [vmem:[#allocation7 + $0x550] sm:$0xff]
    %v3911 = vld [vmem:[#allocation7 + $0x558] sm:$0xff]
    %v3912 = vld [vmem:[#allocation7 + $0x560] sm:$0xff]
    %v3913 = vld [vmem:[#allocation7 + $0x568] sm:$0xff]
    %v3914 = vld [vmem:[#allocation7 + $0x570] sm:$0xff]
    %v3915 = vld [vmem:[#allocation7 + $0x578] sm:$0xff]
    %v3916 = vld [vmem:[#allocation7 + $0x580] sm:$0xff]
    %v3917 = vld [vmem:[#allocation7 + $0x588] sm:$0xff]
    %v3918 = vld [vmem:[#allocation7 + $0x590] sm:$0xff]
    %v3919 = vld [vmem:[#allocation7 + $0x598] sm:$0xff]
    %v3920 = vld [vmem:[#allocation7 + $0x5a0] sm:$0xff]
    %v3921 = vld [vmem:[#allocation7 + $0x5a8] sm:$0xff]
    %v3922 = vld [vmem:[#allocation7 + $0x5b0] sm:$0xff]
    %v3923 = vld [vmem:[#allocation7 + $0x5b8] sm:$0xff]
    %v3924 = vld [vmem:[#allocation7 + $0x5c0] sm:$0xff]
    %v3925 = vld [vmem:[#allocation7 + $0x5c8] sm:$0xff]
    %v3926 = vld [vmem:[#allocation7 + $0x5d0] sm:$0xff]
    %v3927 = vld [vmem:[#allocation7 + $0x5d8] sm:$0xff]
    %v3928 = vld [vmem:[#allocation7 + $0x5e0] sm:$0xff]
    %v3929 = vld [vmem:[#allocation7 + $0x5e8] sm:$0xff]
    %v3930 = vld [vmem:[#allocation7 + $0x5f0] sm:$0xff]
    %v3931 = vld [vmem:[#allocation7 + $0x5f8] sm:$0xff]
    %v3932 = vld [vmem:[#allocation7 + $0x600] sm:$0xff]
    %v3933 = vld [vmem:[#allocation7 + $0x608] sm:$0xff]
    %v3934 = vld [vmem:[#allocation7 + $0x610] sm:$0xff]
    %v3935 = vld [vmem:[#allocation7 + $0x618] sm:$0xff]
    %v3936 = vld [vmem:[#allocation7 + $0x620] sm:$0xff]
    %v3937 = vld [vmem:[#allocation7 + $0x628] sm:$0xff]
    %v3938 = vld [vmem:[#allocation7 + $0x630] sm:$0xff]
    %v3939 = vld [vmem:[#allocation7 + $0x638] sm:$0xff]
    %v3940 = vld [vmem:[#allocation7 + $0x640] sm:$0xff]
    %v3941 = vld [vmem:[#allocation7 + $0x648] sm:$0xff]
    %v3942 = vld [vmem:[#allocation7 + $0x650] sm:$0xff]
    %v3943 = vld [vmem:[#allocation7 + $0x658] sm:$0xff]
    %v3944 = vld [vmem:[#allocation7 + $0x660] sm:$0xff]
    %v3945 = vld [vmem:[#allocation7 + $0x668] sm:$0xff]
    %v3946 = vld [vmem:[#allocation7 + $0x670] sm:$0xff]
    %v3947 = vld [vmem:[#allocation7 + $0x678] sm:$0xff]
    %v3948 = vld [vmem:[#allocation7 + $0x680] sm:$0xff]
    %v3949 = vld [vmem:[#allocation7 + $0x688] sm:$0xff]
    %v3950 = vld [vmem:[#allocation7 + $0x690] sm:$0xff]
    %v3951 = vld [vmem:[#allocation7 + $0x698] sm:$0xff]
    %v3952 = vld [vmem:[#allocation7 + $0x6a0] sm:$0xff]
    %v3953 = vld [vmem:[#allocation7 + $0x6a8] sm:$0xff]
    %v3954 = vld [vmem:[#allocation7 + $0x6b0] sm:$0xff]
    %v3955 = vld [vmem:[#allocation7 + $0x6b8] sm:$0xff]
    %v3956 = vld [vmem:[#allocation7 + $0x6c0] sm:$0xff]
    %v3957 = vld [vmem:[#allocation7 + $0x6c8] sm:$0xff]
    %v3958 = vld [vmem:[#allocation7 + $0x6d0] sm:$0xff]
    %v3959 = vld [vmem:[#allocation7 + $0x6d8] sm:$0xff]
    %v3960 = vld [vmem:[#allocation7 + $0x6e0] sm:$0xff]
    %v3961 = vld [vmem:[#allocation7 + $0x6e8] sm:$0xff]
    %v3962 = vld [vmem:[#allocation7 + $0x6f0] sm:$0xff]
    %v3963 = vld [vmem:[#allocation7 + $0x6f8] sm:$0xff]
    %v3964 = vld [vmem:[#allocation7 + $0x700] sm:$0xff]
    %v3965 = vld [vmem:[#allocation7 + $0x708] sm:$0xff]
    %v3966 = vld [vmem:[#allocation7 + $0x710] sm:$0xff]
    %v3967 = vld [vmem:[#allocation7 + $0x718] sm:$0xff]
    %v3968 = vld [vmem:[#allocation7 + $0x720] sm:$0xff]
    %v3969 = vld [vmem:[#allocation7 + $0x728] sm:$0xff]
    %v3970 = vld [vmem:[#allocation7 + $0x730] sm:$0xff]
    %v3971 = vld [vmem:[#allocation7 + $0x738] sm:$0xff]
    %v3972 = vld [vmem:[#allocation7 + $0x740] sm:$0xff]
    %v3973 = vld [vmem:[#allocation7 + $0x748] sm:$0xff]
    %v3974 = vld [vmem:[#allocation7 + $0x750] sm:$0xff]
    %v3975 = vld [vmem:[#allocation7 + $0x758] sm:$0xff]
    %v3976 = vld [vmem:[#allocation7 + $0x760] sm:$0xff]
    %v3977 = vld [vmem:[#allocation7 + $0x768] sm:$0xff]
    %v3978 = vld [vmem:[#allocation7 + $0x770] sm:$0xff]
    %v3979 = vld [vmem:[#allocation7 + $0x778] sm:$0xff]
    %v3980 = vld [vmem:[#allocation7 + $0x780] sm:$0xff]
    %v3981 = vld [vmem:[#allocation7 + $0x788] sm:$0xff]
    %v3982 = vld [vmem:[#allocation7 + $0x790] sm:$0xff]
    %v3983 = vld [vmem:[#allocation7 + $0x798] sm:$0xff]
    %v3984 = vld [vmem:[#allocation7 + $0x7a0] sm:$0xff]
    %v3985 = vld [vmem:[#allocation7 + $0x7a8] sm:$0xff]
    %v3986 = vld [vmem:[#allocation7 + $0x7b0] sm:$0xff]
    %v3987 = vld [vmem:[#allocation7 + $0x7b8] sm:$0xff]
    %v3988 = vld [vmem:[#allocation7 + $0x7c0] sm:$0xff]
    %v3989 = vld [vmem:[#allocation7 + $0x7c8] sm:$0xff]
    %v3990 = vld [vmem:[#allocation7 + $0x7d0] sm:$0xff]
    %v3991 = vld [vmem:[#allocation7 + $0x7d8] sm:$0xff]
    %v3992 = vld [vmem:[#allocation7 + $0x7e0] sm:$0xff]
    %v3993 = vld [vmem:[#allocation7 + $0x7e8] sm:$0xff]
    %v3994 = vld [vmem:[#allocation7 + $0x7f0] sm:$0xff]
    %v3995 = vld [vmem:[#allocation7 + $0x7f8] sm:$0xff]
    %v3997 = vlaneseq
    %v3998 = vshrl.u32 %v3997, 7
    %v3999 = vsub.s32 0, %v3998
    %v4000 = vrot.slane %v3739, %v3999
    %v4001 = vlaneseq
    %v4002 = vshrl.u32 %v4001, 7
    %v4003 = vsub.s32 1, %v4002
    %v4004 = vrot.slane %v3739, %v4003
    %v4005 = vlaneseq
    %v4006 = vshrl.u32 %v4005, 7
    %v4007 = vsub.s32 2, %v4006
    %v4008 = vrot.slane %v3739, %v4007
    %v4009 = vlaneseq
    %v4010 = vshrl.u32 %v4009, 7
    %v4011 = vsub.s32 3, %v4010
    %v4012 = vrot.slane %v3739, %v4011
    %v4273 = vunpack.c.l.b16 %v3740
    %v4274 = vunpack.c.h.b16 %v3740
    %v4275 = vunpack.c.l.b16 %v3741
    %v4276 = vunpack.c.h.b16 %v3741
    %v4277 = vunpack.c.l.b16 %v3742
    %v4278 = vunpack.c.h.b16 %v3742
    %v4279 = vunpack.c.l.b16 %v3743
    %v4280 = vunpack.c.h.b16 %v3743
    %v4281 = vunpack.c.l.b16 %v3744
    %v4282 = vunpack.c.h.b16 %v3744
    %v4283 = vunpack.c.l.b16 %v3745
    %v4284 = vunpack.c.h.b16 %v3745
    %v4285 = vunpack.c.l.b16 %v3746
    %v4286 = vunpack.c.h.b16 %v3746
    %v4287 = vunpack.c.l.b16 %v3747
    %v4288 = vunpack.c.h.b16 %v3747
    %v4289 = vunpack.c.l.b16 %v3748
    %v4290 = vunpack.c.h.b16 %v3748
    %v4291 = vunpack.c.l.b16 %v3749
    %v4292 = vunpack.c.h.b16 %v3749
    %v4293 = vunpack.c.l.b16 %v3750
    %v4294 = vunpack.c.h.b16 %v3750
    %v4295 = vunpack.c.l.b16 %v3751
    %v4296 = vunpack.c.h.b16 %v3751
    %v4297 = vunpack.c.l.b16 %v3752
    %v4298 = vunpack.c.h.b16 %v3752
    %v4299 = vunpack.c.l.b16 %v3753
    %v4300 = vunpack.c.h.b16 %v3753
    %v4301 = vunpack.c.l.b16 %v3754
    %v4302 = vunpack.c.h.b16 %v3754
    %v4303 = vunpack.c.l.b16 %v3755
    %v4304 = vunpack.c.h.b16 %v3755
    %v4305 = vunpack.c.l.b16 %v3756
    %v4306 = vunpack.c.h.b16 %v3756
    %v4307 = vunpack.c.l.b16 %v3757
    %v4308 = vunpack.c.h.b16 %v3757
    %v4309 = vunpack.c.l.b16 %v3758
    %v4310 = vunpack.c.h.b16 %v3758
    %v4311 = vunpack.c.l.b16 %v3759
    %v4312 = vunpack.c.h.b16 %v3759
    %v4313 = vunpack.c.l.b16 %v3760
    %v4314 = vunpack.c.h.b16 %v3760
    %v4315 = vunpack.c.l.b16 %v3761
    %v4316 = vunpack.c.h.b16 %v3761
    %v4317 = vunpack.c.l.b16 %v3762
    %v4318 = vunpack.c.h.b16 %v3762
    %v4319 = vunpack.c.l.b16 %v3763
    %v4320 = vunpack.c.h.b16 %v3763
    %v4321 = vunpack.c.l.b16 %v3764
    %v4322 = vunpack.c.h.b16 %v3764
    %v4323 = vunpack.c.l.b16 %v3765
    %v4324 = vunpack.c.h.b16 %v3765
    %v4325 = vunpack.c.l.b16 %v3766
    %v4326 = vunpack.c.h.b16 %v3766
    %v4327 = vunpack.c.l.b16 %v3767
    %v4328 = vunpack.c.h.b16 %v3767
    %v4329 = vunpack.c.l.b16 %v3768
    %v4330 = vunpack.c.h.b16 %v3768
    %v4331 = vunpack.c.l.b16 %v3769
    %v4332 = vunpack.c.h.b16 %v3769
    %v4333 = vunpack.c.l.b16 %v3770
    %v4334 = vunpack.c.h.b16 %v3770
    %v4335 = vunpack.c.l.b16 %v3771
    %v4336 = vunpack.c.h.b16 %v3771
    %v4337 = vunpack.c.l.b16 %v3772
    %v4338 = vunpack.c.h.b16 %v3772
    %v4339 = vunpack.c.l.b16 %v3773
    %v4340 = vunpack.c.h.b16 %v3773
    %v4341 = vunpack.c.l.b16 %v3774
    %v4342 = vunpack.c.h.b16 %v3774
    %v4343 = vunpack.c.l.b16 %v3775
    %v4344 = vunpack.c.h.b16 %v3775
    %v4345 = vunpack.c.l.b16 %v3776
    %v4346 = vunpack.c.h.b16 %v3776
    %v4347 = vunpack.c.l.b16 %v3777
    %v4348 = vunpack.c.h.b16 %v3777
    %v4349 = vunpack.c.l.b16 %v3778
    %v4350 = vunpack.c.h.b16 %v3778
    %v4351 = vunpack.c.l.b16 %v3779
    %v4352 = vunpack.c.h.b16 %v3779
    %v4353 = vunpack.c.l.b16 %v3780
    %v4354 = vunpack.c.h.b16 %v3780
    %v4355 = vunpack.c.l.b16 %v3781
    %v4356 = vunpack.c.h.b16 %v3781
    %v4357 = vunpack.c.l.b16 %v3782
    %v4358 = vunpack.c.h.b16 %v3782
    %v4359 = vunpack.c.l.b16 %v3783
    %v4360 = vunpack.c.h.b16 %v3783
    %v4361 = vunpack.c.l.b16 %v3784
    %v4362 = vunpack.c.h.b16 %v3784
    %v4363 = vunpack.c.l.b16 %v3785
    %v4364 = vunpack.c.h.b16 %v3785
    %v4365 = vunpack.c.l.b16 %v3786
    %v4366 = vunpack.c.h.b16 %v3786
    %v4367 = vunpack.c.l.b16 %v3787
    %v4368 = vunpack.c.h.b16 %v3787
    %v4369 = vunpack.c.l.b16 %v3788
    %v4370 = vunpack.c.h.b16 %v3788
    %v4371 = vunpack.c.l.b16 %v3789
    %v4372 = vunpack.c.h.b16 %v3789
    %v4373 = vunpack.c.l.b16 %v3790
    %v4374 = vunpack.c.h.b16 %v3790
    %v4375 = vunpack.c.l.b16 %v3791
    %v4376 = vunpack.c.h.b16 %v3791
    %v4377 = vunpack.c.l.b16 %v3792
    %v4378 = vunpack.c.h.b16 %v3792
    %v4379 = vunpack.c.l.b16 %v3793
    %v4380 = vunpack.c.h.b16 %v3793
    %v4381 = vunpack.c.l.b16 %v3794
    %v4382 = vunpack.c.h.b16 %v3794
    %v4383 = vunpack.c.l.b16 %v3795
    %v4384 = vunpack.c.h.b16 %v3795
    %v4385 = vunpack.c.l.b16 %v3796
    %v4386 = vunpack.c.h.b16 %v3796
    %v4387 = vunpack.c.l.b16 %v3797
    %v4388 = vunpack.c.h.b16 %v3797
    %v4389 = vunpack.c.l.b16 %v3798
    %v4390 = vunpack.c.h.b16 %v3798
    %v4391 = vunpack.c.l.b16 %v3799
    %v4392 = vunpack.c.h.b16 %v3799
    %v4393 = vunpack.c.l.b16 %v3800
    %v4394 = vunpack.c.h.b16 %v3800
    %v4395 = vunpack.c.l.b16 %v3801
    %v4396 = vunpack.c.h.b16 %v3801
    %v4397 = vunpack.c.l.b16 %v3802
    %v4398 = vunpack.c.h.b16 %v3802
    %v4399 = vunpack.c.l.b16 %v3803
    %v4400 = vunpack.c.h.b16 %v3803
    %v4401 = vunpack.c.l.b16 %v3804
    %v4402 = vunpack.c.h.b16 %v3804
    %v4403 = vunpack.c.l.b16 %v3805
    %v4404 = vunpack.c.h.b16 %v3805
    %v4405 = vunpack.c.l.b16 %v3806
    %v4406 = vunpack.c.h.b16 %v3806
    %v4407 = vunpack.c.l.b16 %v3807
    %v4408 = vunpack.c.h.b16 %v3807
    %v4409 = vunpack.c.l.b16 %v3808
    %v4410 = vunpack.c.h.b16 %v3808
    %v4411 = vunpack.c.l.b16 %v3809
    %v4412 = vunpack.c.h.b16 %v3809
    %v4413 = vunpack.c.l.b16 %v3810
    %v4414 = vunpack.c.h.b16 %v3810
    %v4415 = vunpack.c.l.b16 %v3811
    %v4416 = vunpack.c.h.b16 %v3811
    %v4417 = vunpack.c.l.b16 %v3812
    %v4418 = vunpack.c.h.b16 %v3812
    %v4419 = vunpack.c.l.b16 %v3813
    %v4420 = vunpack.c.h.b16 %v3813
    %v4421 = vunpack.c.l.b16 %v3814
    %v4422 = vunpack.c.h.b16 %v3814
    %v4423 = vunpack.c.l.b16 %v3815
    %v4424 = vunpack.c.h.b16 %v3815
    %v4425 = vunpack.c.l.b16 %v3816
    %v4426 = vunpack.c.h.b16 %v3816
    %v4427 = vunpack.c.l.b16 %v3817
    %v4428 = vunpack.c.h.b16 %v3817
    %v4429 = vunpack.c.l.b16 %v3818
    %v4430 = vunpack.c.h.b16 %v3818
    %v4431 = vunpack.c.l.b16 %v3819
    %v4432 = vunpack.c.h.b16 %v3819
    %v4433 = vunpack.c.l.b16 %v3820
    %v4434 = vunpack.c.h.b16 %v3820
    %v4435 = vunpack.c.l.b16 %v3821
    %v4436 = vunpack.c.h.b16 %v3821
    %v4437 = vunpack.c.l.b16 %v3822
    %v4438 = vunpack.c.h.b16 %v3822
    %v4439 = vunpack.c.l.b16 %v3823
    %v4440 = vunpack.c.h.b16 %v3823
    %v4441 = vunpack.c.l.b16 %v3824
    %v4442 = vunpack.c.h.b16 %v3824
    %v4443 = vunpack.c.l.b16 %v3825
    %v4444 = vunpack.c.h.b16 %v3825
    %v4445 = vunpack.c.l.b16 %v3826
    %v4446 = vunpack.c.h.b16 %v3826
    %v4447 = vunpack.c.l.b16 %v3827
    %v4448 = vunpack.c.h.b16 %v3827
    %v4449 = vunpack.c.l.b16 %v3828
    %v4450 = vunpack.c.h.b16 %v3828
    %v4451 = vunpack.c.l.b16 %v3829
    %v4452 = vunpack.c.h.b16 %v3829
    %v4453 = vunpack.c.l.b16 %v3830
    %v4454 = vunpack.c.h.b16 %v3830
    %v4455 = vunpack.c.l.b16 %v3831
    %v4456 = vunpack.c.h.b16 %v3831
    %v4457 = vunpack.c.l.b16 %v3832
    %v4458 = vunpack.c.h.b16 %v3832
    %v4459 = vunpack.c.l.b16 %v3833
    %v4460 = vunpack.c.h.b16 %v3833
    %v4461 = vunpack.c.l.b16 %v3834
    %v4462 = vunpack.c.h.b16 %v3834
    %v4463 = vunpack.c.l.b16 %v3835
    %v4464 = vunpack.c.h.b16 %v3835
    %v4465 = vunpack.c.l.b16 %v3836
    %v4466 = vunpack.c.h.b16 %v3836
    %v4467 = vunpack.c.l.b16 %v3837
    %v4468 = vunpack.c.h.b16 %v3837
    %v4469 = vunpack.c.l.b16 %v3838
    %v4470 = vunpack.c.h.b16 %v3838
    %v4471 = vunpack.c.l.b16 %v3839
    %v4472 = vunpack.c.h.b16 %v3839
    %v4473 = vunpack.c.l.b16 %v3840
    %v4474 = vunpack.c.h.b16 %v3840
    %v4475 = vunpack.c.l.b16 %v3841
    %v4476 = vunpack.c.h.b16 %v3841
    %v4477 = vunpack.c.l.b16 %v3842
    %v4478 = vunpack.c.h.b16 %v3842
    %v4479 = vunpack.c.l.b16 %v3843
    %v4480 = vunpack.c.h.b16 %v3843
    %v4481 = vunpack.c.l.b16 %v3844
    %v4482 = vunpack.c.h.b16 %v3844
    %v4483 = vunpack.c.l.b16 %v3845
    %v4484 = vunpack.c.h.b16 %v3845
    %v4485 = vunpack.c.l.b16 %v3846
    %v4486 = vunpack.c.h.b16 %v3846
    %v4487 = vunpack.c.l.b16 %v3847
    %v4488 = vunpack.c.h.b16 %v3847
    %v4489 = vunpack.c.l.b16 %v3848
    %v4490 = vunpack.c.h.b16 %v3848
    %v4491 = vunpack.c.l.b16 %v3849
    %v4492 = vunpack.c.h.b16 %v3849
    %v4493 = vunpack.c.l.b16 %v3850
    %v4494 = vunpack.c.h.b16 %v3850
    %v4495 = vunpack.c.l.b16 %v3851
    %v4496 = vunpack.c.h.b16 %v3851
    %v4497 = vunpack.c.l.b16 %v3852
    %v4498 = vunpack.c.h.b16 %v3852
    %v4499 = vunpack.c.l.b16 %v3853
    %v4500 = vunpack.c.h.b16 %v3853
    %v4501 = vunpack.c.l.b16 %v3854
    %v4502 = vunpack.c.h.b16 %v3854
    %v4503 = vunpack.c.l.b16 %v3855
    %v4504 = vunpack.c.h.b16 %v3855
    %v4505 = vunpack.c.l.b16 %v3856
    %v4506 = vunpack.c.h.b16 %v3856
    %v4507 = vunpack.c.l.b16 %v3857
    %v4508 = vunpack.c.h.b16 %v3857
    %v4509 = vunpack.c.l.b16 %v3858
    %v4510 = vunpack.c.h.b16 %v3858
    %v4511 = vunpack.c.l.b16 %v3859
    %v4512 = vunpack.c.h.b16 %v3859
    %v4513 = vunpack.c.l.b16 %v3860
    %v4514 = vunpack.c.h.b16 %v3860
    %v4515 = vunpack.c.l.b16 %v3861
    %v4516 = vunpack.c.h.b16 %v3861
    %v4517 = vunpack.c.l.b16 %v3862
    %v4518 = vunpack.c.h.b16 %v3862
    %v4519 = vunpack.c.l.b16 %v3863
    %v4520 = vunpack.c.h.b16 %v3863
    %v4521 = vunpack.c.l.b16 %v3864
    %v4522 = vunpack.c.h.b16 %v3864
    %v4523 = vunpack.c.l.b16 %v3865
    %v4524 = vunpack.c.h.b16 %v3865
    %v4525 = vunpack.c.l.b16 %v3866
    %v4526 = vunpack.c.h.b16 %v3866
    %v4527 = vunpack.c.l.b16 %v3867
    %v4528 = vunpack.c.h.b16 %v3867
    %v4529 = vunpack.c.l.b16 %v3868
    %v4530 = vunpack.c.h.b16 %v3868
    %v4531 = vunpack.c.l.b16 %v3869
    %v4532 = vunpack.c.h.b16 %v3869
    %v4533 = vunpack.c.l.b16 %v3870
    %v4534 = vunpack.c.h.b16 %v3870
    %v4535 = vunpack.c.l.b16 %v3871
    %v4536 = vunpack.c.h.b16 %v3871
    %v4537 = vunpack.c.l.b16 %v3872
    %v4538 = vunpack.c.h.b16 %v3872
    %v4539 = vunpack.c.l.b16 %v3873
    %v4540 = vunpack.c.h.b16 %v3873
    %v4541 = vunpack.c.l.b16 %v3874
    %v4542 = vunpack.c.h.b16 %v3874
    %v4543 = vunpack.c.l.b16 %v3875
    %v4544 = vunpack.c.h.b16 %v3875
    %v4545 = vunpack.c.l.b16 %v3876
    %v4546 = vunpack.c.h.b16 %v3876
    %v4547 = vunpack.c.l.b16 %v3877
    %v4548 = vunpack.c.h.b16 %v3877
    %v4549 = vunpack.c.l.b16 %v3878
    %v4550 = vunpack.c.h.b16 %v3878
    %v4551 = vunpack.c.l.b16 %v3879
    %v4552 = vunpack.c.h.b16 %v3879
    %v4553 = vunpack.c.l.b16 %v3880
    %v4554 = vunpack.c.h.b16 %v3880
    %v4555 = vunpack.c.l.b16 %v3881
    %v4556 = vunpack.c.h.b16 %v3881
    %v4557 = vunpack.c.l.b16 %v3882
    %v4558 = vunpack.c.h.b16 %v3882
    %v4559 = vunpack.c.l.b16 %v3883
    %v4560 = vunpack.c.h.b16 %v3883
    %v4561 = vunpack.c.l.b16 %v3884
    %v4562 = vunpack.c.h.b16 %v3884
    %v4563 = vunpack.c.l.b16 %v3885
    %v4564 = vunpack.c.h.b16 %v3885
    %v4565 = vunpack.c.l.b16 %v3886
    %v4566 = vunpack.c.h.b16 %v3886
    %v4567 = vunpack.c.l.b16 %v3887
    %v4568 = vunpack.c.h.b16 %v3887
    %v4569 = vunpack.c.l.b16 %v3888
    %v4570 = vunpack.c.h.b16 %v3888
    %v4571 = vunpack.c.l.b16 %v3889
    %v4572 = vunpack.c.h.b16 %v3889
    %v4573 = vunpack.c.l.b16 %v3890
    %v4574 = vunpack.c.h.b16 %v3890
    %v4575 = vunpack.c.l.b16 %v3891
    %v4576 = vunpack.c.h.b16 %v3891
    %v4577 = vunpack.c.l.b16 %v3892
    %v4578 = vunpack.c.h.b16 %v3892
    %v4579 = vunpack.c.l.b16 %v3893
    %v4580 = vunpack.c.h.b16 %v3893
    %v4581 = vunpack.c.l.b16 %v3894
    %v4582 = vunpack.c.h.b16 %v3894
    %v4583 = vunpack.c.l.b16 %v3895
    %v4584 = vunpack.c.h.b16 %v3895
    %v4585 = vunpack.c.l.b16 %v3896
    %v4586 = vunpack.c.h.b16 %v3896
    %v4587 = vunpack.c.l.b16 %v3897
    %v4588 = vunpack.c.h.b16 %v3897
    %v4589 = vunpack.c.l.b16 %v3898
    %v4590 = vunpack.c.h.b16 %v3898
    %v4591 = vunpack.c.l.b16 %v3899
    %v4592 = vunpack.c.h.b16 %v3899
    %v4593 = vunpack.c.l.b16 %v3900
    %v4594 = vunpack.c.h.b16 %v3900
    %v4595 = vunpack.c.l.b16 %v3901
    %v4596 = vunpack.c.h.b16 %v3901
    %v4597 = vunpack.c.l.b16 %v3902
    %v4598 = vunpack.c.h.b16 %v3902
    %v4599 = vunpack.c.l.b16 %v3903
    %v4600 = vunpack.c.h.b16 %v3903
    %v4601 = vunpack.c.l.b16 %v3904
    %v4602 = vunpack.c.h.b16 %v3904
    %v4603 = vunpack.c.l.b16 %v3905
    %v4604 = vunpack.c.h.b16 %v3905
    %v4605 = vunpack.c.l.b16 %v3906
    %v4606 = vunpack.c.h.b16 %v3906
    %v4607 = vunpack.c.l.b16 %v3907
    %v4608 = vunpack.c.h.b16 %v3907
    %v4609 = vunpack.c.l.b16 %v3908
    %v4610 = vunpack.c.h.b16 %v3908
    %v4611 = vunpack.c.l.b16 %v3909
    %v4612 = vunpack.c.h.b16 %v3909
    %v4613 = vunpack.c.l.b16 %v3910
    %v4614 = vunpack.c.h.b16 %v3910
    %v4615 = vunpack.c.l.b16 %v3911
    %v4616 = vunpack.c.h.b16 %v3911
    %v4617 = vunpack.c.l.b16 %v3912
    %v4618 = vunpack.c.h.b16 %v3912
    %v4619 = vunpack.c.l.b16 %v3913
    %v4620 = vunpack.c.h.b16 %v3913
    %v4621 = vunpack.c.l.b16 %v3914
    %v4622 = vunpack.c.h.b16 %v3914
    %v4623 = vunpack.c.l.b16 %v3915
    %v4624 = vunpack.c.h.b16 %v3915
    %v4625 = vunpack.c.l.b16 %v3916
    %v4626 = vunpack.c.h.b16 %v3916
    %v4627 = vunpack.c.l.b16 %v3917
    %v4628 = vunpack.c.h.b16 %v3917
    %v4629 = vunpack.c.l.b16 %v3918
    %v4630 = vunpack.c.h.b16 %v3918
    %v4631 = vunpack.c.l.b16 %v3919
    %v4632 = vunpack.c.h.b16 %v3919
    %v4633 = vunpack.c.l.b16 %v3920
    %v4634 = vunpack.c.h.b16 %v3920
    %v4635 = vunpack.c.l.b16 %v3921
    %v4636 = vunpack.c.h.b16 %v3921
    %v4637 = vunpack.c.l.b16 %v3922
    %v4638 = vunpack.c.h.b16 %v3922
    %v4639 = vunpack.c.l.b16 %v3923
    %v4640 = vunpack.c.h.b16 %v3923
    %v4641 = vunpack.c.l.b16 %v3924
    %v4642 = vunpack.c.h.b16 %v3924
    %v4643 = vunpack.c.l.b16 %v3925
    %v4644 = vunpack.c.h.b16 %v3925
    %v4645 = vunpack.c.l.b16 %v3926
    %v4646 = vunpack.c.h.b16 %v3926
    %v4647 = vunpack.c.l.b16 %v3927
    %v4648 = vunpack.c.h.b16 %v3927
    %v4649 = vunpack.c.l.b16 %v3928
    %v4650 = vunpack.c.h.b16 %v3928
    %v4651 = vunpack.c.l.b16 %v3929
    %v4652 = vunpack.c.h.b16 %v3929
    %v4653 = vunpack.c.l.b16 %v3930
    %v4654 = vunpack.c.h.b16 %v3930
    %v4655 = vunpack.c.l.b16 %v3931
    %v4656 = vunpack.c.h.b16 %v3931
    %v4657 = vunpack.c.l.b16 %v3932
    %v4658 = vunpack.c.h.b16 %v3932
    %v4659 = vunpack.c.l.b16 %v3933
    %v4660 = vunpack.c.h.b16 %v3933
    %v4661 = vunpack.c.l.b16 %v3934
    %v4662 = vunpack.c.h.b16 %v3934
    %v4663 = vunpack.c.l.b16 %v3935
    %v4664 = vunpack.c.h.b16 %v3935
    %v4665 = vunpack.c.l.b16 %v3936
    %v4666 = vunpack.c.h.b16 %v3936
    %v4667 = vunpack.c.l.b16 %v3937
    %v4668 = vunpack.c.h.b16 %v3937
    %v4669 = vunpack.c.l.b16 %v3938
    %v4670 = vunpack.c.h.b16 %v3938
    %v4671 = vunpack.c.l.b16 %v3939
    %v4672 = vunpack.c.h.b16 %v3939
    %v4673 = vunpack.c.l.b16 %v3940
    %v4674 = vunpack.c.h.b16 %v3940
    %v4675 = vunpack.c.l.b16 %v3941
    %v4676 = vunpack.c.h.b16 %v3941
    %v4677 = vunpack.c.l.b16 %v3942
    %v4678 = vunpack.c.h.b16 %v3942
    %v4679 = vunpack.c.l.b16 %v3943
    %v4680 = vunpack.c.h.b16 %v3943
    %v4681 = vunpack.c.l.b16 %v3944
    %v4682 = vunpack.c.h.b16 %v3944
    %v4683 = vunpack.c.l.b16 %v3945
    %v4684 = vunpack.c.h.b16 %v3945
    %v4685 = vunpack.c.l.b16 %v3946
    %v4686 = vunpack.c.h.b16 %v3946
    %v4687 = vunpack.c.l.b16 %v3947
    %v4688 = vunpack.c.h.b16 %v3947
    %v4689 = vunpack.c.l.b16 %v3948
    %v4690 = vunpack.c.h.b16 %v3948
    %v4691 = vunpack.c.l.b16 %v3949
    %v4692 = vunpack.c.h.b16 %v3949
    %v4693 = vunpack.c.l.b16 %v3950
    %v4694 = vunpack.c.h.b16 %v3950
    %v4695 = vunpack.c.l.b16 %v3951
    %v4696 = vunpack.c.h.b16 %v3951
    %v4697 = vunpack.c.l.b16 %v3952
    %v4698 = vunpack.c.h.b16 %v3952
    %v4699 = vunpack.c.l.b16 %v3953
    %v4700 = vunpack.c.h.b16 %v3953
    %v4701 = vunpack.c.l.b16 %v3954
    %v4702 = vunpack.c.h.b16 %v3954
    %v4703 = vunpack.c.l.b16 %v3955
    %v4704 = vunpack.c.h.b16 %v3955
    %v4705 = vunpack.c.l.b16 %v3956
    %v4706 = vunpack.c.h.b16 %v3956
    %v4707 = vunpack.c.l.b16 %v3957
    %v4708 = vunpack.c.h.b16 %v3957
    %v4709 = vunpack.c.l.b16 %v3958
    %v4710 = vunpack.c.h.b16 %v3958
    %v4711 = vunpack.c.l.b16 %v3959
    %v4712 = vunpack.c.h.b16 %v3959
    %v4713 = vunpack.c.l.b16 %v3960
    %v4714 = vunpack.c.h.b16 %v3960
    %v4715 = vunpack.c.l.b16 %v3961
    %v4716 = vunpack.c.h.b16 %v3961
    %v4717 = vunpack.c.l.b16 %v3962
    %v4718 = vunpack.c.h.b16 %v3962
    %v4719 = vunpack.c.l.b16 %v3963
    %v4720 = vunpack.c.h.b16 %v3963
    %v4721 = vunpack.c.l.b16 %v3964
    %v4722 = vunpack.c.h.b16 %v3964
    %v4723 = vunpack.c.l.b16 %v3965
    %v4724 = vunpack.c.h.b16 %v3965
    %v4725 = vunpack.c.l.b16 %v3966
    %v4726 = vunpack.c.h.b16 %v3966
    %v4727 = vunpack.c.l.b16 %v3967
    %v4728 = vunpack.c.h.b16 %v3967
    %v4729 = vunpack.c.l.b16 %v3968
    %v4730 = vunpack.c.h.b16 %v3968
    %v4731 = vunpack.c.l.b16 %v3969
    %v4732 = vunpack.c.h.b16 %v3969
    %v4733 = vunpack.c.l.b16 %v3970
    %v4734 = vunpack.c.h.b16 %v3970
    %v4735 = vunpack.c.l.b16 %v3971
    %v4736 = vunpack.c.h.b16 %v3971
    %v4737 = vunpack.c.l.b16 %v3972
    %v4738 = vunpack.c.h.b16 %v3972
    %v4739 = vunpack.c.l.b16 %v3973
    %v4740 = vunpack.c.h.b16 %v3973
    %v4741 = vunpack.c.l.b16 %v3974
    %v4742 = vunpack.c.h.b16 %v3974
    %v4743 = vunpack.c.l.b16 %v3975
    %v4744 = vunpack.c.h.b16 %v3975
    %v4745 = vunpack.c.l.b16 %v3976
    %v4746 = vunpack.c.h.b16 %v3976
    %v4747 = vunpack.c.l.b16 %v3977
    %v4748 = vunpack.c.h.b16 %v3977
    %v4749 = vunpack.c.l.b16 %v3978
    %v4750 = vunpack.c.h.b16 %v3978
    %v4751 = vunpack.c.l.b16 %v3979
    %v4752 = vunpack.c.h.b16 %v3979
    %v4753 = vunpack.c.l.b16 %v3980
    %v4754 = vunpack.c.h.b16 %v3980
    %v4755 = vunpack.c.l.b16 %v3981
    %v4756 = vunpack.c.h.b16 %v3981
    %v4757 = vunpack.c.l.b16 %v3982
    %v4758 = vunpack.c.h.b16 %v3982
    %v4759 = vunpack.c.l.b16 %v3983
    %v4760 = vunpack.c.h.b16 %v3983
    %v4761 = vunpack.c.l.b16 %v3984
    %v4762 = vunpack.c.h.b16 %v3984
    %v4763 = vunpack.c.l.b16 %v3985
    %v4764 = vunpack.c.h.b16 %v3985
    %v4765 = vunpack.c.l.b16 %v3986
    %v4766 = vunpack.c.h.b16 %v3986
    %v4767 = vunpack.c.l.b16 %v3987
    %v4768 = vunpack.c.h.b16 %v3987
    %v4769 = vunpack.c.l.b16 %v3988
    %v4770 = vunpack.c.h.b16 %v3988
    %v4771 = vunpack.c.l.b16 %v3989
    %v4772 = vunpack.c.h.b16 %v3989
    %v4773 = vunpack.c.l.b16 %v3990
    %v4774 = vunpack.c.h.b16 %v3990
    %v4775 = vunpack.c.l.b16 %v3991
    %v4776 = vunpack.c.h.b16 %v3991
    %v4777 = vunpack.c.l.b16 %v3992
    %v4778 = vunpack.c.h.b16 %v3992
    %v4779 = vunpack.c.l.b16 %v3993
    %v4780 = vunpack.c.h.b16 %v3993
    %v4781 = vunpack.c.l.b16 %v3994
    %v4782 = vunpack.c.h.b16 %v3994
    %v4783 = vunpack.c.l.b16 %v3995
    %v4784 = vunpack.c.h.b16 %v3995
    %v4785 = vpack.c.b16 %v4277, %v4273
    %v4786 = vpack.c.b16 %v4278, %v4274
    %v4787 = vpack.c.b16 %v4279, %v4275
    %v4788 = vpack.c.b16 %v4280, %v4276
    %v4789 = vpack.c.b16 %v4285, %v4281
    %v4790 = vpack.c.b16 %v4286, %v4282
    %v4791 = vpack.c.b16 %v4287, %v4283
    %v4792 = vpack.c.b16 %v4288, %v4284
    %v4793 = vpack.c.b16 %v4293, %v4289
    %v4794 = vpack.c.b16 %v4294, %v4290
    %v4795 = vpack.c.b16 %v4295, %v4291
    %v4796 = vpack.c.b16 %v4296, %v4292
    %v4797 = vpack.c.b16 %v4301, %v4297
    %v4798 = vpack.c.b16 %v4302, %v4298
    %v4799 = vpack.c.b16 %v4303, %v4299
    %v4800 = vpack.c.b16 %v4304, %v4300
    %v4801 = vpack.c.b16 %v4309, %v4305
    %v4802 = vpack.c.b16 %v4310, %v4306
    %v4803 = vpack.c.b16 %v4311, %v4307
    %v4804 = vpack.c.b16 %v4312, %v4308
    %v4805 = vpack.c.b16 %v4317, %v4313
    %v4806 = vpack.c.b16 %v4318, %v4314
    %v4807 = vpack.c.b16 %v4319, %v4315
    %v4808 = vpack.c.b16 %v4320, %v4316
    %v4809 = vpack.c.b16 %v4325, %v4321
    %v4810 = vpack.c.b16 %v4326, %v4322
    %v4811 = vpack.c.b16 %v4327, %v4323
    %v4812 = vpack.c.b16 %v4328, %v4324
    %v4813 = vpack.c.b16 %v4333, %v4329
    %v4814 = vpack.c.b16 %v4334, %v4330
    %v4815 = vpack.c.b16 %v4335, %v4331
    %v4816 = vpack.c.b16 %v4336, %v4332
    %v4817 = vpack.c.b16 %v4341, %v4337
    %v4818 = vpack.c.b16 %v4342, %v4338
    %v4819 = vpack.c.b16 %v4343, %v4339
    %v4820 = vpack.c.b16 %v4344, %v4340
    %v4821 = vpack.c.b16 %v4349, %v4345
    %v4822 = vpack.c.b16 %v4350, %v4346
    %v4823 = vpack.c.b16 %v4351, %v4347
    %v4824 = vpack.c.b16 %v4352, %v4348
    %v4825 = vpack.c.b16 %v4357, %v4353
    %v4826 = vpack.c.b16 %v4358, %v4354
    %v4827 = vpack.c.b16 %v4359, %v4355
    %v4828 = vpack.c.b16 %v4360, %v4356
    %v4829 = vpack.c.b16 %v4365, %v4361
    %v4830 = vpack.c.b16 %v4366, %v4362
    %v4831 = vpack.c.b16 %v4367, %v4363
    %v4832 = vpack.c.b16 %v4368, %v4364
    %v4833 = vpack.c.b16 %v4373, %v4369
    %v4834 = vpack.c.b16 %v4374, %v4370
    %v4835 = vpack.c.b16 %v4375, %v4371
    %v4836 = vpack.c.b16 %v4376, %v4372
    %v4837 = vpack.c.b16 %v4381, %v4377
    %v4838 = vpack.c.b16 %v4382, %v4378
    %v4839 = vpack.c.b16 %v4383, %v4379
    %v4840 = vpack.c.b16 %v4384, %v4380
    %v4841 = vpack.c.b16 %v4389, %v4385
    %v4842 = vpack.c.b16 %v4390, %v4386
    %v4843 = vpack.c.b16 %v4391, %v4387
    %v4844 = vpack.c.b16 %v4392, %v4388
    %v4845 = vpack.c.b16 %v4397, %v4393
    %v4846 = vpack.c.b16 %v4398, %v4394
    %v4847 = vpack.c.b16 %v4399, %v4395
    %v4848 = vpack.c.b16 %v4400, %v4396
    %v4849 = vpack.c.b16 %v4405, %v4401
    %v4850 = vpack.c.b16 %v4406, %v4402
    %v4851 = vpack.c.b16 %v4407, %v4403
    %v4852 = vpack.c.b16 %v4408, %v4404
    %v4853 = vpack.c.b16 %v4413, %v4409
    %v4854 = vpack.c.b16 %v4414, %v4410
    %v4855 = vpack.c.b16 %v4415, %v4411
    %v4856 = vpack.c.b16 %v4416, %v4412
    %v4857 = vpack.c.b16 %v4421, %v4417
    %v4858 = vpack.c.b16 %v4422, %v4418
    %v4859 = vpack.c.b16 %v4423, %v4419
    %v4860 = vpack.c.b16 %v4424, %v4420
    %v4861 = vpack.c.b16 %v4429, %v4425
    %v4862 = vpack.c.b16 %v4430, %v4426
    %v4863 = vpack.c.b16 %v4431, %v4427
    %v4864 = vpack.c.b16 %v4432, %v4428
    %v4865 = vpack.c.b16 %v4437, %v4433
    %v4866 = vpack.c.b16 %v4438, %v4434
    %v4867 = vpack.c.b16 %v4439, %v4435
    %v4868 = vpack.c.b16 %v4440, %v4436
    %v4869 = vpack.c.b16 %v4445, %v4441
    %v4870 = vpack.c.b16 %v4446, %v4442
    %v4871 = vpack.c.b16 %v4447, %v4443
    %v4872 = vpack.c.b16 %v4448, %v4444
    %v4873 = vpack.c.b16 %v4453, %v4449
    %v4874 = vpack.c.b16 %v4454, %v4450
    %v4875 = vpack.c.b16 %v4455, %v4451
    %v4876 = vpack.c.b16 %v4456, %v4452
    %v4877 = vpack.c.b16 %v4461, %v4457
    %v4878 = vpack.c.b16 %v4462, %v4458
    %v4879 = vpack.c.b16 %v4463, %v4459
    %v4880 = vpack.c.b16 %v4464, %v4460
    %v4881 = vpack.c.b16 %v4469, %v4465
    %v4882 = vpack.c.b16 %v4470, %v4466
    %v4883 = vpack.c.b16 %v4471, %v4467
    %v4884 = vpack.c.b16 %v4472, %v4468
    %v4885 = vpack.c.b16 %v4477, %v4473
    %v4886 = vpack.c.b16 %v4478, %v4474
    %v4887 = vpack.c.b16 %v4479, %v4475
    %v4888 = vpack.c.b16 %v4480, %v4476
    %v4889 = vpack.c.b16 %v4485, %v4481
    %v4890 = vpack.c.b16 %v4486, %v4482
    %v4891 = vpack.c.b16 %v4487, %v4483
    %v4892 = vpack.c.b16 %v4488, %v4484
    %v4893 = vpack.c.b16 %v4493, %v4489
    %v4894 = vpack.c.b16 %v4494, %v4490
    %v4895 = vpack.c.b16 %v4495, %v4491
    %v4896 = vpack.c.b16 %v4496, %v4492
    %v4897 = vpack.c.b16 %v4501, %v4497
    %v4898 = vpack.c.b16 %v4502, %v4498
    %v4899 = vpack.c.b16 %v4503, %v4499
    %v4900 = vpack.c.b16 %v4504, %v4500
    %v4901 = vpack.c.b16 %v4509, %v4505
    %v4902 = vpack.c.b16 %v4510, %v4506
    %v4903 = vpack.c.b16 %v4511, %v4507
    %v4904 = vpack.c.b16 %v4512, %v4508
    %v4905 = vpack.c.b16 %v4517, %v4513
    %v4906 = vpack.c.b16 %v4518, %v4514
    %v4907 = vpack.c.b16 %v4519, %v4515
    %v4908 = vpack.c.b16 %v4520, %v4516
    %v4909 = vpack.c.b16 %v4525, %v4521
    %v4910 = vpack.c.b16 %v4526, %v4522
    %v4911 = vpack.c.b16 %v4527, %v4523
    %v4912 = vpack.c.b16 %v4528, %v4524
    %v4913 = vpack.c.b16 %v4533, %v4529
    %v4914 = vpack.c.b16 %v4534, %v4530
    %v4915 = vpack.c.b16 %v4535, %v4531
    %v4916 = vpack.c.b16 %v4536, %v4532
    %v4917 = vpack.c.b16 %v4541, %v4537
    %v4918 = vpack.c.b16 %v4542, %v4538
    %v4919 = vpack.c.b16 %v4543, %v4539
    %v4920 = vpack.c.b16 %v4544, %v4540
    %v4921 = vpack.c.b16 %v4549, %v4545
    %v4922 = vpack.c.b16 %v4550, %v4546
    %v4923 = vpack.c.b16 %v4551, %v4547
    %v4924 = vpack.c.b16 %v4552, %v4548
    %v4925 = vpack.c.b16 %v4557, %v4553
    %v4926 = vpack.c.b16 %v4558, %v4554
    %v4927 = vpack.c.b16 %v4559, %v4555
    %v4928 = vpack.c.b16 %v4560, %v4556
    %v4929 = vpack.c.b16 %v4565, %v4561
    %v4930 = vpack.c.b16 %v4566, %v4562
    %v4931 = vpack.c.b16 %v4567, %v4563
    %v4932 = vpack.c.b16 %v4568, %v4564
    %v4933 = vpack.c.b16 %v4573, %v4569
    %v4934 = vpack.c.b16 %v4574, %v4570
    %v4935 = vpack.c.b16 %v4575, %v4571
    %v4936 = vpack.c.b16 %v4576, %v4572
    %v4937 = vpack.c.b16 %v4581, %v4577
    %v4938 = vpack.c.b16 %v4582, %v4578
    %v4939 = vpack.c.b16 %v4583, %v4579
    %v4940 = vpack.c.b16 %v4584, %v4580
    %v4941 = vpack.c.b16 %v4589, %v4585
    %v4942 = vpack.c.b16 %v4590, %v4586
    %v4943 = vpack.c.b16 %v4591, %v4587
    %v4944 = vpack.c.b16 %v4592, %v4588
    %v4945 = vpack.c.b16 %v4597, %v4593
    %v4946 = vpack.c.b16 %v4598, %v4594
    %v4947 = vpack.c.b16 %v4599, %v4595
    %v4948 = vpack.c.b16 %v4600, %v4596
    %v4949 = vpack.c.b16 %v4605, %v4601
    %v4950 = vpack.c.b16 %v4606, %v4602
    %v4951 = vpack.c.b16 %v4607, %v4603
    %v4952 = vpack.c.b16 %v4608, %v4604
    %v4953 = vpack.c.b16 %v4613, %v4609
    %v4954 = vpack.c.b16 %v4614, %v4610
    %v4955 = vpack.c.b16 %v4615, %v4611
    %v4956 = vpack.c.b16 %v4616, %v4612
    %v4957 = vpack.c.b16 %v4621, %v4617
    %v4958 = vpack.c.b16 %v4622, %v4618
    %v4959 = vpack.c.b16 %v4623, %v4619
    %v4960 = vpack.c.b16 %v4624, %v4620
    %v4961 = vpack.c.b16 %v4629, %v4625
    %v4962 = vpack.c.b16 %v4630, %v4626
    %v4963 = vpack.c.b16 %v4631, %v4627
    %v4964 = vpack.c.b16 %v4632, %v4628
    %v4965 = vpack.c.b16 %v4637, %v4633
    %v4966 = vpack.c.b16 %v4638, %v4634
    %v4967 = vpack.c.b16 %v4639, %v4635
    %v4968 = vpack.c.b16 %v4640, %v4636
    %v4969 = vpack.c.b16 %v4645, %v4641
    %v4970 = vpack.c.b16 %v4646, %v4642
    %v4971 = vpack.c.b16 %v4647, %v4643
    %v4972 = vpack.c.b16 %v4648, %v4644
    %v4973 = vpack.c.b16 %v4653, %v4649
    %v4974 = vpack.c.b16 %v4654, %v4650
    %v4975 = vpack.c.b16 %v4655, %v4651
    %v4976 = vpack.c.b16 %v4656, %v4652
    %v4977 = vpack.c.b16 %v4661, %v4657
    %v4978 = vpack.c.b16 %v4662, %v4658
    %v4979 = vpack.c.b16 %v4663, %v4659
    %v4980 = vpack.c.b16 %v4664, %v4660
    %v4981 = vpack.c.b16 %v4669, %v4665
    %v4982 = vpack.c.b16 %v4670, %v4666
    %v4983 = vpack.c.b16 %v4671, %v4667
    %v4984 = vpack.c.b16 %v4672, %v4668
    %v4985 = vpack.c.b16 %v4677, %v4673
    %v4986 = vpack.c.b16 %v4678, %v4674
    %v4987 = vpack.c.b16 %v4679, %v4675
    %v4988 = vpack.c.b16 %v4680, %v4676
    %v4989 = vpack.c.b16 %v4685, %v4681
    %v4990 = vpack.c.b16 %v4686, %v4682
    %v4991 = vpack.c.b16 %v4687, %v4683
    %v4992 = vpack.c.b16 %v4688, %v4684
    %v4993 = vpack.c.b16 %v4693, %v4689
    %v4994 = vpack.c.b16 %v4694, %v4690
    %v4995 = vpack.c.b16 %v4695, %v4691
    %v4996 = vpack.c.b16 %v4696, %v4692
    %v4997 = vpack.c.b16 %v4701, %v4697
    %v4998 = vpack.c.b16 %v4702, %v4698
    %v4999 = vpack.c.b16 %v4703, %v4699
    %v5000 = vpack.c.b16 %v4704, %v4700
    %v5001 = vpack.c.b16 %v4709, %v4705
    %v5002 = vpack.c.b16 %v4710, %v4706
    %v5003 = vpack.c.b16 %v4711, %v4707
    %v5004 = vpack.c.b16 %v4712, %v4708
    %v5005 = vpack.c.b16 %v4717, %v4713
    %v5006 = vpack.c.b16 %v4718, %v4714
    %v5007 = vpack.c.b16 %v4719, %v4715
    %v5008 = vpack.c.b16 %v4720, %v4716
    %v5009 = vpack.c.b16 %v4725, %v4721
    %v5010 = vpack.c.b16 %v4726, %v4722
    %v5011 = vpack.c.b16 %v4727, %v4723
    %v5012 = vpack.c.b16 %v4728, %v4724
    %v5013 = vpack.c.b16 %v4733, %v4729
    %v5014 = vpack.c.b16 %v4734, %v4730
    %v5015 = vpack.c.b16 %v4735, %v4731
    %v5016 = vpack.c.b16 %v4736, %v4732
    %v5017 = vpack.c.b16 %v4741, %v4737
    %v5018 = vpack.c.b16 %v4742, %v4738
    %v5019 = vpack.c.b16 %v4743, %v4739
    %v5020 = vpack.c.b16 %v4744, %v4740
    %v5021 = vpack.c.b16 %v4749, %v4745
    %v5022 = vpack.c.b16 %v4750, %v4746
    %v5023 = vpack.c.b16 %v4751, %v4747
    %v5024 = vpack.c.b16 %v4752, %v4748
    %v5025 = vpack.c.b16 %v4757, %v4753
    %v5026 = vpack.c.b16 %v4758, %v4754
    %v5027 = vpack.c.b16 %v4759, %v4755
    %v5028 = vpack.c.b16 %v4760, %v4756
    %v5029 = vpack.c.b16 %v4765, %v4761
    %v5030 = vpack.c.b16 %v4766, %v4762
    %v5031 = vpack.c.b16 %v4767, %v4763
    %v5032 = vpack.c.b16 %v4768, %v4764
    %v5033 = vpack.c.b16 %v4773, %v4769
    %v5034 = vpack.c.b16 %v4774, %v4770
    %v5035 = vpack.c.b16 %v4775, %v4771
    %v5036 = vpack.c.b16 %v4776, %v4772
    %v5037 = vpack.c.b16 %v4781, %v4777
    %v5038 = vpack.c.b16 %v4782, %v4778
    %v5039 = vpack.c.b16 %v4783, %v4779
    %v5040 = vpack.c.b16 %v4784, %v4780
    %5297 = vmatprep.subr.bf16.mxu0 %v4814
    %5298 = vmatpush1.bf16.msra.mxu0 %v4813
    %5299 = vmatprep.subr.bf16.mxu0 %v4810
    %5300 = vmatpush1.bf16.msra.mxu0 %v4809
    %5301 = vmatprep.subr.bf16.mxu0 %v4806
    %5302 = vmatpush1.bf16.msra.mxu0 %v4805
    %5303 = vmatprep.subr.bf16.mxu0 %v4802
    %5304 = vmatpush1.bf16.msra.mxu0 %v4801
    %5305 = vmatprep.subr.bf16.mxu0 %v4798
    %5306 = vmatpush1.bf16.msra.mxu0 %v4797
    %5307 = vmatprep.subr.bf16.mxu0 %v4794
    %5308 = vmatpush1.bf16.msra.mxu0 %v4793
    %5309 = vmatprep.subr.bf16.mxu0 %v4790
    %5310 = vmatpush1.bf16.msra.mxu0 %v4789
    %5311 = vmatprep.subr.bf16.mxu0 %v4786
    %5312 = vmatpush1.bf16.msra.mxu0 %v4785
    %5313 = vmatprep.subr.bf16.mxu0 %v4846
    %5314 = vmatpush2.bf16.msra.mxu0 %v4845
    %5315 = vmatprep.subr.bf16.mxu0 %v4842
    %5316 = vmatpush2.bf16.msra.mxu0 %v4841
    %5317 = vmatprep.subr.bf16.mxu0 %v4838
    %5318 = vmatpush2.bf16.msra.mxu0 %v4837
    %5319 = vmatprep.subr.bf16.mxu0 %v4834
    %5320 = vmatpush2.bf16.msra.mxu0 %v4833
    %5321 = vmatprep.subr.bf16.mxu0 %v4830
    %5322 = vmatpush2.bf16.msra.mxu0 %v4829
    %5323 = vmatprep.subr.bf16.mxu0 %v4826
    %5324 = vmatpush2.bf16.msra.mxu0 %v4825
    %5325 = vmatprep.subr.bf16.mxu0 %v4822
    %5326 = vmatpush2.bf16.msra.mxu0 %v4821
    %5327 = vmatprep.subr.bf16.mxu0 %v4818
    %5328 = vmatpush2.bf16.msra.mxu0 %v4817
    %5329 = vmatprep.mubr.bf16.mxu0 %v3675
    %5330 = vmatmul.mubr.bf16.gmra.mxu0 %v3674
    %v5331 = vpop.f32.mrf.mxu0
    %v5332 = vadd.f32 %v4000, %v5331
    %v5333 = vpop.f32.mrf.mxu0
    %v5334 = vadd.f32 %v4004, %v5333
    %v5335 = vpop.f32.mrf.mxu0
    %v5336 = vadd.f32 %v4000, %v5335
    %v5337 = vpop.f32.mrf.mxu0
    %v5338 = vadd.f32 %v4004, %v5337
    %5339 = vmatprep.mubr.bf16.mxu0 %v3683
    %5340 = vmatmul.mubr.bf16.gmra.mxu0 %v3682
    %v5341 = vpop.f32.mrf.mxu0
    %v5342 = vadd.f32 %v4000, %v5341
    %v5343 = vpop.f32.mrf.mxu0
    %v5344 = vadd.f32 %v4004, %v5343
    %v5345 = vpop.f32.mrf.mxu0
    %v5346 = vadd.f32 %v4000, %v5345
    %v5347 = vpop.f32.mrf.mxu0
    %v5348 = vadd.f32 %v4004, %v5347
    %5349 = vmatprep.mubr.bf16.mxu0 %v3691
    %5350 = vmatmul.mubr.bf16.gmra.mxu0 %v3690
    %v5351 = vpop.f32.mrf.mxu0
    %v5352 = vadd.f32 %v4000, %v5351
    %v5353 = vpop.f32.mrf.mxu0
    %v5354 = vadd.f32 %v4004, %v5353
    %v5355 = vpop.f32.mrf.mxu0
    %v5356 = vadd.f32 %v4000, %v5355
    %v5357 = vpop.f32.mrf.mxu0
    %v5358 = vadd.f32 %v4004, %v5357
    %5359 = vmatprep.mubr.bf16.mxu0 %v3699
    %5360 = vmatmul.mubr.bf16.gmra.mxu0 %v3698
    %v5361 = vpop.f32.mrf.mxu0
    %v5362 = vadd.f32 %v4000, %v5361
    %v5363 = vpop.f32.mrf.mxu0
    %v5364 = vadd.f32 %v4004, %v5363
    %v5365 = vpop.f32.mrf.mxu0
    %v5366 = vadd.f32 %v4000, %v5365
    %v5367 = vpop.f32.mrf.mxu0
    %v5368 = vadd.f32 %v4004, %v5367
    %5369 = vmatprep.mubr.bf16.mxu0 %v3707
    %5370 = vmatmul.mubr.bf16.gmra.mxu0 %v3706
    %v5371 = vpop.f32.mrf.mxu0
    %v5372 = vadd.f32 %v4000, %v5371
    %v5373 = vpop.f32.mrf.mxu0
    %v5374 = vadd.f32 %v4004, %v5373
    %v5375 = vpop.f32.mrf.mxu0
    %v5376 = vadd.f32 %v4000, %v5375
    %v5377 = vpop.f32.mrf.mxu0
    %v5378 = vadd.f32 %v4004, %v5377
    %5379 = vmatprep.mubr.bf16.mxu0 %v3715
    %5380 = vmatmul.mubr.bf16.gmra.mxu0 %v3714
    %v5381 = vpop.f32.mrf.mxu0
    %v5382 = vadd.f32 %v4000, %v5381
    %v5383 = vpop.f32.mrf.mxu0
    %v5384 = vadd.f32 %v4004, %v5383
    %v5385 = vpop.f32.mrf.mxu0
    %v5386 = vadd.f32 %v4000, %v5385
    %v5387 = vpop.f32.mrf.mxu0
    %v5388 = vadd.f32 %v4004, %v5387
    %5389 = vmatprep.mubr.bf16.mxu0 %v3723
    %5390 = vmatmul.mubr.bf16.gmra.mxu0 %v3722
    %v5391 = vpop.f32.mrf.mxu0
    %v5392 = vadd.f32 %v4000, %v5391
    %v5393 = vpop.f32.mrf.mxu0
    %v5394 = vadd.f32 %v4004, %v5393
    %v5395 = vpop.f32.mrf.mxu0
    %v5396 = vadd.f32 %v4000, %v5395
    %v5397 = vpop.f32.mrf.mxu0
    %v5398 = vadd.f32 %v4004, %v5397
    %5399 = vmatprep.mubr.bf16.mxu0 %v3731
    %5400 = vmatmul.mubr.bf16.gmra.mxu0 %v3730
    %v5401 = vpop.f32.mrf.mxu0
    %v5402 = vadd.f32 %v4000, %v5401
    %v5403 = vpop.f32.mrf.mxu0
    %v5404 = vadd.f32 %v4004, %v5403
    %v5405 = vpop.f32.mrf.mxu0
    %v5406 = vadd.f32 %v4000, %v5405
    %v5407 = vpop.f32.mrf.mxu0
    %v5408 = vadd.f32 %v4004, %v5407
    %5409 = vdwg.mxu0
    %5410 = vmatprep.subr.bf16.mxu0 %v4878
    %5411 = vmatpush1.bf16.msra.mxu0 %v4877
    %5412 = vmatprep.subr.bf16.mxu0 %v4874
    %5413 = vmatpush1.bf16.msra.mxu0 %v4873
    %5414 = vmatprep.subr.bf16.mxu0 %v4870
    %5415 = vmatpush1.bf16.msra.mxu0 %v4869
    %5416 = vmatprep.subr.bf16.mxu0 %v4866
    %5417 = vmatpush1.bf16.msra.mxu0 %v4865
    %5418 = vmatprep.subr.bf16.mxu0 %v4862
    %5419 = vmatpush1.bf16.msra.mxu0 %v4861
    %5420 = vmatprep.subr.bf16.mxu0 %v4858
    %5421 = vmatpush1.bf16.msra.mxu0 %v4857
    %5422 = vmatprep.subr.bf16.mxu0 %v4854
    %5423 = vmatpush1.bf16.msra.mxu0 %v4853
    %5424 = vmatprep.subr.bf16.mxu0 %v4850
    %5425 = vmatpush1.bf16.msra.mxu0 %v4849
    %5426 = vmatprep.subr.bf16.mxu0 %v4910
    %5427 = vmatpush2.bf16.msra.mxu0 %v4909
    %5428 = vmatprep.subr.bf16.mxu0 %v4906
    %5429 = vmatpush2.bf16.msra.mxu0 %v4905
    %5430 = vmatprep.subr.bf16.mxu0 %v4902
    %5431 = vmatpush2.bf16.msra.mxu0 %v4901
    %5432 = vmatprep.subr.bf16.mxu0 %v4898
    %5433 = vmatpush2.bf16.msra.mxu0 %v4897
    %5434 = vmatprep.subr.bf16.mxu0 %v4894
    %5435 = vmatpush2.bf16.msra.mxu0 %v4893
    %5436 = vmatprep.subr.bf16.mxu0 %v4890
    %5437 = vmatpush2.bf16.msra.mxu0 %v4889
    %5438 = vmatprep.subr.bf16.mxu0 %v4886
    %5439 = vmatpush2.bf16.msra.mxu0 %v4885
    %5440 = vmatprep.subr.bf16.mxu0 %v4882
    %5441 = vmatpush2.bf16.msra.mxu0 %v4881
    %5442 = vmatprep.mubr.bf16.mxu0 %v3677
    %5443 = vmatmul.mubr.bf16.gmra.mxu0 %v3676
    %v5444 = vpop.f32.mrf.mxu0
    %v5445 = vadd.f32 %v5332, %v5444
    %v5446 = vpop.f32.mrf.mxu0
    %v5447 = vadd.f32 %v5334, %v5446
    %v5448 = vpop.f32.mrf.mxu0
    %v5449 = vadd.f32 %v5336, %v5448
    %v5450 = vpop.f32.mrf.mxu0
    %v5451 = vadd.f32 %v5338, %v5450
    %5452 = vmatprep.mubr.bf16.mxu0 %v3685
    %5453 = vmatmul.mubr.bf16.gmra.mxu0 %v3684
    %v5454 = vpop.f32.mrf.mxu0
    %v5455 = vadd.f32 %v5342, %v5454
    %v5456 = vpop.f32.mrf.mxu0
    %v5457 = vadd.f32 %v5344, %v5456
    %v5458 = vpop.f32.mrf.mxu0
    %v5459 = vadd.f32 %v5346, %v5458
    %v5460 = vpop.f32.mrf.mxu0
    %v5461 = vadd.f32 %v5348, %v5460
    %5462 = vmatprep.mubr.bf16.mxu0 %v3693
    %5463 = vmatmul.mubr.bf16.gmra.mxu0 %v3692
    %v5464 = vpop.f32.mrf.mxu0
    %v5465 = vadd.f32 %v5352, %v5464
    %v5466 = vpop.f32.mrf.mxu0
    %v5467 = vadd.f32 %v5354, %v5466
    %v5468 = vpop.f32.mrf.mxu0
    %v5469 = vadd.f32 %v5356, %v5468
    %v5470 = vpop.f32.mrf.mxu0
    %v5471 = vadd.f32 %v5358, %v5470
    %5472 = vmatprep.mubr.bf16.mxu0 %v3701
    %5473 = vmatmul.mubr.bf16.gmra.mxu0 %v3700
    %v5474 = vpop.f32.mrf.mxu0
    %v5475 = vadd.f32 %v5362, %v5474
    %v5476 = vpop.f32.mrf.mxu0
    %v5477 = vadd.f32 %v5364, %v5476
    %v5478 = vpop.f32.mrf.mxu0
    %v5479 = vadd.f32 %v5366, %v5478
    %v5480 = vpop.f32.mrf.mxu0
    %v5481 = vadd.f32 %v5368, %v5480
    %5482 = vmatprep.mubr.bf16.mxu0 %v3709
    %5483 = vmatmul.mubr.bf16.gmra.mxu0 %v3708
    %v5484 = vpop.f32.mrf.mxu0
    %v5485 = vadd.f32 %v5372, %v5484
    %v5486 = vpop.f32.mrf.mxu0
    %v5487 = vadd.f32 %v5374, %v5486
    %v5488 = vpop.f32.mrf.mxu0
    %v5489 = vadd.f32 %v5376, %v5488
    %v5490 = vpop.f32.mrf.mxu0
    %v5491 = vadd.f32 %v5378, %v5490
    %5492 = vmatprep.mubr.bf16.mxu0 %v3717
    %5493 = vmatmul.mubr.bf16.gmra.mxu0 %v3716
    %v5494 = vpop.f32.mrf.mxu0
    %v5495 = vadd.f32 %v5382, %v5494
    %v5496 = vpop.f32.mrf.mxu0
    %v5497 = vadd.f32 %v5384, %v5496
    %v5498 = vpop.f32.mrf.mxu0
    %v5499 = vadd.f32 %v5386, %v5498
    %v5500 = vpop.f32.mrf.mxu0
    %v5501 = vadd.f32 %v5388, %v5500
    %5502 = vmatprep.mubr.bf16.mxu0 %v3725
    %5503 = vmatmul.mubr.bf16.gmra.mxu0 %v3724
    %v5504 = vpop.f32.mrf.mxu0
    %v5505 = vadd.f32 %v5392, %v5504
    %v5506 = vpop.f32.mrf.mxu0
    %v5507 = vadd.f32 %v5394, %v5506
    %v5508 = vpop.f32.mrf.mxu0
    %v5509 = vadd.f32 %v5396, %v5508
    %v5510 = vpop.f32.mrf.mxu0
    %v5511 = vadd.f32 %v5398, %v5510
    %5512 = vmatprep.mubr.bf16.mxu0 %v3733
    %5513 = vmatmul.mubr.bf16.gmra.mxu0 %v3732
    %v5514 = vpop.f32.mrf.mxu0
    %v5515 = vadd.f32 %v5402, %v5514
    %v5516 = vpop.f32.mrf.mxu0
    %v5517 = vadd.f32 %v5404, %v5516
    %v5518 = vpop.f32.mrf.mxu0
    %v5519 = vadd.f32 %v5406, %v5518
    %v5520 = vpop.f32.mrf.mxu0
    %v5521 = vadd.f32 %v5408, %v5520
    %5522 = vdwg.mxu0
    %5523 = vmatprep.subr.bf16.mxu0 %v4942
    %5524 = vmatpush1.bf16.msra.mxu0 %v4941
    %5525 = vmatprep.subr.bf16.mxu0 %v4938
    %5526 = vmatpush1.bf16.msra.mxu0 %v4937
    %5527 = vmatprep.subr.bf16.mxu0 %v4934
    %5528 = vmatpush1.bf16.msra.mxu0 %v4933
    %5529 = vmatprep.subr.bf16.mxu0 %v4930
    %5530 = vmatpush1.bf16.msra.mxu0 %v4929
    %5531 = vmatprep.subr.bf16.mxu0 %v4926
    %5532 = vmatpush1.bf16.msra.mxu0 %v4925
    %5533 = vmatprep.subr.bf16.mxu0 %v4922
    %5534 = vmatpush1.bf16.msra.mxu0 %v4921
    %5535 = vmatprep.subr.bf16.mxu0 %v4918
    %5536 = vmatpush1.bf16.msra.mxu0 %v4917
    %5537 = vmatprep.subr.bf16.mxu0 %v4914
    %5538 = vmatpush1.bf16.msra.mxu0 %v4913
    %5539 = vmatprep.subr.bf16.mxu0 %v4974
    %5540 = vmatpush2.bf16.msra.mxu0 %v4973
    %5541 = vmatprep.subr.bf16.mxu0 %v4970
    %5542 = vmatpush2.bf16.msra.mxu0 %v4969
    %5543 = vmatprep.subr.bf16.mxu0 %v4966
    %5544 = vmatpush2.bf16.msra.mxu0 %v4965
    %5545 = vmatprep.subr.bf16.mxu0 %v4962
    %5546 = vmatpush2.bf16.msra.mxu0 %v4961
    %5547 = vmatprep.subr.bf16.mxu0 %v4958
    %5548 = vmatpush2.bf16.msra.mxu0 %v4957
    %5549 = vmatprep.subr.bf16.mxu0 %v4954
    %5550 = vmatpush2.bf16.msra.mxu0 %v4953
    %5551 = vmatprep.subr.bf16.mxu0 %v4950
    %5552 = vmatpush2.bf16.msra.mxu0 %v4949
    %5553 = vmatprep.subr.bf16.mxu0 %v4946
    %5554 = vmatpush2.bf16.msra.mxu0 %v4945
    %5555 = vmatprep.mubr.bf16.mxu0 %v3679
    %5556 = vmatmul.mubr.bf16.gmra.mxu0 %v3678
    %v5557 = vpop.f32.mrf.mxu0
    %v5558 = vadd.f32 %v5445, %v5557
    %v5559 = vpop.f32.mrf.mxu0
    %v5560 = vadd.f32 %v5447, %v5559
    %v5561 = vpop.f32.mrf.mxu0
    %v5562 = vadd.f32 %v5449, %v5561
    %v5563 = vpop.f32.mrf.mxu0
    %v5564 = vadd.f32 %v5451, %v5563
    %5565 = vmatprep.mubr.bf16.mxu0 %v3687
    %5566 = vmatmul.mubr.bf16.gmra.mxu0 %v3686
    %v5567 = vpop.f32.mrf.mxu0
    %v5568 = vadd.f32 %v5455, %v5567
    %v5569 = vpop.f32.mrf.mxu0
    %v5570 = vadd.f32 %v5457, %v5569
    %v5571 = vpop.f32.mrf.mxu0
    %v5572 = vadd.f32 %v5459, %v5571
    %v5573 = vpop.f32.mrf.mxu0
    %v5574 = vadd.f32 %v5461, %v5573
    %5575 = vmatprep.mubr.bf16.mxu0 %v3695
    %5576 = vmatmul.mubr.bf16.gmra.mxu0 %v3694
    %v5577 = vpop.f32.mrf.mxu0
    %v5578 = vadd.f32 %v5465, %v5577
    %v5579 = vpop.f32.mrf.mxu0
    %v5580 = vadd.f32 %v5467, %v5579
    %v5581 = vpop.f32.mrf.mxu0
    %v5582 = vadd.f32 %v5469, %v5581
    %v5583 = vpop.f32.mrf.mxu0
    %v5584 = vadd.f32 %v5471, %v5583
    %5585 = vmatprep.mubr.bf16.mxu0 %v3703
    %5586 = vmatmul.mubr.bf16.gmra.mxu0 %v3702
    %v5587 = vpop.f32.mrf.mxu0
    %v5588 = vadd.f32 %v5475, %v5587
    %v5589 = vpop.f32.mrf.mxu0
    %v5590 = vadd.f32 %v5477, %v5589
    %v5591 = vpop.f32.mrf.mxu0
    %v5592 = vadd.f32 %v5479, %v5591
    %v5593 = vpop.f32.mrf.mxu0
    %v5594 = vadd.f32 %v5481, %v5593
    %5595 = vmatprep.mubr.bf16.mxu0 %v3711
    %5596 = vmatmul.mubr.bf16.gmra.mxu0 %v3710
    %v5597 = vpop.f32.mrf.mxu0
    %v5598 = vadd.f32 %v5485, %v5597
    %v5599 = vpop.f32.mrf.mxu0
    %v5600 = vadd.f32 %v5487, %v5599
    %v5601 = vpop.f32.mrf.mxu0
    %v5602 = vadd.f32 %v5489, %v5601
    %v5603 = vpop.f32.mrf.mxu0
    %v5604 = vadd.f32 %v5491, %v5603
    %5605 = vmatprep.mubr.bf16.mxu0 %v3719
    %5606 = vmatmul.mubr.bf16.gmra.mxu0 %v3718
    %v5607 = vpop.f32.mrf.mxu0
    %v5608 = vadd.f32 %v5495, %v5607
    %v5609 = vpop.f32.mrf.mxu0
    %v5610 = vadd.f32 %v5497, %v5609
    %v5611 = vpop.f32.mrf.mxu0
    %v5612 = vadd.f32 %v5499, %v5611
    %v5613 = vpop.f32.mrf.mxu0
    %v5614 = vadd.f32 %v5501, %v5613
    %5615 = vmatprep.mubr.bf16.mxu0 %v3727
    %5616 = vmatmul.mubr.bf16.gmra.mxu0 %v3726
    %v5617 = vpop.f32.mrf.mxu0
    %v5618 = vadd.f32 %v5505, %v5617
    %v5619 = vpop.f32.mrf.mxu0
    %v5620 = vadd.f32 %v5507, %v5619
    %v5621 = vpop.f32.mrf.mxu0
    %v5622 = vadd.f32 %v5509, %v5621
    %v5623 = vpop.f32.mrf.mxu0
    %v5624 = vadd.f32 %v5511, %v5623
    %5625 = vmatprep.mubr.bf16.mxu0 %v3735
    %5626 = vmatmul.mubr.bf16.gmra.mxu0 %v3734
    %v5627 = vpop.f32.mrf.mxu0
    %v5628 = vadd.f32 %v5515, %v5627
    %v5629 = vpop.f32.mrf.mxu0
    %v5630 = vadd.f32 %v5517, %v5629
    %v5631 = vpop.f32.mrf.mxu0
    %v5632 = vadd.f32 %v5519, %v5631
    %v5633 = vpop.f32.mrf.mxu0
    %v5634 = vadd.f32 %v5521, %v5633
    %5635 = vdwg.mxu0
    %5636 = vmatprep.subr.bf16.mxu0 %v5006
    %5637 = vmatpush1.bf16.msra.mxu0 %v5005
    %5638 = vmatprep.subr.bf16.mxu0 %v5002
    %5639 = vmatpush1.bf16.msra.mxu0 %v5001
    %5640 = vmatprep.subr.bf16.mxu0 %v4998
    %5641 = vmatpush1.bf16.msra.mxu0 %v4997
    %5642 = vmatprep.subr.bf16.mxu0 %v4994
    %5643 = vmatpush1.bf16.msra.mxu0 %v4993
    %5644 = vmatprep.subr.bf16.mxu0 %v4990
    %5645 = vmatpush1.bf16.msra.mxu0 %v4989
    %5646 = vmatprep.subr.bf16.mxu0 %v4986
    %5647 = vmatpush1.bf16.msra.mxu0 %v4985
    %5648 = vmatprep.subr.bf16.mxu0 %v4982
    %5649 = vmatpush1.bf16.msra.mxu0 %v4981
    %5650 = vmatprep.subr.bf16.mxu0 %v4978
    %5651 = vmatpush1.bf16.msra.mxu0 %v4977
    %5652 = vmatprep.subr.bf16.mxu0 %v5038
    %5653 = vmatpush2.bf16.msra.mxu0 %v5037
    %5654 = vmatprep.subr.bf16.mxu0 %v5034
    %5655 = vmatpush2.bf16.msra.mxu0 %v5033
    %5656 = vmatprep.subr.bf16.mxu0 %v5030
    %5657 = vmatpush2.bf16.msra.mxu0 %v5029
    %5658 = vmatprep.subr.bf16.mxu0 %v5026
    %5659 = vmatpush2.bf16.msra.mxu0 %v5025
    %5660 = vmatprep.subr.bf16.mxu0 %v5022
    %5661 = vmatpush2.bf16.msra.mxu0 %v5021
    %5662 = vmatprep.subr.bf16.mxu0 %v5018
    %5663 = vmatpush2.bf16.msra.mxu0 %v5017
    %5664 = vmatprep.subr.bf16.mxu0 %v5014
    %5665 = vmatpush2.bf16.msra.mxu0 %v5013
    %5666 = vmatprep.subr.bf16.mxu0 %v5010
    %5667 = vmatpush2.bf16.msra.mxu0 %v5009
    %5668 = vmatprep.mubr.bf16.mxu0 %v3681
    %5669 = vmatmul.mubr.bf16.gmra.mxu0 %v3680
    %v5670 = vpop.f32.mrf.mxu0
    %v5671 = vadd.f32 %v5558, %v5670
    %v5672 = vpop.f32.mrf.mxu0
    %v5673 = vadd.f32 %v5560, %v5672
    %v5674 = vpop.f32.mrf.mxu0
    %v5675 = vadd.f32 %v5562, %v5674
    %v5676 = vpop.f32.mrf.mxu0
    %v5677 = vadd.f32 %v5564, %v5676
    %5678 = vmatprep.mubr.bf16.mxu0 %v3689
    %5679 = vmatmul.mubr.bf16.gmra.mxu0 %v3688
    %v5680 = vpop.f32.mrf.mxu0
    %v5681 = vadd.f32 %v5568, %v5680
    %v5682 = vpop.f32.mrf.mxu0
    %v5683 = vadd.f32 %v5570, %v5682
    %v5684 = vpop.f32.mrf.mxu0
    %v5685 = vadd.f32 %v5572, %v5684
    %v5686 = vpop.f32.mrf.mxu0
    %v5687 = vadd.f32 %v5574, %v5686
    %5688 = vmatprep.mubr.bf16.mxu0 %v3697
    %5689 = vmatmul.mubr.bf16.gmra.mxu0 %v3696
    %v5690 = vpop.f32.mrf.mxu0
    %v5691 = vadd.f32 %v5578, %v5690
    %v5692 = vpop.f32.mrf.mxu0
    %v5693 = vadd.f32 %v5580, %v5692
    %v5694 = vpop.f32.mrf.mxu0
    %v5695 = vadd.f32 %v5582, %v5694
    %v5696 = vpop.f32.mrf.mxu0
    %v5697 = vadd.f32 %v5584, %v5696
    %5698 = vmatprep.mubr.bf16.mxu0 %v3705
    %5699 = vmatmul.mubr.bf16.gmra.mxu0 %v3704
    %v5700 = vpop.f32.mrf.mxu0
    %v5701 = vadd.f32 %v5588, %v5700
    %v5702 = vpop.f32.mrf.mxu0
    %v5703 = vadd.f32 %v5590, %v5702
    %v5704 = vpop.f32.mrf.mxu0
    %v5705 = vadd.f32 %v5592, %v5704
    %v5706 = vpop.f32.mrf.mxu0
    %v5707 = vadd.f32 %v5594, %v5706
    %5708 = vmatprep.mubr.bf16.mxu0 %v3713
    %5709 = vmatmul.mubr.bf16.gmra.mxu0 %v3712
    %v5710 = vpop.f32.mrf.mxu0
    %v5711 = vadd.f32 %v5598, %v5710
    %v5712 = vpop.f32.mrf.mxu0
    %v5713 = vadd.f32 %v5600, %v5712
    %v5714 = vpop.f32.mrf.mxu0
    %v5715 = vadd.f32 %v5602, %v5714
    %v5716 = vpop.f32.mrf.mxu0
    %v5717 = vadd.f32 %v5604, %v5716
    %5718 = vmatprep.mubr.bf16.mxu0 %v3721
    %5719 = vmatmul.mubr.bf16.gmra.mxu0 %v3720
    %v5720 = vpop.f32.mrf.mxu0
    %v5721 = vadd.f32 %v5608, %v5720
    %v5722 = vpop.f32.mrf.mxu0
    %v5723 = vadd.f32 %v5610, %v5722
    %v5724 = vpop.f32.mrf.mxu0
    %v5725 = vadd.f32 %v5612, %v5724
    %v5726 = vpop.f32.mrf.mxu0
    %v5727 = vadd.f32 %v5614, %v5726
    %5728 = vmatprep.mubr.bf16.mxu0 %v3729
    %5729 = vmatmul.mubr.bf16.gmra.mxu0 %v3728
    %v5730 = vpop.f32.mrf.mxu0
    %v5731 = vadd.f32 %v5618, %v5730
    %v5732 = vpop.f32.mrf.mxu0
    %v5733 = vadd.f32 %v5620, %v5732
    %v5734 = vpop.f32.mrf.mxu0
    %v5735 = vadd.f32 %v5622, %v5734
    %v5736 = vpop.f32.mrf.mxu0
    %v5737 = vadd.f32 %v5624, %v5736
    %5738 = vmatprep.mubr.bf16.mxu0 %v3737
    %5739 = vmatmul.mubr.bf16.gmra.mxu0 %v3736
    %v5740 = vpop.f32.mrf.mxu0
    %v5741 = vadd.f32 %v5628, %v5740
    %v5742 = vpop.f32.mrf.mxu0
    %v5743 = vadd.f32 %v5630, %v5742
    %v5744 = vpop.f32.mrf.mxu0
    %v5745 = vadd.f32 %v5632, %v5744
    %v5746 = vpop.f32.mrf.mxu0
    %v5747 = vadd.f32 %v5634, %v5746
    %5748 = vdwg.mxu0
    %5749 = vmatprep.subr.bf16.mxu0 %v4816
    %5750 = vmatpush1.bf16.msra.mxu0 %v4815
    %5751 = vmatprep.subr.bf16.mxu0 %v4812
    %5752 = vmatpush1.bf16.msra.mxu0 %v4811
    %5753 = vmatprep.subr.bf16.mxu0 %v4808
    %5754 = vmatpush1.bf16.msra.mxu0 %v4807
    %5755 = vmatprep.subr.bf16.mxu0 %v4804
    %5756 = vmatpush1.bf16.msra.mxu0 %v4803
    %5757 = vmatprep.subr.bf16.mxu0 %v4800
    %5758 = vmatpush1.bf16.msra.mxu0 %v4799
    %5759 = vmatprep.subr.bf16.mxu0 %v4796
    %5760 = vmatpush1.bf16.msra.mxu0 %v4795
    %5761 = vmatprep.subr.bf16.mxu0 %v4792
    %5762 = vmatpush1.bf16.msra.mxu0 %v4791
    %5763 = vmatprep.subr.bf16.mxu0 %v4788
    %5764 = vmatpush1.bf16.msra.mxu0 %v4787
    %5765 = vmatprep.subr.bf16.mxu0 %v4848
    %5766 = vmatpush2.bf16.msra.mxu0 %v4847
    %5767 = vmatprep.subr.bf16.mxu0 %v4844
    %5768 = vmatpush2.bf16.msra.mxu0 %v4843
    %5769 = vmatprep.subr.bf16.mxu0 %v4840
    %5770 = vmatpush2.bf16.msra.mxu0 %v4839
    %5771 = vmatprep.subr.bf16.mxu0 %v4836
    %5772 = vmatpush2.bf16.msra.mxu0 %v4835
    %5773 = vmatprep.subr.bf16.mxu0 %v4832
    %5774 = vmatpush2.bf16.msra.mxu0 %v4831
    %5775 = vmatprep.subr.bf16.mxu0 %v4828
    %5776 = vmatpush2.bf16.msra.mxu0 %v4827
    %5777 = vmatprep.subr.bf16.mxu0 %v4824
    %5778 = vmatpush2.bf16.msra.mxu0 %v4823
    %5779 = vmatprep.subr.bf16.mxu0 %v4820
    %5780 = vmatpush2.bf16.msra.mxu0 %v4819
    %5781 = vmatprep.mubr.bf16.mxu0 %v3675
    %5782 = vmatmul.mubr.bf16.gmra.mxu0 %v3674
    %v5783 = vpop.f32.mrf.mxu0
    %v5784 = vadd.f32 %v4008, %v5783
    %v5785 = vpop.f32.mrf.mxu0
    %v5786 = vadd.f32 %v4012, %v5785
    %v5787 = vpop.f32.mrf.mxu0
    %v5788 = vadd.f32 %v4008, %v5787
    %v5789 = vpop.f32.mrf.mxu0
    %v5790 = vadd.f32 %v4012, %v5789
    %5791 = vmatprep.mubr.bf16.mxu0 %v3683
    %5792 = vmatmul.mubr.bf16.gmra.mxu0 %v3682
    %v5793 = vpop.f32.mrf.mxu0
    %v5794 = vadd.f32 %v4008, %v5793
    %v5795 = vpop.f32.mrf.mxu0
    %v5796 = vadd.f32 %v4012, %v5795
    %v5797 = vpop.f32.mrf.mxu0
    %v5798 = vadd.f32 %v4008, %v5797
    %v5799 = vpop.f32.mrf.mxu0
    %v5800 = vadd.f32 %v4012, %v5799
    %5801 = vmatprep.mubr.bf16.mxu0 %v3691
    %5802 = vmatmul.mubr.bf16.gmra.mxu0 %v3690
    %v5803 = vpop.f32.mrf.mxu0
    %v5804 = vadd.f32 %v4008, %v5803
    %v5805 = vpop.f32.mrf.mxu0
    %v5806 = vadd.f32 %v4012, %v5805
    %v5807 = vpop.f32.mrf.mxu0
    %v5808 = vadd.f32 %v4008, %v5807
    %v5809 = vpop.f32.mrf.mxu0
    %v5810 = vadd.f32 %v4012, %v5809
    %5811 = vmatprep.mubr.bf16.mxu0 %v3699
    %5812 = vmatmul.mubr.bf16.gmra.mxu0 %v3698
    %v5813 = vpop.f32.mrf.mxu0
    %v5814 = vadd.f32 %v4008, %v5813
    %v5815 = vpop.f32.mrf.mxu0
    %v5816 = vadd.f32 %v4012, %v5815
    %v5817 = vpop.f32.mrf.mxu0
    %v5818 = vadd.f32 %v4008, %v5817
    %v5819 = vpop.f32.mrf.mxu0
    %v5820 = vadd.f32 %v4012, %v5819
    %5821 = vmatprep.mubr.bf16.mxu0 %v3707
    %5822 = vmatmul.mubr.bf16.gmra.mxu0 %v3706
    %v5823 = vpop.f32.mrf.mxu0
    %v5824 = vadd.f32 %v4008, %v5823
    %v5825 = vpop.f32.mrf.mxu0
    %v5826 = vadd.f32 %v4012, %v5825
    %v5827 = vpop.f32.mrf.mxu0
    %v5828 = vadd.f32 %v4008, %v5827
    %v5829 = vpop.f32.mrf.mxu0
    %v5830 = vadd.f32 %v4012, %v5829
    %5831 = vmatprep.mubr.bf16.mxu0 %v3715
    %5832 = vmatmul.mubr.bf16.gmra.mxu0 %v3714
    %v5833 = vpop.f32.mrf.mxu0
    %v5834 = vadd.f32 %v4008, %v5833
    %v5835 = vpop.f32.mrf.mxu0
    %v5836 = vadd.f32 %v4012, %v5835
    %v5837 = vpop.f32.mrf.mxu0
    %v5838 = vadd.f32 %v4008, %v5837
    %v5839 = vpop.f32.mrf.mxu0
    %v5840 = vadd.f32 %v4012, %v5839
    %5841 = vmatprep.mubr.bf16.mxu0 %v3723
    %5842 = vmatmul.mubr.bf16.gmra.mxu0 %v3722
    %v5843 = vpop.f32.mrf.mxu0
    %v5844 = vadd.f32 %v4008, %v5843
    %v5845 = vpop.f32.mrf.mxu0
    %v5846 = vadd.f32 %v4012, %v5845
    %v5847 = vpop.f32.mrf.mxu0
    %v5848 = vadd.f32 %v4008, %v5847
    %v5849 = vpop.f32.mrf.mxu0
    %v5850 = vadd.f32 %v4012, %v5849
    %5851 = vmatprep.mubr.bf16.mxu0 %v3731
    %5852 = vmatmul.mubr.bf16.gmra.mxu0 %v3730
    %v5853 = vpop.f32.mrf.mxu0
    %v5854 = vadd.f32 %v4008, %v5853
    %v5855 = vpop.f32.mrf.mxu0
    %v5856 = vadd.f32 %v4012, %v5855
    %v5857 = vpop.f32.mrf.mxu0
    %v5858 = vadd.f32 %v4008, %v5857
    %v5859 = vpop.f32.mrf.mxu0
    %v5860 = vadd.f32 %v4012, %v5859
    %5861 = vdwg.mxu0
    %5862 = vmatprep.subr.bf16.mxu0 %v4880
    %5863 = vmatpush1.bf16.msra.mxu0 %v4879
    %5864 = vmatprep.subr.bf16.mxu0 %v4876
    %5865 = vmatpush1.bf16.msra.mxu0 %v4875
    %5866 = vmatprep.subr.bf16.mxu0 %v4872
    %5867 = vmatpush1.bf16.msra.mxu0 %v4871
    %5868 = vmatprep.subr.bf16.mxu0 %v4868
    %5869 = vmatpush1.bf16.msra.mxu0 %v4867
    %5870 = vmatprep.subr.bf16.mxu0 %v4864
    %5871 = vmatpush1.bf16.msra.mxu0 %v4863
    %5872 = vmatprep.subr.bf16.mxu0 %v4860
    %5873 = vmatpush1.bf16.msra.mxu0 %v4859
    %5874 = vmatprep.subr.bf16.mxu0 %v4856
    %5875 = vmatpush1.bf16.msra.mxu0 %v4855
    %5876 = vmatprep.subr.bf16.mxu0 %v4852
    %5877 = vmatpush1.bf16.msra.mxu0 %v4851
    %5878 = vmatprep.subr.bf16.mxu0 %v4912
    %5879 = vmatpush2.bf16.msra.mxu0 %v4911
    %5880 = vmatprep.subr.bf16.mxu0 %v4908
    %5881 = vmatpush2.bf16.msra.mxu0 %v4907
    %5882 = vmatprep.subr.bf16.mxu0 %v4904
    %5883 = vmatpush2.bf16.msra.mxu0 %v4903
    %5884 = vmatprep.subr.bf16.mxu0 %v4900
    %5885 = vmatpush2.bf16.msra.mxu0 %v4899
    %5886 = vmatprep.subr.bf16.mxu0 %v4896
    %5887 = vmatpush2.bf16.msra.mxu0 %v4895
    %5888 = vmatprep.subr.bf16.mxu0 %v4892
    %5889 = vmatpush2.bf16.msra.mxu0 %v4891
    %5890 = vmatprep.subr.bf16.mxu0 %v4888
    %5891 = vmatpush2.bf16.msra.mxu0 %v4887
    %5892 = vmatprep.subr.bf16.mxu0 %v4884
    %5893 = vmatpush2.bf16.msra.mxu0 %v4883
    %5894 = vmatprep.mubr.bf16.mxu0 %v3677
    %5895 = vmatmul.mubr.bf16.gmra.mxu0 %v3676
    %v5896 = vpop.f32.mrf.mxu0
    %v5897 = vadd.f32 %v5784, %v5896
    %v5898 = vpop.f32.mrf.mxu0
    %v5899 = vadd.f32 %v5786, %v5898
    %v5900 = vpop.f32.mrf.mxu0
    %v5901 = vadd.f32 %v5788, %v5900
    %v5902 = vpop.f32.mrf.mxu0
    %v5903 = vadd.f32 %v5790, %v5902
    %5904 = vmatprep.mubr.bf16.mxu0 %v3685
    %5905 = vmatmul.mubr.bf16.gmra.mxu0 %v3684
    %v5906 = vpop.f32.mrf.mxu0
    %v5907 = vadd.f32 %v5794, %v5906
    %v5908 = vpop.f32.mrf.mxu0
    %v5909 = vadd.f32 %v5796, %v5908
    %v5910 = vpop.f32.mrf.mxu0
    %v5911 = vadd.f32 %v5798, %v5910
    %v5912 = vpop.f32.mrf.mxu0
    %v5913 = vadd.f32 %v5800, %v5912
    %5914 = vmatprep.mubr.bf16.mxu0 %v3693
    %5915 = vmatmul.mubr.bf16.gmra.mxu0 %v3692
    %v5916 = vpop.f32.mrf.mxu0
    %v5917 = vadd.f32 %v5804, %v5916
    %v5918 = vpop.f32.mrf.mxu0
    %v5919 = vadd.f32 %v5806, %v5918
    %v5920 = vpop.f32.mrf.mxu0
    %v5921 = vadd.f32 %v5808, %v5920
    %v5922 = vpop.f32.mrf.mxu0
    %v5923 = vadd.f32 %v5810, %v5922
    %5924 = vmatprep.mubr.bf16.mxu0 %v3701
    %5925 = vmatmul.mubr.bf16.gmra.mxu0 %v3700
    %v5926 = vpop.f32.mrf.mxu0
    %v5927 = vadd.f32 %v5814, %v5926
    %v5928 = vpop.f32.mrf.mxu0
    %v5929 = vadd.f32 %v5816, %v5928
    %v5930 = vpop.f32.mrf.mxu0
    %v5931 = vadd.f32 %v5818, %v5930
    %v5932 = vpop.f32.mrf.mxu0
    %v5933 = vadd.f32 %v5820, %v5932
    %5934 = vmatprep.mubr.bf16.mxu0 %v3709
    %5935 = vmatmul.mubr.bf16.gmra.mxu0 %v3708
    %v5936 = vpop.f32.mrf.mxu0
    %v5937 = vadd.f32 %v5824, %v5936
    %v5938 = vpop.f32.mrf.mxu0
    %v5939 = vadd.f32 %v5826, %v5938
    %v5940 = vpop.f32.mrf.mxu0
    %v5941 = vadd.f32 %v5828, %v5940
    %v5942 = vpop.f32.mrf.mxu0
    %v5943 = vadd.f32 %v5830, %v5942
    %5944 = vmatprep.mubr.bf16.mxu0 %v3717
    %5945 = vmatmul.mubr.bf16.gmra.mxu0 %v3716
    %v5946 = vpop.f32.mrf.mxu0
    %v5947 = vadd.f32 %v5834, %v5946
    %v5948 = vpop.f32.mrf.mxu0
    %v5949 = vadd.f32 %v5836, %v5948
    %v5950 = vpop.f32.mrf.mxu0
    %v5951 = vadd.f32 %v5838, %v5950
    %v5952 = vpop.f32.mrf.mxu0
    %v5953 = vadd.f32 %v5840, %v5952
    %5954 = vmatprep.mubr.bf16.mxu0 %v3725
    %5955 = vmatmul.mubr.bf16.gmra.mxu0 %v3724
    %v5956 = vpop.f32.mrf.mxu0
    %v5957 = vadd.f32 %v5844, %v5956
    %v5958 = vpop.f32.mrf.mxu0
    %v5959 = vadd.f32 %v5846, %v5958
    %v5960 = vpop.f32.mrf.mxu0
    %v5961 = vadd.f32 %v5848, %v5960
    %v5962 = vpop.f32.mrf.mxu0
    %v5963 = vadd.f32 %v5850, %v5962
    %5964 = vmatprep.mubr.bf16.mxu0 %v3733
    %5965 = vmatmul.mubr.bf16.gmra.mxu0 %v3732
    %v5966 = vpop.f32.mrf.mxu0
    %v5967 = vadd.f32 %v5854, %v5966
    %v5968 = vpop.f32.mrf.mxu0
    %v5969 = vadd.f32 %v5856, %v5968
    %v5970 = vpop.f32.mrf.mxu0
    %v5971 = vadd.f32 %v5858, %v5970
    %v5972 = vpop.f32.mrf.mxu0
    %v5973 = vadd.f32 %v5860, %v5972
    %5974 = vdwg.mxu0
    %5975 = vmatprep.subr.bf16.mxu0 %v4944
    %5976 = vmatpush1.bf16.msra.mxu0 %v4943
    %5977 = vmatprep.subr.bf16.mxu0 %v4940
    %5978 = vmatpush1.bf16.msra.mxu0 %v4939
    %5979 = vmatprep.subr.bf16.mxu0 %v4936
    %5980 = vmatpush1.bf16.msra.mxu0 %v4935
    %5981 = vmatprep.subr.bf16.mxu0 %v4932
    %5982 = vmatpush1.bf16.msra.mxu0 %v4931
    %5983 = vmatprep.subr.bf16.mxu0 %v4928
    %5984 = vmatpush1.bf16.msra.mxu0 %v4927
    %5985 = vmatprep.subr.bf16.mxu0 %v4924
    %5986 = vmatpush1.bf16.msra.mxu0 %v4923
    %5987 = vmatprep.subr.bf16.mxu0 %v4920
    %5988 = vmatpush1.bf16.msra.mxu0 %v4919
    %5989 = vmatprep.subr.bf16.mxu0 %v4916
    %5990 = vmatpush1.bf16.msra.mxu0 %v4915
    %5991 = vmatprep.subr.bf16.mxu0 %v4976
    %5992 = vmatpush2.bf16.msra.mxu0 %v4975
    %5993 = vmatprep.subr.bf16.mxu0 %v4972
    %5994 = vmatpush2.bf16.msra.mxu0 %v4971
    %5995 = vmatprep.subr.bf16.mxu0 %v4968
    %5996 = vmatpush2.bf16.msra.mxu0 %v4967
    %5997 = vmatprep.subr.bf16.mxu0 %v4964
    %5998 = vmatpush2.bf16.msra.mxu0 %v4963
    %5999 = vmatprep.subr.bf16.mxu0 %v4960
    %6000 = vmatpush2.bf16.msra.mxu0 %v4959
    %6001 = vmatprep.subr.bf16.mxu0 %v4956
    %6002 = vmatpush2.bf16.msra.mxu0 %v4955
    %6003 = vmatprep.subr.bf16.mxu0 %v4952
    %6004 = vmatpush2.bf16.msra.mxu0 %v4951
    %6005 = vmatprep.subr.bf16.mxu0 %v4948
    %6006 = vmatpush2.bf16.msra.mxu0 %v4947
    %6007 = vmatprep.mubr.bf16.mxu0 %v3679
    %6008 = vmatmul.mubr.bf16.gmra.mxu0 %v3678
    %v6009 = vpop.f32.mrf.mxu0
    %v6010 = vadd.f32 %v5897, %v6009
    %v6011 = vpop.f32.mrf.mxu0
    %v6012 = vadd.f32 %v5899, %v6011
    %v6013 = vpop.f32.mrf.mxu0
    %v6014 = vadd.f32 %v5901, %v6013
    %v6015 = vpop.f32.mrf.mxu0
    %v6016 = vadd.f32 %v5903, %v6015
    %6017 = vmatprep.mubr.bf16.mxu0 %v3687
    %6018 = vmatmul.mubr.bf16.gmra.mxu0 %v3686
    %v6019 = vpop.f32.mrf.mxu0
    %v6020 = vadd.f32 %v5907, %v6019
    %v6021 = vpop.f32.mrf.mxu0
    %v6022 = vadd.f32 %v5909, %v6021
    %v6023 = vpop.f32.mrf.mxu0
    %v6024 = vadd.f32 %v5911, %v6023
    %v6025 = vpop.f32.mrf.mxu0
    %v6026 = vadd.f32 %v5913, %v6025
    %6027 = vmatprep.mubr.bf16.mxu0 %v3695
    %6028 = vmatmul.mubr.bf16.gmra.mxu0 %v3694
    %v6029 = vpop.f32.mrf.mxu0
    %v6030 = vadd.f32 %v5917, %v6029
    %v6031 = vpop.f32.mrf.mxu0
    %v6032 = vadd.f32 %v5919, %v6031
    %v6033 = vpop.f32.mrf.mxu0
    %v6034 = vadd.f32 %v5921, %v6033
    %v6035 = vpop.f32.mrf.mxu0
    %v6036 = vadd.f32 %v5923, %v6035
    %6037 = vmatprep.mubr.bf16.mxu0 %v3703
    %6038 = vmatmul.mubr.bf16.gmra.mxu0 %v3702
    %v6039 = vpop.f32.mrf.mxu0
    %v6040 = vadd.f32 %v5927, %v6039
    %v6041 = vpop.f32.mrf.mxu0
    %v6042 = vadd.f32 %v5929, %v6041
    %v6043 = vpop.f32.mrf.mxu0
    %v6044 = vadd.f32 %v5931, %v6043
    %v6045 = vpop.f32.mrf.mxu0
    %v6046 = vadd.f32 %v5933, %v6045
    %6047 = vmatprep.mubr.bf16.mxu0 %v3711
    %6048 = vmatmul.mubr.bf16.gmra.mxu0 %v3710
    %v6049 = vpop.f32.mrf.mxu0
    %v6050 = vadd.f32 %v5937, %v6049
    %v6051 = vpop.f32.mrf.mxu0
    %v6052 = vadd.f32 %v5939, %v6051
    %v6053 = vpop.f32.mrf.mxu0
    %v6054 = vadd.f32 %v5941, %v6053
    %v6055 = vpop.f32.mrf.mxu0
    %v6056 = vadd.f32 %v5943, %v6055
    %6057 = vmatprep.mubr.bf16.mxu0 %v3719
    %6058 = vmatmul.mubr.bf16.gmra.mxu0 %v3718
    %v6059 = vpop.f32.mrf.mxu0
    %v6060 = vadd.f32 %v5947, %v6059
    %v6061 = vpop.f32.mrf.mxu0
    %v6062 = vadd.f32 %v5949, %v6061
    %v6063 = vpop.f32.mrf.mxu0
    %v6064 = vadd.f32 %v5951, %v6063
    %v6065 = vpop.f32.mrf.mxu0
    %v6066 = vadd.f32 %v5953, %v6065
    %6067 = vmatprep.mubr.bf16.mxu0 %v3727
    %6068 = vmatmul.mubr.bf16.gmra.mxu0 %v3726
    %v6069 = vpop.f32.mrf.mxu0
    %v6070 = vadd.f32 %v5957, %v6069
    %v6071 = vpop.f32.mrf.mxu0
    %v6072 = vadd.f32 %v5959, %v6071
    %v6073 = vpop.f32.mrf.mxu0
    %v6074 = vadd.f32 %v5961, %v6073
    %v6075 = vpop.f32.mrf.mxu0
    %v6076 = vadd.f32 %v5963, %v6075
    %6077 = vmatprep.mubr.bf16.mxu0 %v3735
    %6078 = vmatmul.mubr.bf16.gmra.mxu0 %v3734
    %v6079 = vpop.f32.mrf.mxu0
    %v6080 = vadd.f32 %v5967, %v6079
    %v6081 = vpop.f32.mrf.mxu0
    %v6082 = vadd.f32 %v5969, %v6081
    %v6083 = vpop.f32.mrf.mxu0
    %v6084 = vadd.f32 %v5971, %v6083
    %v6085 = vpop.f32.mrf.mxu0
    %v6086 = vadd.f32 %v5973, %v6085
    %6087 = vdwg.mxu0
    %6088 = vmatprep.subr.bf16.mxu0 %v5008
    %6089 = vmatpush1.bf16.msra.mxu0 %v5007
    %6090 = vmatprep.subr.bf16.mxu0 %v5004
    %6091 = vmatpush1.bf16.msra.mxu0 %v5003
    %6092 = vmatprep.subr.bf16.mxu0 %v5000
    %6093 = vmatpush1.bf16.msra.mxu0 %v4999
    %6094 = vmatprep.subr.bf16.mxu0 %v4996
    %6095 = vmatpush1.bf16.msra.mxu0 %v4995
    %6096 = vmatprep.subr.bf16.mxu0 %v4992
    %6097 = vmatpush1.bf16.msra.mxu0 %v4991
    %6098 = vmatprep.subr.bf16.mxu0 %v4988
    %6099 = vmatpush1.bf16.msra.mxu0 %v4987
    %6100 = vmatprep.subr.bf16.mxu0 %v4984
    %6101 = vmatpush1.bf16.msra.mxu0 %v4983
    %6102 = vmatprep.subr.bf16.mxu0 %v4980
    %6103 = vmatpush1.bf16.msra.mxu0 %v4979
    %6104 = vmatprep.subr.bf16.mxu0 %v5040
    %6105 = vmatpush2.bf16.msra.mxu0 %v5039
    %6106 = vmatprep.subr.bf16.mxu0 %v5036
    %6107 = vmatpush2.bf16.msra.mxu0 %v5035
    %6108 = vmatprep.subr.bf16.mxu0 %v5032
    %6109 = vmatpush2.bf16.msra.mxu0 %v5031
    %6110 = vmatprep.subr.bf16.mxu0 %v5028
    %6111 = vmatpush2.bf16.msra.mxu0 %v5027
    %6112 = vmatprep.subr.bf16.mxu0 %v5024
    %6113 = vmatpush2.bf16.msra.mxu0 %v5023
    %6114 = vmatprep.subr.bf16.mxu0 %v5020
    %6115 = vmatpush2.bf16.msra.mxu0 %v5019
    %6116 = vmatprep.subr.bf16.mxu0 %v5016
    %6117 = vmatpush2.bf16.msra.mxu0 %v5015
    %6118 = vmatprep.subr.bf16.mxu0 %v5012
    %6119 = vmatpush2.bf16.msra.mxu0 %v5011
    %6120 = vmatprep.mubr.bf16.mxu0 %v3681
    %6121 = vmatmul.mubr.bf16.gmra.mxu0 %v3680
    %v6122 = vpop.f32.mrf.mxu0
    %v6123 = vadd.f32 %v6010, %v6122
    %v6124 = vpop.f32.mrf.mxu0
    %v6125 = vadd.f32 %v6012, %v6124
    %v6126 = vpop.f32.mrf.mxu0
    %v6127 = vadd.f32 %v6014, %v6126
    %v6128 = vpop.f32.mrf.mxu0
    %v6129 = vadd.f32 %v6016, %v6128
    %6130 = vmatprep.mubr.bf16.mxu0 %v3689
    %6131 = vmatmul.mubr.bf16.gmra.mxu0 %v3688
    %v6132 = vpop.f32.mrf.mxu0
    %v6133 = vadd.f32 %v6020, %v6132
    %v6134 = vpop.f32.mrf.mxu0
    %v6135 = vadd.f32 %v6022, %v6134
    %v6136 = vpop.f32.mrf.mxu0
    %v6137 = vadd.f32 %v6024, %v6136
    %v6138 = vpop.f32.mrf.mxu0
    %v6139 = vadd.f32 %v6026, %v6138
    %6140 = vmatprep.mubr.bf16.mxu0 %v3697
    %6141 = vmatmul.mubr.bf16.gmra.mxu0 %v3696
    %v6142 = vpop.f32.mrf.mxu0
    %v6143 = vadd.f32 %v6030, %v6142
    %v6144 = vpop.f32.mrf.mxu0
    %v6145 = vadd.f32 %v6032, %v6144
    %v6146 = vpop.f32.mrf.mxu0
    %v6147 = vadd.f32 %v6034, %v6146
    %v6148 = vpop.f32.mrf.mxu0
    %v6149 = vadd.f32 %v6036, %v6148
    %6150 = vmatprep.mubr.bf16.mxu0 %v3705
    %6151 = vmatmul.mubr.bf16.gmra.mxu0 %v3704
    %v6152 = vpop.f32.mrf.mxu0
    %v6153 = vadd.f32 %v6040, %v6152
    %v6154 = vpop.f32.mrf.mxu0
    %v6155 = vadd.f32 %v6042, %v6154
    %v6156 = vpop.f32.mrf.mxu0
    %v6157 = vadd.f32 %v6044, %v6156
    %v6158 = vpop.f32.mrf.mxu0
    %v6159 = vadd.f32 %v6046, %v6158
    %6160 = vmatprep.mubr.bf16.mxu0 %v3713
    %6161 = vmatmul.mubr.bf16.gmra.mxu0 %v3712
    %v6162 = vpop.f32.mrf.mxu0
    %v6163 = vadd.f32 %v6050, %v6162
    %v6164 = vpop.f32.mrf.mxu0
    %v6165 = vadd.f32 %v6052, %v6164
    %v6166 = vpop.f32.mrf.mxu0
    %v6167 = vadd.f32 %v6054, %v6166
    %v6168 = vpop.f32.mrf.mxu0
    %v6169 = vadd.f32 %v6056, %v6168
    %6170 = vmatprep.mubr.bf16.mxu0 %v3721
    %6171 = vmatmul.mubr.bf16.gmra.mxu0 %v3720
    %v6172 = vpop.f32.mrf.mxu0
    %v6173 = vadd.f32 %v6060, %v6172
    %v6174 = vpop.f32.mrf.mxu0
    %v6175 = vadd.f32 %v6062, %v6174
    %v6176 = vpop.f32.mrf.mxu0
    %v6177 = vadd.f32 %v6064, %v6176
    %v6178 = vpop.f32.mrf.mxu0
    %v6179 = vadd.f32 %v6066, %v6178
    %6180 = vmatprep.mubr.bf16.mxu0 %v3729
    %6181 = vmatmul.mubr.bf16.gmra.mxu0 %v3728
    %v6182 = vpop.f32.mrf.mxu0
    %v6183 = vadd.f32 %v6070, %v6182
    %v6184 = vpop.f32.mrf.mxu0
    %v6185 = vadd.f32 %v6072, %v6184
    %v6186 = vpop.f32.mrf.mxu0
    %v6187 = vadd.f32 %v6074, %v6186
    %v6188 = vpop.f32.mrf.mxu0
    %v6189 = vadd.f32 %v6076, %v6188
    %6190 = vmatprep.mubr.bf16.mxu0 %v3737
    %6191 = vmatmul.mubr.bf16.gmra.mxu0 %v3736
    %v6192 = vpop.f32.mrf.mxu0
    %v6193 = vadd.f32 %v6080, %v6192
    %v6194 = vpop.f32.mrf.mxu0
    %v6195 = vadd.f32 %v6082, %v6194
    %v6196 = vpop.f32.mrf.mxu0
    %v6197 = vadd.f32 %v6084, %v6196
    %v6198 = vpop.f32.mrf.mxu0
    %v6199 = vadd.f32 %v6086, %v6198
    %6200 = vdwg.mxu0
    %v6201 = vmax.f32 %v5671, 0.0
    %v6202 = vmax.f32 %v5673, 0.0
    %v6203 = vmax.f32 %v6123, 0.0
    %v6204 = vmax.f32 %v6125, 0.0
    %v6205 = vmax.f32 %v5675, 0.0
    %v6206 = vmax.f32 %v5677, 0.0
    %v6207 = vmax.f32 %v6127, 0.0
    %v6208 = vmax.f32 %v6129, 0.0
    %v6209 = vmax.f32 %v5681, 0.0
    %v6210 = vmax.f32 %v5683, 0.0
    %v6211 = vmax.f32 %v6133, 0.0
    %v6212 = vmax.f32 %v6135, 0.0
    %v6213 = vmax.f32 %v5685, 0.0
    %v6214 = vmax.f32 %v5687, 0.0
    %v6215 = vmax.f32 %v6137, 0.0
    %v6216 = vmax.f32 %v6139, 0.0
    %v6217 = vmax.f32 %v5691, 0.0
    %v6218 = vmax.f32 %v5693, 0.0
    %v6219 = vmax.f32 %v6143, 0.0
    %v6220 = vmax.f32 %v6145, 0.0
    %v6221 = vmax.f32 %v5695, 0.0
    %v6222 = vmax.f32 %v5697, 0.0
    %v6223 = vmax.f32 %v6147, 0.0
    %v6224 = vmax.f32 %v6149, 0.0
    %v6225 = vmax.f32 %v5701, 0.0
    %v6226 = vmax.f32 %v5703, 0.0
    %v6227 = vmax.f32 %v6153, 0.0
    %v6228 = vmax.f32 %v6155, 0.0
    %v6229 = vmax.f32 %v5705, 0.0
    %v6230 = vmax.f32 %v5707, 0.0
    %v6231 = vmax.f32 %v6157, 0.0
    %v6232 = vmax.f32 %v6159, 0.0
    %v6233 = vmax.f32 %v5711, 0.0
    %v6234 = vmax.f32 %v5713, 0.0
    %v6235 = vmax.f32 %v6163, 0.0
    %v6236 = vmax.f32 %v6165, 0.0
    %v6237 = vmax.f32 %v5715, 0.0
    %v6238 = vmax.f32 %v5717, 0.0
    %v6239 = vmax.f32 %v6167, 0.0
    %v6240 = vmax.f32 %v6169, 0.0
    %v6241 = vmax.f32 %v5721, 0.0
    %v6242 = vmax.f32 %v5723, 0.0
    %v6243 = vmax.f32 %v6173, 0.0
    %v6244 = vmax.f32 %v6175, 0.0
    %v6245 = vmax.f32 %v5725, 0.0
    %v6246 = vmax.f32 %v5727, 0.0
    %v6247 = vmax.f32 %v6177, 0.0
    %v6248 = vmax.f32 %v6179, 0.0
    %v6249 = vmax.f32 %v5731, 0.0
    %v6250 = vmax.f32 %v5733, 0.0
    %v6251 = vmax.f32 %v6183, 0.0
    %v6252 = vmax.f32 %v6185, 0.0
    %v6253 = vmax.f32 %v5735, 0.0
    %v6254 = vmax.f32 %v5737, 0.0
    %v6255 = vmax.f32 %v6187, 0.0
    %v6256 = vmax.f32 %v6189, 0.0
    %v6257 = vmax.f32 %v5741, 0.0
    %v6258 = vmax.f32 %v5743, 0.0
    %v6259 = vmax.f32 %v6193, 0.0
    %v6260 = vmax.f32 %v6195, 0.0
    %v6261 = vmax.f32 %v5745, 0.0
    %v6262 = vmax.f32 %v5747, 0.0
    %v6263 = vmax.f32 %v6197, 0.0
    %v6264 = vmax.f32 %v6199, 0.0
    %v6265 = vpack.c.bf16 %v6205, %v6201
    %v6266 = vpack.c.bf16 %v6206, %v6202
    %v6267 = vpack.c.bf16 %v6207, %v6203
    %v6268 = vpack.c.bf16 %v6208, %v6204
    %v6269 = vpack.c.bf16 %v6213, %v6209
    %v6270 = vpack.c.bf16 %v6214, %v6210
    %v6271 = vpack.c.bf16 %v6215, %v6211
    %v6272 = vpack.c.bf16 %v6216, %v6212
    %v6273 = vpack.c.bf16 %v6221, %v6217
    %v6274 = vpack.c.bf16 %v6222, %v6218
    %v6275 = vpack.c.bf16 %v6223, %v6219
    %v6276 = vpack.c.bf16 %v6224, %v6220
    %v6277 = vpack.c.bf16 %v6229, %v6225
    %v6278 = vpack.c.bf16 %v6230, %v6226
    %v6279 = vpack.c.bf16 %v6231, %v6227
    %v6280 = vpack.c.bf16 %v6232, %v6228
    %v6281 = vpack.c.bf16 %v6237, %v6233
    %v6282 = vpack.c.bf16 %v6238, %v6234
    %v6283 = vpack.c.bf16 %v6239, %v6235
    %v6284 = vpack.c.bf16 %v6240, %v6236
    %v6285 = vpack.c.bf16 %v6245, %v6241
    %v6286 = vpack.c.bf16 %v6246, %v6242
    %v6287 = vpack.c.bf16 %v6247, %v6243
    %v6288 = vpack.c.bf16 %v6248, %v6244
    %v6289 = vpack.c.bf16 %v6253, %v6249
    %v6290 = vpack.c.bf16 %v6254, %v6250
    %v6291 = vpack.c.bf16 %v6255, %v6251
    %v6292 = vpack.c.bf16 %v6256, %v6252
    %v6293 = vpack.c.bf16 %v6261, %v6257
    %v6294 = vpack.c.bf16 %v6262, %v6258
    %v6295 = vpack.c.bf16 %v6263, %v6259
    %v6296 = vpack.c.bf16 %v6264, %v6260
    %s6297 = scalar_lea.vmem [#allocation10], 4
    %v6298 = vld [vmem:[%s6297] ss:$8 sm:$0x3]
    %v6299 = vld [vmem:[#allocation8] sm:$0xff]
    %v6300 = vld [vmem:[#allocation8 + $0x8] sm:$0xff]
    %v6301 = vld [vmem:[#allocation8 + $0x10] sm:$0xff]
    %v6302 = vld [vmem:[#allocation8 + $0x18] sm:$0xff]
    %v6303 = vld [vmem:[#allocation8 + $0x20] sm:$0xff]
    %v6304 = vld [vmem:[#allocation8 + $0x28] sm:$0xff]
    %v6305 = vld [vmem:[#allocation8 + $0x30] sm:$0xff]
    %v6306 = vld [vmem:[#allocation8 + $0x38] sm:$0xff]
    %v6307 = vld [vmem:[#allocation8 + $0x40] sm:$0xff]
    %v6308 = vld [vmem:[#allocation8 + $0x48] sm:$0xff]
    %v6309 = vld [vmem:[#allocation8 + $0x50] sm:$0xff]
    %v6310 = vld [vmem:[#allocation8 + $0x58] sm:$0xff]
    %v6311 = vld [vmem:[#allocation8 + $0x60] sm:$0xff]
    %v6312 = vld [vmem:[#allocation8 + $0x68] sm:$0xff]
    %v6313 = vld [vmem:[#allocation8 + $0x70] sm:$0xff]
    %v6314 = vld [vmem:[#allocation8 + $0x78] sm:$0xff]
    %v6315 = vld [vmem:[#allocation8 + $0x80] sm:$0xff]
    %v6316 = vld [vmem:[#allocation8 + $0x88] sm:$0xff]
    %v6317 = vld [vmem:[#allocation8 + $0x90] sm:$0xff]
    %v6318 = vld [vmem:[#allocation8 + $0x98] sm:$0xff]
    %v6319 = vld [vmem:[#allocation8 + $0xa0] sm:$0xff]
    %v6320 = vld [vmem:[#allocation8 + $0xa8] sm:$0xff]
    %v6321 = vld [vmem:[#allocation8 + $0xb0] sm:$0xff]
    %v6322 = vld [vmem:[#allocation8 + $0xb8] sm:$0xff]
    %v6323 = vld [vmem:[#allocation8 + $0xc0] sm:$0xff]
    %v6324 = vld [vmem:[#allocation8 + $0xc8] sm:$0xff]
    %v6325 = vld [vmem:[#allocation8 + $0xd0] sm:$0xff]
    %v6326 = vld [vmem:[#allocation8 + $0xd8] sm:$0xff]
    %v6327 = vld [vmem:[#allocation8 + $0xe0] sm:$0xff]
    %v6328 = vld [vmem:[#allocation8 + $0xe8] sm:$0xff]
    %v6329 = vld [vmem:[#allocation8 + $0xf0] sm:$0xff]
    %v6330 = vld [vmem:[#allocation8 + $0xf8] sm:$0xff]
    %v6331 = vld [vmem:[#allocation8 + $0x100] sm:$0xff]
    %v6332 = vld [vmem:[#allocation8 + $0x108] sm:$0xff]
    %v6333 = vld [vmem:[#allocation8 + $0x110] sm:$0xff]
    %v6334 = vld [vmem:[#allocation8 + $0x118] sm:$0xff]
    %v6335 = vld [vmem:[#allocation8 + $0x120] sm:$0xff]
    %v6336 = vld [vmem:[#allocation8 + $0x128] sm:$0xff]
    %v6337 = vld [vmem:[#allocation8 + $0x130] sm:$0xff]
    %v6338 = vld [vmem:[#allocation8 + $0x138] sm:$0xff]
    %v6339 = vld [vmem:[#allocation8 + $0x140] sm:$0xff]
    %v6340 = vld [vmem:[#allocation8 + $0x148] sm:$0xff]
    %v6341 = vld [vmem:[#allocation8 + $0x150] sm:$0xff]
    %v6342 = vld [vmem:[#allocation8 + $0x158] sm:$0xff]
    %v6343 = vld [vmem:[#allocation8 + $0x160] sm:$0xff]
    %v6344 = vld [vmem:[#allocation8 + $0x168] sm:$0xff]
    %v6345 = vld [vmem:[#allocation8 + $0x170] sm:$0xff]
    %v6346 = vld [vmem:[#allocation8 + $0x178] sm:$0xff]
    %v6347 = vld [vmem:[#allocation8 + $0x180] sm:$0xff]
    %v6348 = vld [vmem:[#allocation8 + $0x188] sm:$0xff]
    %v6349 = vld [vmem:[#allocation8 + $0x190] sm:$0xff]
    %v6350 = vld [vmem:[#allocation8 + $0x198] sm:$0xff]
    %v6351 = vld [vmem:[#allocation8 + $0x1a0] sm:$0xff]
    %v6352 = vld [vmem:[#allocation8 + $0x1a8] sm:$0xff]
    %v6353 = vld [vmem:[#allocation8 + $0x1b0] sm:$0xff]
    %v6354 = vld [vmem:[#allocation8 + $0x1b8] sm:$0xff]
    %v6355 = vld [vmem:[#allocation8 + $0x1c0] sm:$0xff]
    %v6356 = vld [vmem:[#allocation8 + $0x1c8] sm:$0xff]
    %v6357 = vld [vmem:[#allocation8 + $0x1d0] sm:$0xff]
    %v6358 = vld [vmem:[#allocation8 + $0x1d8] sm:$0xff]
    %v6359 = vld [vmem:[#allocation8 + $0x1e0] sm:$0xff]
    %v6360 = vld [vmem:[#allocation8 + $0x1e8] sm:$0xff]
    %v6361 = vld [vmem:[#allocation8 + $0x1f0] sm:$0xff]
    %v6362 = vld [vmem:[#allocation8 + $0x1f8] sm:$0xff]
    %v6364 = vlaneseq
    %v6365 = vshrl.u32 %v6364, 7
    %v6366 = vsub.s32 0, %v6365
    %v6367 = vrot.slane %v6298, %v6366
    %v6368 = vlaneseq
    %v6369 = vshrl.u32 %v6368, 7
    %v6370 = vsub.s32 1, %v6369
    %v6371 = vrot.slane %v6298, %v6370
    %v6438 = vunpack.c.l.b16 %v6299
    %v6439 = vunpack.c.h.b16 %v6299
    %v6440 = vunpack.c.l.b16 %v6300
    %v6441 = vunpack.c.h.b16 %v6300
    %v6442 = vunpack.c.l.b16 %v6301
    %v6443 = vunpack.c.h.b16 %v6301
    %v6444 = vunpack.c.l.b16 %v6302
    %v6445 = vunpack.c.h.b16 %v6302
    %v6446 = vunpack.c.l.b16 %v6303
    %v6447 = vunpack.c.h.b16 %v6303
    %v6448 = vunpack.c.l.b16 %v6304
    %v6449 = vunpack.c.h.b16 %v6304
    %v6450 = vunpack.c.l.b16 %v6305
    %v6451 = vunpack.c.h.b16 %v6305
    %v6452 = vunpack.c.l.b16 %v6306
    %v6453 = vunpack.c.h.b16 %v6306
    %v6454 = vunpack.c.l.b16 %v6307
    %v6455 = vunpack.c.h.b16 %v6307
    %v6456 = vunpack.c.l.b16 %v6308
    %v6457 = vunpack.c.h.b16 %v6308
    %v6458 = vunpack.c.l.b16 %v6309
    %v6459 = vunpack.c.h.b16 %v6309
    %v6460 = vunpack.c.l.b16 %v6310
    %v6461 = vunpack.c.h.b16 %v6310
    %v6462 = vunpack.c.l.b16 %v6311
    %v6463 = vunpack.c.h.b16 %v6311
    %v6464 = vunpack.c.l.b16 %v6312
    %v6465 = vunpack.c.h.b16 %v6312
    %v6466 = vunpack.c.l.b16 %v6313
    %v6467 = vunpack.c.h.b16 %v6313
    %v6468 = vunpack.c.l.b16 %v6314
    %v6469 = vunpack.c.h.b16 %v6314
    %v6470 = vunpack.c.l.b16 %v6315
    %v6471 = vunpack.c.h.b16 %v6315
    %v6472 = vunpack.c.l.b16 %v6316
    %v6473 = vunpack.c.h.b16 %v6316
    %v6474 = vunpack.c.l.b16 %v6317
    %v6475 = vunpack.c.h.b16 %v6317
    %v6476 = vunpack.c.l.b16 %v6318
    %v6477 = vunpack.c.h.b16 %v6318
    %v6478 = vunpack.c.l.b16 %v6319
    %v6479 = vunpack.c.h.b16 %v6319
    %v6480 = vunpack.c.l.b16 %v6320
    %v6481 = vunpack.c.h.b16 %v6320
    %v6482 = vunpack.c.l.b16 %v6321
    %v6483 = vunpack.c.h.b16 %v6321
    %v6484 = vunpack.c.l.b16 %v6322
    %v6485 = vunpack.c.h.b16 %v6322
    %v6486 = vunpack.c.l.b16 %v6323
    %v6487 = vunpack.c.h.b16 %v6323
    %v6488 = vunpack.c.l.b16 %v6324
    %v6489 = vunpack.c.h.b16 %v6324
    %v6490 = vunpack.c.l.b16 %v6325
    %v6491 = vunpack.c.h.b16 %v6325
    %v6492 = vunpack.c.l.b16 %v6326
    %v6493 = vunpack.c.h.b16 %v6326
    %v6494 = vunpack.c.l.b16 %v6327
    %v6495 = vunpack.c.h.b16 %v6327
    %v6496 = vunpack.c.l.b16 %v6328
    %v6497 = vunpack.c.h.b16 %v6328
    %v6498 = vunpack.c.l.b16 %v6329
    %v6499 = vunpack.c.h.b16 %v6329
    %v6500 = vunpack.c.l.b16 %v6330
    %v6501 = vunpack.c.h.b16 %v6330
    %v6502 = vunpack.c.l.b16 %v6331
    %v6503 = vunpack.c.h.b16 %v6331
    %v6504 = vunpack.c.l.b16 %v6332
    %v6505 = vunpack.c.h.b16 %v6332
    %v6506 = vunpack.c.l.b16 %v6333
    %v6507 = vunpack.c.h.b16 %v6333
    %v6508 = vunpack.c.l.b16 %v6334
    %v6509 = vunpack.c.h.b16 %v6334
    %v6510 = vunpack.c.l.b16 %v6335
    %v6511 = vunpack.c.h.b16 %v6335
    %v6512 = vunpack.c.l.b16 %v6336
    %v6513 = vunpack.c.h.b16 %v6336
    %v6514 = vunpack.c.l.b16 %v6337
    %v6515 = vunpack.c.h.b16 %v6337
    %v6516 = vunpack.c.l.b16 %v6338
    %v6517 = vunpack.c.h.b16 %v6338
    %v6518 = vunpack.c.l.b16 %v6339
    %v6519 = vunpack.c.h.b16 %v6339
    %v6520 = vunpack.c.l.b16 %v6340
    %v6521 = vunpack.c.h.b16 %v6340
    %v6522 = vunpack.c.l.b16 %v6341
    %v6523 = vunpack.c.h.b16 %v6341
    %v6524 = vunpack.c.l.b16 %v6342
    %v6525 = vunpack.c.h.b16 %v6342
    %v6526 = vunpack.c.l.b16 %v6343
    %v6527 = vunpack.c.h.b16 %v6343
    %v6528 = vunpack.c.l.b16 %v6344
    %v6529 = vunpack.c.h.b16 %v6344
    %v6530 = vunpack.c.l.b16 %v6345
    %v6531 = vunpack.c.h.b16 %v6345
    %v6532 = vunpack.c.l.b16 %v6346
    %v6533 = vunpack.c.h.b16 %v6346
    %v6534 = vunpack.c.l.b16 %v6347
    %v6535 = vunpack.c.h.b16 %v6347
    %v6536 = vunpack.c.l.b16 %v6348
    %v6537 = vunpack.c.h.b16 %v6348
    %v6538 = vunpack.c.l.b16 %v6349
    %v6539 = vunpack.c.h.b16 %v6349
    %v6540 = vunpack.c.l.b16 %v6350
    %v6541 = vunpack.c.h.b16 %v6350
    %v6542 = vunpack.c.l.b16 %v6351
    %v6543 = vunpack.c.h.b16 %v6351
    %v6544 = vunpack.c.l.b16 %v6352
    %v6545 = vunpack.c.h.b16 %v6352
    %v6546 = vunpack.c.l.b16 %v6353
    %v6547 = vunpack.c.h.b16 %v6353
    %v6548 = vunpack.c.l.b16 %v6354
    %v6549 = vunpack.c.h.b16 %v6354
    %v6550 = vunpack.c.l.b16 %v6355
    %v6551 = vunpack.c.h.b16 %v6355
    %v6552 = vunpack.c.l.b16 %v6356
    %v6553 = vunpack.c.h.b16 %v6356
    %v6554 = vunpack.c.l.b16 %v6357
    %v6555 = vunpack.c.h.b16 %v6357
    %v6556 = vunpack.c.l.b16 %v6358
    %v6557 = vunpack.c.h.b16 %v6358
    %v6558 = vunpack.c.l.b16 %v6359
    %v6559 = vunpack.c.h.b16 %v6359
    %v6560 = vunpack.c.l.b16 %v6360
    %v6561 = vunpack.c.h.b16 %v6360
    %v6562 = vunpack.c.l.b16 %v6361
    %v6563 = vunpack.c.h.b16 %v6361
    %v6564 = vunpack.c.l.b16 %v6362
    %v6565 = vunpack.c.h.b16 %v6362
    %v6566 = vpack.c.b16 %v6440, %v6438
    %v6567 = vpack.c.b16 %v6441, %v6439
    %v6568 = vpack.c.b16 %v6444, %v6442
    %v6569 = vpack.c.b16 %v6445, %v6443
    %v6570 = vpack.c.b16 %v6448, %v6446
    %v6571 = vpack.c.b16 %v6449, %v6447
    %v6572 = vpack.c.b16 %v6452, %v6450
    %v6573 = vpack.c.b16 %v6453, %v6451
    %v6574 = vpack.c.b16 %v6456, %v6454
    %v6575 = vpack.c.b16 %v6457, %v6455
    %v6576 = vpack.c.b16 %v6460, %v6458
    %v6577 = vpack.c.b16 %v6461, %v6459
    %v6578 = vpack.c.b16 %v6464, %v6462
    %v6579 = vpack.c.b16 %v6465, %v6463
    %v6580 = vpack.c.b16 %v6468, %v6466
    %v6581 = vpack.c.b16 %v6469, %v6467
    %v6582 = vpack.c.b16 %v6472, %v6470
    %v6583 = vpack.c.b16 %v6473, %v6471
    %v6584 = vpack.c.b16 %v6476, %v6474
    %v6585 = vpack.c.b16 %v6477, %v6475
    %v6586 = vpack.c.b16 %v6480, %v6478
    %v6587 = vpack.c.b16 %v6481, %v6479
    %v6588 = vpack.c.b16 %v6484, %v6482
    %v6589 = vpack.c.b16 %v6485, %v6483
    %v6590 = vpack.c.b16 %v6488, %v6486
    %v6591 = vpack.c.b16 %v6489, %v6487
    %v6592 = vpack.c.b16 %v6492, %v6490
    %v6593 = vpack.c.b16 %v6493, %v6491
    %v6594 = vpack.c.b16 %v6496, %v6494
    %v6595 = vpack.c.b16 %v6497, %v6495
    %v6596 = vpack.c.b16 %v6500, %v6498
    %v6597 = vpack.c.b16 %v6501, %v6499
    %v6598 = vpack.c.b16 %v6504, %v6502
    %v6599 = vpack.c.b16 %v6505, %v6503
    %v6600 = vpack.c.b16 %v6508, %v6506
    %v6601 = vpack.c.b16 %v6509, %v6507
    %v6602 = vpack.c.b16 %v6512, %v6510
    %v6603 = vpack.c.b16 %v6513, %v6511
    %v6604 = vpack.c.b16 %v6516, %v6514
    %v6605 = vpack.c.b16 %v6517, %v6515
    %v6606 = vpack.c.b16 %v6520, %v6518
    %v6607 = vpack.c.b16 %v6521, %v6519
    %v6608 = vpack.c.b16 %v6524, %v6522
    %v6609 = vpack.c.b16 %v6525, %v6523
    %v6610 = vpack.c.b16 %v6528, %v6526
    %v6611 = vpack.c.b16 %v6529, %v6527
    %v6612 = vpack.c.b16 %v6532, %v6530
    %v6613 = vpack.c.b16 %v6533, %v6531
    %v6614 = vpack.c.b16 %v6536, %v6534
    %v6615 = vpack.c.b16 %v6537, %v6535
    %v6616 = vpack.c.b16 %v6540, %v6538
    %v6617 = vpack.c.b16 %v6541, %v6539
    %v6618 = vpack.c.b16 %v6544, %v6542
    %v6619 = vpack.c.b16 %v6545, %v6543
    %v6620 = vpack.c.b16 %v6548, %v6546
    %v6621 = vpack.c.b16 %v6549, %v6547
    %v6622 = vpack.c.b16 %v6552, %v6550
    %v6623 = vpack.c.b16 %v6553, %v6551
    %v6624 = vpack.c.b16 %v6556, %v6554
    %v6625 = vpack.c.b16 %v6557, %v6555
    %v6626 = vpack.c.b16 %v6560, %v6558
    %v6627 = vpack.c.b16 %v6561, %v6559
    %v6628 = vpack.c.b16 %v6564, %v6562
    %v6629 = vpack.c.b16 %v6565, %v6563
    %6694 = vmatprep.subr.bf16.mxu0 %v6581
    %6695 = vmatpush1.bf16.msra.mxu0 %v6580
    %6696 = vmatprep.subr.bf16.mxu0 %v6579
    %6697 = vmatpush1.bf16.msra.mxu0 %v6578
    %6698 = vmatprep.subr.bf16.mxu0 %v6577
    %6699 = vmatpush1.bf16.msra.mxu0 %v6576
    %6700 = vmatprep.subr.bf16.mxu0 %v6575
    %6701 = vmatpush1.bf16.msra.mxu0 %v6574
    %6702 = vmatprep.subr.bf16.mxu0 %v6573
    %6703 = vmatpush1.bf16.msra.mxu0 %v6572
    %6704 = vmatprep.subr.bf16.mxu0 %v6571
    %6705 = vmatpush1.bf16.msra.mxu0 %v6570
    %6706 = vmatprep.subr.bf16.mxu0 %v6569
    %6707 = vmatpush1.bf16.msra.mxu0 %v6568
    %6708 = vmatprep.subr.bf16.mxu0 %v6567
    %6709 = vmatpush1.bf16.msra.mxu0 %v6566
    %6710 = vmatprep.subr.bf16.mxu0 %v6597
    %6711 = vmatpush2.bf16.msra.mxu0 %v6596
    %6712 = vmatprep.subr.bf16.mxu0 %v6595
    %6713 = vmatpush2.bf16.msra.mxu0 %v6594
    %6714 = vmatprep.subr.bf16.mxu0 %v6593
    %6715 = vmatpush2.bf16.msra.mxu0 %v6592
    %6716 = vmatprep.subr.bf16.mxu0 %v6591
    %6717 = vmatpush2.bf16.msra.mxu0 %v6590
    %6718 = vmatprep.subr.bf16.mxu0 %v6589
    %6719 = vmatpush2.bf16.msra.mxu0 %v6588
    %6720 = vmatprep.subr.bf16.mxu0 %v6587
    %6721 = vmatpush2.bf16.msra.mxu0 %v6586
    %6722 = vmatprep.subr.bf16.mxu0 %v6585
    %6723 = vmatpush2.bf16.msra.mxu0 %v6584
    %6724 = vmatprep.subr.bf16.mxu0 %v6583
    %6725 = vmatpush2.bf16.msra.mxu0 %v6582
    %6726 = vmatprep.mubr.bf16.mxu0 %v6266
    %6727 = vmatmul.mubr.bf16.gmra.mxu0 %v6265
    %v6728 = vpop.f32.mrf.mxu0
    %v6729 = vadd.f32 %v6367, %v6728
    %v6730 = vpop.f32.mrf.mxu0
    %v6731 = vadd.f32 %v6371, %v6730
    %v6732 = vpop.f32.mrf.mxu0
    %v6733 = vadd.f32 %v6367, %v6732
    %v6734 = vpop.f32.mrf.mxu0
    %v6735 = vadd.f32 %v6371, %v6734
    %6736 = vmatprep.mubr.bf16.mxu0 %v6270
    %6737 = vmatmul.mubr.bf16.gmra.mxu0 %v6269
    %v6738 = vpop.f32.mrf.mxu0
    %v6739 = vadd.f32 %v6367, %v6738
    %v6740 = vpop.f32.mrf.mxu0
    %v6741 = vadd.f32 %v6371, %v6740
    %v6742 = vpop.f32.mrf.mxu0
    %v6743 = vadd.f32 %v6367, %v6742
    %v6744 = vpop.f32.mrf.mxu0
    %v6745 = vadd.f32 %v6371, %v6744
    %6746 = vmatprep.mubr.bf16.mxu0 %v6274
    %6747 = vmatmul.mubr.bf16.gmra.mxu0 %v6273
    %v6748 = vpop.f32.mrf.mxu0
    %v6749 = vadd.f32 %v6367, %v6748
    %v6750 = vpop.f32.mrf.mxu0
    %v6751 = vadd.f32 %v6371, %v6750
    %v6752 = vpop.f32.mrf.mxu0
    %v6753 = vadd.f32 %v6367, %v6752
    %v6754 = vpop.f32.mrf.mxu0
    %v6755 = vadd.f32 %v6371, %v6754
    %6756 = vmatprep.mubr.bf16.mxu0 %v6278
    %6757 = vmatmul.mubr.bf16.gmra.mxu0 %v6277
    %v6758 = vpop.f32.mrf.mxu0
    %v6759 = vadd.f32 %v6367, %v6758
    %v6760 = vpop.f32.mrf.mxu0
    %v6761 = vadd.f32 %v6371, %v6760
    %v6762 = vpop.f32.mrf.mxu0
    %v6763 = vadd.f32 %v6367, %v6762
    %v6764 = vpop.f32.mrf.mxu0
    %v6765 = vadd.f32 %v6371, %v6764
    %6766 = vmatprep.mubr.bf16.mxu0 %v6282
    %6767 = vmatmul.mubr.bf16.gmra.mxu0 %v6281
    %v6768 = vpop.f32.mrf.mxu0
    %v6769 = vadd.f32 %v6367, %v6768
    %v6770 = vpop.f32.mrf.mxu0
    %v6771 = vadd.f32 %v6371, %v6770
    %v6772 = vpop.f32.mrf.mxu0
    %v6773 = vadd.f32 %v6367, %v6772
    %v6774 = vpop.f32.mrf.mxu0
    %v6775 = vadd.f32 %v6371, %v6774
    %6776 = vmatprep.mubr.bf16.mxu0 %v6286
    %6777 = vmatmul.mubr.bf16.gmra.mxu0 %v6285
    %v6778 = vpop.f32.mrf.mxu0
    %v6779 = vadd.f32 %v6367, %v6778
    %v6780 = vpop.f32.mrf.mxu0
    %v6781 = vadd.f32 %v6371, %v6780
    %v6782 = vpop.f32.mrf.mxu0
    %v6783 = vadd.f32 %v6367, %v6782
    %v6784 = vpop.f32.mrf.mxu0
    %v6785 = vadd.f32 %v6371, %v6784
    %6786 = vmatprep.mubr.bf16.mxu0 %v6290
    %6787 = vmatmul.mubr.bf16.gmra.mxu0 %v6289
    %v6788 = vpop.f32.mrf.mxu0
    %v6789 = vadd.f32 %v6367, %v6788
    %v6790 = vpop.f32.mrf.mxu0
    %v6791 = vadd.f32 %v6371, %v6790
    %v6792 = vpop.f32.mrf.mxu0
    %v6793 = vadd.f32 %v6367, %v6792
    %v6794 = vpop.f32.mrf.mxu0
    %v6795 = vadd.f32 %v6371, %v6794
    %6796 = vmatprep.mubr.bf16.mxu0 %v6294
    %6797 = vmatmul.mubr.bf16.gmra.mxu0 %v6293
    %v6798 = vpop.f32.mrf.mxu0
    %v6799 = vadd.f32 %v6367, %v6798
    %v6800 = vpop.f32.mrf.mxu0
    %v6801 = vadd.f32 %v6371, %v6800
    %v6802 = vpop.f32.mrf.mxu0
    %v6803 = vadd.f32 %v6367, %v6802
    %v6804 = vpop.f32.mrf.mxu0
    %v6805 = vadd.f32 %v6371, %v6804
    %6806 = vdwg.mxu0
    %6807 = vmatprep.subr.bf16.mxu0 %v6613
    %6808 = vmatpush1.bf16.msra.mxu0 %v6612
    %6809 = vmatprep.subr.bf16.mxu0 %v6611
    %6810 = vmatpush1.bf16.msra.mxu0 %v6610
    %6811 = vmatprep.subr.bf16.mxu0 %v6609
    %6812 = vmatpush1.bf16.msra.mxu0 %v6608
    %6813 = vmatprep.subr.bf16.mxu0 %v6607
    %6814 = vmatpush1.bf16.msra.mxu0 %v6606
    %6815 = vmatprep.subr.bf16.mxu0 %v6605
    %6816 = vmatpush1.bf16.msra.mxu0 %v6604
    %6817 = vmatprep.subr.bf16.mxu0 %v6603
    %6818 = vmatpush1.bf16.msra.mxu0 %v6602
    %6819 = vmatprep.subr.bf16.mxu0 %v6601
    %6820 = vmatpush1.bf16.msra.mxu0 %v6600
    %6821 = vmatprep.subr.bf16.mxu0 %v6599
    %6822 = vmatpush1.bf16.msra.mxu0 %v6598
    %6823 = vmatprep.subr.bf16.mxu0 %v6629
    %6824 = vmatpush2.bf16.msra.mxu0 %v6628
    %6825 = vmatprep.subr.bf16.mxu0 %v6627
    %6826 = vmatpush2.bf16.msra.mxu0 %v6626
    %6827 = vmatprep.subr.bf16.mxu0 %v6625
    %6828 = vmatpush2.bf16.msra.mxu0 %v6624
    %6829 = vmatprep.subr.bf16.mxu0 %v6623
    %6830 = vmatpush2.bf16.msra.mxu0 %v6622
    %6831 = vmatprep.subr.bf16.mxu0 %v6621
    %6832 = vmatpush2.bf16.msra.mxu0 %v6620
    %6833 = vmatprep.subr.bf16.mxu0 %v6619
    %6834 = vmatpush2.bf16.msra.mxu0 %v6618
    %6835 = vmatprep.subr.bf16.mxu0 %v6617
    %6836 = vmatpush2.bf16.msra.mxu0 %v6616
    %6837 = vmatprep.subr.bf16.mxu0 %v6615
    %6838 = vmatpush2.bf16.msra.mxu0 %v6614
    %6839 = vmatprep.mubr.bf16.mxu0 %v6268
    %6840 = vmatmul.mubr.bf16.gmra.mxu0 %v6267
    %v6841 = vpop.f32.mrf.mxu0
    %v6842 = vadd.f32 %v6729, %v6841
    %v6843 = vpop.f32.mrf.mxu0
    %v6844 = vadd.f32 %v6731, %v6843
    %v6845 = vpop.f32.mrf.mxu0
    %v6846 = vadd.f32 %v6733, %v6845
    %v6847 = vpop.f32.mrf.mxu0
    %v6848 = vadd.f32 %v6735, %v6847
    %6849 = vmatprep.mubr.bf16.mxu0 %v6272
    %6850 = vmatmul.mubr.bf16.gmra.mxu0 %v6271
    %v6851 = vpop.f32.mrf.mxu0
    %v6852 = vadd.f32 %v6739, %v6851
    %v6853 = vpop.f32.mrf.mxu0
    %v6854 = vadd.f32 %v6741, %v6853
    %v6855 = vpop.f32.mrf.mxu0
    %v6856 = vadd.f32 %v6743, %v6855
    %v6857 = vpop.f32.mrf.mxu0
    %v6858 = vadd.f32 %v6745, %v6857
    %6859 = vmatprep.mubr.bf16.mxu0 %v6276
    %6860 = vmatmul.mubr.bf16.gmra.mxu0 %v6275
    %v6861 = vpop.f32.mrf.mxu0
    %v6862 = vadd.f32 %v6749, %v6861
    %v6863 = vpop.f32.mrf.mxu0
    %v6864 = vadd.f32 %v6751, %v6863
    %v6865 = vpop.f32.mrf.mxu0
    %v6866 = vadd.f32 %v6753, %v6865
    %v6867 = vpop.f32.mrf.mxu0
    %v6868 = vadd.f32 %v6755, %v6867
    %6869 = vmatprep.mubr.bf16.mxu0 %v6280
    %6870 = vmatmul.mubr.bf16.gmra.mxu0 %v6279
    %v6871 = vpop.f32.mrf.mxu0
    %v6872 = vadd.f32 %v6759, %v6871
    %v6873 = vpop.f32.mrf.mxu0
    %v6874 = vadd.f32 %v6761, %v6873
    %v6875 = vpop.f32.mrf.mxu0
    %v6876 = vadd.f32 %v6763, %v6875
    %v6877 = vpop.f32.mrf.mxu0
    %v6878 = vadd.f32 %v6765, %v6877
    %6879 = vmatprep.mubr.bf16.mxu0 %v6284
    %6880 = vmatmul.mubr.bf16.gmra.mxu0 %v6283
    %v6881 = vpop.f32.mrf.mxu0
    %v6882 = vadd.f32 %v6769, %v6881
    %v6883 = vpop.f32.mrf.mxu0
    %v6884 = vadd.f32 %v6771, %v6883
    %v6885 = vpop.f32.mrf.mxu0
    %v6886 = vadd.f32 %v6773, %v6885
    %v6887 = vpop.f32.mrf.mxu0
    %v6888 = vadd.f32 %v6775, %v6887
    %6889 = vmatprep.mubr.bf16.mxu0 %v6288
    %6890 = vmatmul.mubr.bf16.gmra.mxu0 %v6287
    %v6891 = vpop.f32.mrf.mxu0
    %v6892 = vadd.f32 %v6779, %v6891
    %v6893 = vpop.f32.mrf.mxu0
    %v6894 = vadd.f32 %v6781, %v6893
    %v6895 = vpop.f32.mrf.mxu0
    %v6896 = vadd.f32 %v6783, %v6895
    %v6897 = vpop.f32.mrf.mxu0
    %v6898 = vadd.f32 %v6785, %v6897
    %6899 = vmatprep.mubr.bf16.mxu0 %v6292
    %6900 = vmatmul.mubr.bf16.gmra.mxu0 %v6291
    %v6901 = vpop.f32.mrf.mxu0
    %v6902 = vadd.f32 %v6789, %v6901
    %v6903 = vpop.f32.mrf.mxu0
    %v6904 = vadd.f32 %v6791, %v6903
    %v6905 = vpop.f32.mrf.mxu0
    %v6906 = vadd.f32 %v6793, %v6905
    %v6907 = vpop.f32.mrf.mxu0
    %v6908 = vadd.f32 %v6795, %v6907
    %6909 = vmatprep.mubr.bf16.mxu0 %v6296
    %6910 = vmatmul.mubr.bf16.gmra.mxu0 %v6295
    %v6911 = vpop.f32.mrf.mxu0
    %v6912 = vadd.f32 %v6799, %v6911
    %v6913 = vpop.f32.mrf.mxu0
    %v6914 = vadd.f32 %v6801, %v6913
    %v6915 = vpop.f32.mrf.mxu0
    %v6916 = vadd.f32 %v6803, %v6915
    %v6917 = vpop.f32.mrf.mxu0
    %v6918 = vadd.f32 %v6805, %v6917
    %6919 = vdwg.mxu0
    %v6920 = vmax.f32 %v6842, 0.0
    %v6921 = vmax.f32 %v6844, 0.0
    %v6922 = vmax.f32 %v6846, 0.0
    %v6923 = vmax.f32 %v6848, 0.0
    %v6924 = vmax.f32 %v6852, 0.0
    %v6925 = vmax.f32 %v6854, 0.0
    %v6926 = vmax.f32 %v6856, 0.0
    %v6927 = vmax.f32 %v6858, 0.0
    %v6928 = vmax.f32 %v6862, 0.0
    %v6929 = vmax.f32 %v6864, 0.0
    %v6930 = vmax.f32 %v6866, 0.0
    %v6931 = vmax.f32 %v6868, 0.0
    %v6932 = vmax.f32 %v6872, 0.0
    %v6933 = vmax.f32 %v6874, 0.0
    %v6934 = vmax.f32 %v6876, 0.0
    %v6935 = vmax.f32 %v6878, 0.0
    %v6936 = vmax.f32 %v6882, 0.0
    %v6937 = vmax.f32 %v6884, 0.0
    %v6938 = vmax.f32 %v6886, 0.0
    %v6939 = vmax.f32 %v6888, 0.0
    %v6940 = vmax.f32 %v6892, 0.0
    %v6941 = vmax.f32 %v6894, 0.0
    %v6942 = vmax.f32 %v6896, 0.0
    %v6943 = vmax.f32 %v6898, 0.0
    %v6944 = vmax.f32 %v6902, 0.0
    %v6945 = vmax.f32 %v6904, 0.0
    %v6946 = vmax.f32 %v6906, 0.0
    %v6947 = vmax.f32 %v6908, 0.0
    %v6948 = vmax.f32 %v6912, 0.0
    %v6949 = vmax.f32 %v6914, 0.0
    %v6950 = vmax.f32 %v6916, 0.0
    %v6951 = vmax.f32 %v6918, 0.0
    %v6952 = vpack.c.bf16 %v6922, %v6920
    %v6953 = vpack.c.bf16 %v6923, %v6921
    %v6954 = vpack.c.bf16 %v6926, %v6924
    %v6955 = vpack.c.bf16 %v6927, %v6925
    %v6956 = vpack.c.bf16 %v6930, %v6928
    %v6957 = vpack.c.bf16 %v6931, %v6929
    %v6958 = vpack.c.bf16 %v6934, %v6932
    %v6959 = vpack.c.bf16 %v6935, %v6933
    %v6960 = vpack.c.bf16 %v6938, %v6936
    %v6961 = vpack.c.bf16 %v6939, %v6937
    %v6962 = vpack.c.bf16 %v6942, %v6940
    %v6963 = vpack.c.bf16 %v6943, %v6941
    %v6964 = vpack.c.bf16 %v6946, %v6944
    %v6965 = vpack.c.bf16 %v6947, %v6945
    %v6966 = vpack.c.bf16 %v6950, %v6948
    %v6967 = vpack.c.bf16 %v6951, %v6949
    %v6968 = vld [vmem:[#allocation10 + $0x5] ss:$0 sm:$0xff]
    %v6969 = vld [vmem:[%s6] sm:$0xf]
    %v6970 = vld [vmem:[%s6 + $0x4] sm:$0xf]
    %v6971 = vld [vmem:[%s6 + $0x8] sm:$0xf]
    %v6972 = vld [vmem:[%s6 + $0xc] sm:$0xf]
    %v6973 = vld [vmem:[%s6 + $0x10] sm:$0xf]
    %v6974 = vld [vmem:[%s6 + $0x14] sm:$0xf]
    %v6975 = vld [vmem:[%s6 + $0x18] sm:$0xf]
    %v6976 = vld [vmem:[%s6 + $0x1c] sm:$0xf]
    %v6977 = vld [vmem:[%s6 + $0x20] sm:$0xf]
    %v6978 = vld [vmem:[%s6 + $0x24] sm:$0xf]
    %v6979 = vld [vmem:[%s6 + $0x28] sm:$0xf]
    %v6980 = vld [vmem:[%s6 + $0x2c] sm:$0xf]
    %v6981 = vld [vmem:[%s6 + $0x30] sm:$0xf]
    %v6982 = vld [vmem:[%s6 + $0x34] sm:$0xf]
    %v6983 = vld [vmem:[%s6 + $0x38] sm:$0xf]
    %v6984 = vld [vmem:[%s6 + $0x3c] sm:$0xf]
    %v6985 = vld [vmem:[%s6 + $0x40] sm:$0xf]
    %v6986 = vld [vmem:[%s6 + $0x44] sm:$0xf]
    %v6987 = vld [vmem:[%s6 + $0x48] sm:$0xf]
    %v6988 = vld [vmem:[%s6 + $0x4c] sm:$0xf]
    %v6989 = vld [vmem:[%s6 + $0x50] sm:$0xf]
    %v6990 = vld [vmem:[%s6 + $0x54] sm:$0xf]
    %v6991 = vld [vmem:[%s6 + $0x58] sm:$0xf]
    %v6992 = vld [vmem:[%s6 + $0x5c] sm:$0xf]
    %v6993 = vld [vmem:[%s6 + $0x60] sm:$0xf]
    %v6994 = vld [vmem:[%s6 + $0x64] sm:$0xf]
    %v6995 = vld [vmem:[%s6 + $0x68] sm:$0xf]
    %v6996 = vld [vmem:[%s6 + $0x6c] sm:$0xf]
    %v6997 = vld [vmem:[%s6 + $0x70] sm:$0xf]
    %v6998 = vld [vmem:[%s6 + $0x74] sm:$0xf]
    %v6999 = vld [vmem:[%s6 + $0x78] sm:$0xf]
    %v7000 = vld [vmem:[%s6 + $0x7c] sm:$0xf]
    %v7033 = vunpack.c.l.b16 %v6969
    %v7034 = vunpack.c.l.b16 %v6970
    %v7035 = vunpack.c.l.b16 %v6971
    %v7036 = vunpack.c.l.b16 %v6972
    %v7037 = vunpack.c.l.b16 %v6973
    %v7038 = vunpack.c.l.b16 %v6974
    %v7039 = vunpack.c.l.b16 %v6975
    %v7040 = vunpack.c.l.b16 %v6976
    %v7041 = vunpack.c.l.b16 %v6977
    %v7042 = vunpack.c.l.b16 %v6978
    %v7043 = vunpack.c.l.b16 %v6979
    %v7044 = vunpack.c.l.b16 %v6980
    %v7045 = vunpack.c.l.b16 %v6981
    %v7046 = vunpack.c.l.b16 %v6982
    %v7047 = vunpack.c.l.b16 %v6983
    %v7048 = vunpack.c.l.b16 %v6984
    %v7049 = vunpack.c.l.b16 %v6985
    %v7050 = vunpack.c.l.b16 %v6986
    %v7051 = vunpack.c.l.b16 %v6987
    %v7052 = vunpack.c.l.b16 %v6988
    %v7053 = vunpack.c.l.b16 %v6989
    %v7054 = vunpack.c.l.b16 %v6990
    %v7055 = vunpack.c.l.b16 %v6991
    %v7056 = vunpack.c.l.b16 %v6992
    %v7057 = vunpack.c.l.b16 %v6993
    %v7058 = vunpack.c.l.b16 %v6994
    %v7059 = vunpack.c.l.b16 %v6995
    %v7060 = vunpack.c.l.b16 %v6996
    %v7061 = vunpack.c.l.b16 %v6997
    %v7062 = vunpack.c.l.b16 %v6998
    %v7063 = vunpack.c.l.b16 %v6999
    %v7064 = vunpack.c.l.b16 %v7000
    %v7065 = vpack.c.b16 %v7034, %v7033
    %v7066 = vpack.c.b16 %v7036, %v7035
    %v7067 = vpack.c.b16 %v7038, %v7037
    %v7068 = vpack.c.b16 %v7040, %v7039
    %v7069 = vpack.c.b16 %v7042, %v7041
    %v7070 = vpack.c.b16 %v7044, %v7043
    %v7071 = vpack.c.b16 %v7046, %v7045
    %v7072 = vpack.c.b16 %v7048, %v7047
    %v7073 = vpack.c.b16 %v7050, %v7049
    %v7074 = vpack.c.b16 %v7052, %v7051
    %v7075 = vpack.c.b16 %v7054, %v7053
    %v7076 = vpack.c.b16 %v7056, %v7055
    %v7077 = vpack.c.b16 %v7058, %v7057
    %v7078 = vpack.c.b16 %v7060, %v7059
    %v7079 = vpack.c.b16 %v7062, %v7061
    %v7080 = vpack.c.b16 %v7064, %v7063
    %7097 = vmatprep.subr.bf16.mxu0 0
    %7098 = vmatpush1.bf16.msra.mxu0 %v7072
    %7099 = vmatprep.subr.bf16.mxu0 0
    %7100 = vmatpush1.bf16.msra.mxu0 %v7071
    %7101 = vmatprep.subr.bf16.mxu0 0
    %7102 = vmatpush1.bf16.msra.mxu0 %v7070
    %7103 = vmatprep.subr.bf16.mxu0 0
    %7104 = vmatpush1.bf16.msra.mxu0 %v7069
    %7105 = vmatprep.subr.bf16.mxu0 0
    %7106 = vmatpush1.bf16.msra.mxu0 %v7068
    %7107 = vmatprep.subr.bf16.mxu0 0
    %7108 = vmatpush1.bf16.msra.mxu0 %v7067
    %7109 = vmatprep.subr.bf16.mxu0 0
    %7110 = vmatpush1.bf16.msra.mxu0 %v7066
    %7111 = vmatprep.subr.bf16.mxu0 0
    %7112 = vmatpush1.bf16.msra.mxu0 %v7065
    %7113 = vmatprep.subr.bf16.mxu0 0
    %7114 = vmatpush2.bf16.msra.mxu0 %v7080
    %7115 = vmatprep.subr.bf16.mxu0 0
    %7116 = vmatpush2.bf16.msra.mxu0 %v7079
    %7117 = vmatprep.subr.bf16.mxu0 0
    %7118 = vmatpush2.bf16.msra.mxu0 %v7078
    %7119 = vmatprep.subr.bf16.mxu0 0
    %7120 = vmatpush2.bf16.msra.mxu0 %v7077
    %7121 = vmatprep.subr.bf16.mxu0 0
    %7122 = vmatpush2.bf16.msra.mxu0 %v7076
    %7123 = vmatprep.subr.bf16.mxu0 0
    %7124 = vmatpush2.bf16.msra.mxu0 %v7075
    %7125 = vmatprep.subr.bf16.mxu0 0
    %7126 = vmatpush2.bf16.msra.mxu0 %v7074
    %7127 = vmatprep.subr.bf16.mxu0 0
    %7128 = vmatpush2.bf16.msra.mxu0 %v7073
    %7129 = vmatprep.mubr.bf16.mxu0 %v6953
    %7130 = vmatmul.mubr.bf16.gmra.mxu0 %v6952
    %v7131 = vpop.f32.mrf.mxu0
    %v7132 = vadd.f32 %v6968, %v7131
    %v7133 = vpop.f32.mrf.mxu0
    %v7134 = vpop.f32.mrf.mxu0
    %v7135 = vadd.f32 %v6968, %v7134
    %v7136 = vpop.f32.mrf.mxu0
    %7137 = vmatprep.mubr.bf16.mxu0 %v6955
    %7138 = vmatmul.mubr.bf16.gmra.mxu0 %v6954
    %v7139 = vpop.f32.mrf.mxu0
    %v7140 = vadd.f32 %v6968, %v7139
    %v7141 = vpop.f32.mrf.mxu0
    %v7142 = vpop.f32.mrf.mxu0
    %v7143 = vadd.f32 %v6968, %v7142
    %v7144 = vpop.f32.mrf.mxu0
    %7145 = vmatprep.mubr.bf16.mxu0 %v6957
    %7146 = vmatmul.mubr.bf16.gmra.mxu0 %v6956
    %v7147 = vpop.f32.mrf.mxu0
    %v7148 = vadd.f32 %v6968, %v7147
    %v7149 = vpop.f32.mrf.mxu0
    %v7150 = vpop.f32.mrf.mxu0
    %v7151 = vadd.f32 %v6968, %v7150
    %v7152 = vpop.f32.mrf.mxu0
    %7153 = vmatprep.mubr.bf16.mxu0 %v6959
    %7154 = vmatmul.mubr.bf16.gmra.mxu0 %v6958
    %v7155 = vpop.f32.mrf.mxu0
    %v7156 = vadd.f32 %v6968, %v7155
    %v7157 = vpop.f32.mrf.mxu0
    %v7158 = vpop.f32.mrf.mxu0
    %v7159 = vadd.f32 %v6968, %v7158
    %v7160 = vpop.f32.mrf.mxu0
    %7161 = vmatprep.mubr.bf16.mxu0 %v6961
    %7162 = vmatmul.mubr.bf16.gmra.mxu0 %v6960
    %v7163 = vpop.f32.mrf.mxu0
    %v7164 = vadd.f32 %v6968, %v7163
    %v7165 = vpop.f32.mrf.mxu0
    %v7166 = vpop.f32.mrf.mxu0
    %v7167 = vadd.f32 %v6968, %v7166
    %v7168 = vpop.f32.mrf.mxu0
    %7169 = vmatprep.mubr.bf16.mxu0 %v6963
    %7170 = vmatmul.mubr.bf16.gmra.mxu0 %v6962
    %v7171 = vpop.f32.mrf.mxu0
    %v7172 = vadd.f32 %v6968, %v7171
    %v7173 = vpop.f32.mrf.mxu0
    %v7174 = vpop.f32.mrf.mxu0
    %v7175 = vadd.f32 %v6968, %v7174
    %v7176 = vpop.f32.mrf.mxu0
    %7177 = vmatprep.mubr.bf16.mxu0 %v6965
    %7178 = vmatmul.mubr.bf16.gmra.mxu0 %v6964
    %v7179 = vpop.f32.mrf.mxu0
    %v7180 = vadd.f32 %v6968, %v7179
    %v7181 = vpop.f32.mrf.mxu0
    %v7182 = vpop.f32.mrf.mxu0
    %v7183 = vadd.f32 %v6968, %v7182
    %v7184 = vpop.f32.mrf.mxu0
    %7185 = vmatprep.mubr.bf16.mxu0 %v6967
    %7186 = vmatmul.mubr.bf16.gmra.mxu0 %v6966
    %v7187 = vpop.f32.mrf.mxu0
    %v7188 = vadd.f32 %v6968, %v7187
    %v7189 = vpop.f32.mrf.mxu0
    %v7190 = vpop.f32.mrf.mxu0
    %v7191 = vadd.f32 %v6968, %v7190
    %v7192 = vpop.f32.mrf.mxu0
    %7193 = vdwg.mxu0
    %7194 = vst [vmem:[#allocation11] sm:$0xff] %v7132
    %7195 = vst [vmem:[#allocation11 + $0x8] sm:$0xff] %v7135
    %7196 = vst [vmem:[#allocation11 + $0x10] sm:$0xff] %v7140
    %7197 = vst [vmem:[#allocation11 + $0x18] sm:$0xff] %v7143
    %7198 = vst [vmem:[#allocation11 + $0x20] sm:$0xff] %v7148
    %7199 = vst [vmem:[#allocation11 + $0x28] sm:$0xff] %v7151
    %7200 = vst [vmem:[#allocation11 + $0x30] sm:$0xff] %v7156
    %7201 = vst [vmem:[#allocation11 + $0x38] sm:$0xff] %v7159
    %7202 = vst [vmem:[#allocation11 + $0x40] sm:$0xff] %v7164
    %7203 = vst [vmem:[#allocation11 + $0x48] sm:$0xff] %v7167
    %7204 = vst [vmem:[#allocation11 + $0x50] sm:$0xff] %v7172
    %7205 = vst [vmem:[#allocation11 + $0x58] sm:$0xff] %v7175
    %7206 = vst [vmem:[#allocation11 + $0x60] sm:$0xff] %v7180
    %7207 = vst [vmem:[#allocation11 + $0x68] sm:$0xff] %v7183
    %7208 = vst [vmem:[#allocation11 + $0x70] sm:$0xff] %v7188
    %7209 = vst [vmem:[#allocation11 + $0x78] sm:$0xff] %v7191
    // Predicated region
    $region54: #{tpu_custom_call.1} parent=1 // pred_check
      _
    $region55: #{tpu_custom_call.1} parent=1 // pred_check_branch
      %7211 = sbr.rel (0) target = $region57
    $region56: #{tpu_custom_call.1} parent=1 // pred_region
      %s7213 = ssub.s32 2048, 2048
      %7214 = vsyncadd [#allocation4], %s7213
      %s7215 = sshll.u32 [#allocation11], 4
      %s7216 = int_to_ptr.vmem [resolvable:$true] %s7215
      %7221 = dma.vmem_to_hbm [thread:$0]  %s7216, 2048, %s8, [#allocation4], 128, 128, 8
    $region57: #{tpu_custom_call.1} parent=1 // pred_fallthru
      _
    // Predicated region
    $region58: #{tpu_custom_call.1} parent=1 // pred_check
      _
    $region59: #{tpu_custom_call.1} parent=1 // pred_check_branch
      %7223 = sbr.rel (0) target = $region61
    $region60: #{tpu_custom_call.1} parent=1 // pred_region
      %7224 = dma.done [#allocation4], 2048
    $region61: #{tpu_custom_call.1} parent=1 // pred_fallthru
      _
    %7225 = vsyncpa [#allocation3], 1
    %7226 = vsyncpa [#allocation6], 1
    %7227 = vsyncpa [#allocation9], 1
    %7228 = vsyncpa [#allocation4], 1

</llo_original>
